<compile_context>
chip_gen: v6e
topology: v6e:2x2x1
jax: 0.10.0
libtpu: 0.0.40
codegen_flags: <defaults>
</compile_context>

<pallas_src>
from functools import partial

import numpy as np
import jax
import jax.numpy as jnp
from jax.experimental import pallas as pl
from jax.experimental.pallas import tpu as pltpu


_LN_EPS = 1e-6    # reference: partial(nn.LayerNorm, eps=1e-06)
_COMPILER_PARAMS = pltpu.CompilerParams(
    dimension_semantics=("parallel",),          # split the batch across TCs (v7x)
    vmem_limit_bytes=64 * 1024 * 1024,
)


# ----------------------------------------------------------------------------
# in-kernel helpers
# ----------------------------------------------------------------------------

def _layer_norm(x, g_ref, b_ref, eps=_LN_EPS):
    f32 = jnp.float32
    x = x.astype(f32)
    mean = jnp.mean(x, axis=-1, keepdims=True)
    xc = x - mean
    var = jnp.mean(xc * xc, axis=-1, keepdims=True)
    return (xc * jax.lax.rsqrt(var + eps) * g_ref[...].astype(f32)
            + b_ref[...].astype(f32))


def _mm(x, w_ref, b_ref):
    """x @ W + b: operands stay in the weight's storage dtype (bf16-friendly),
    accumulation / bias add in f32."""
    w = w_ref[...]
    y = jnp.dot(x.astype(w.dtype), w, preferred_element_type=jnp.float32)
    return y + b_ref[...].astype(jnp.float32)


def _cross_attn_proj(q_ref, f_ref, qng, qnb, fng, fnb, qw_ref, qb_ref,
                     kvw_ref, kvb_ref, pw_ref, pb_ref, num_heads):
    """CrossAttention (qkv_bias=True) *including* the output projection for one
    batch element; returns f32 (N, C).

    proj(concat_h softmax(q_h k_h^T * scale) v_h) is evaluated as
    sum_h (softmax(...) v_h) @ proj_w[h*hd:(h+1)*hd, :] + proj_b — the exact
    block-matmul form of the reference's transpose(1,2).reshape(B,N,C) followed
    by nn.Linear, with no lane-sparse stores and no head/batch relayout.
    """
    f32 = jnp.float32
    _, N, C = q_ref.shape
    hd = C // num_heads
    io_dtype = q_ref.dtype

    qn = _layer_norm(q_ref[0], qng, qnb)                       # query_norm
    fn = _layer_norm(f_ref[0], fng, fnb)                       # feat_norm
    q = _mm(qn, qw_ref, qb_ref)                                # (N, C)  f32
    kv = _mm(fn, kvw_ref, kvb_ref)                             # (N, 2C) f32

    # fold the softmax scale into q: N*hd multiplies instead of N*N
    q = (q * (hd ** -0.5)).astype(io_dtype)
    k = kv[:, :C].astype(io_dtype)
    v = kv[:, C:].astype(io_dtype)

    acc = jnp.zeros((N, C), f32)
    # TODO(synk): for num_heads >= 12 / production N, switch this unroll to a
    #             heads-batched dot_general inside a flash-style kv tiling.
    for h in range(num_heads):
        sl = slice(h * hd, (h + 1) * hd)
        s = jax.lax.dot_general(q[:, sl], k[:, sl], (((1,), (1,)), ((), ())),
                                preferred_element_type=f32)    # (N, N)
        s = s - jnp.max(s, axis=-1, keepdims=True)
        p = jnp.exp(s)
        p = p * pl.reciprocal(jnp.sum(p, axis=-1, keepdims=True), approx=True)
        oh = jnp.dot(p.astype(io_dtype), v[:, sl],
                     preferred_element_type=f32)               # (N, hd)
        acc = acc + jnp.dot(oh.astype(pw_ref.dtype), pw_ref[sl, :],
                            preferred_element_type=f32)        # += o_h @ W_proj,h
    return acc + pb_ref[...].astype(f32)


# ----------------------------------------------------------------------------
# Fused Pallas kernels (one per stage, grid=(B,))
# ----------------------------------------------------------------------------

def _injector_kernel(q_ref, f_ref, qng, qnb, fng, fnb, qw, qb, kvw, kvb,
                     pw, pb, gamma_ref, o_ref, *, num_heads):
    """Injector: out = query + gamma * CrossAttention(LN(query), LN(feat))."""
    attn = _cross_attn_proj(q_ref, f_ref, qng, qnb, fng, fnb,
                            qw, qb, kvw, kvb, pw, pb, num_heads)
    o_ref[0] = (q_ref[0].astype(jnp.float32)
                + gamma_ref[...].astype(jnp.float32) * attn).astype(o_ref.dtype)


def _extractor_kernel(q_ref, f_ref, qng, qnb, fng, fnb, qw, qb, kvw, kvb,
                      pw, pb, ng, nb, f1w, f1b, dww_ref, dwb_ref, f2w, f2b,
                      wm_ref, o_ref, tpad_ref, *, num_heads, H, W):
    """Extractor: attention + residual, then ConvFFN
    (ffn_norm -> fc1 -> depthwise 3x3 conv -> GELU -> fc2) + residual."""
    f32 = jnp.float32
    _, N, _ = q_ref.shape
    n = N // 21

    attn = _cross_attn_proj(q_ref, f_ref, qng, qnb, fng, fnb,
                            qw, qb, kvw, kvb, pw, pb, num_heads)
    q2 = q_ref[0].astype(f32) + attn                           # query + attn

    ln = _layer_norm(q2, ng, nb)                               # ffn_norm
    h1 = _mm(ln, f1w, f1b)                                     # fc1 -> (N, hidden) f32

    dww = dww_ref[...].astype(f32)                             # (3, 3, hidden)
    dwb = dwb_ref[...].astype(f32)                             # (1, hidden)
    hidden = dww.shape[-1]

    # Depthwise 3x3 conv at the 3 pyramid scales (shared weights), done on a
    # flat zero-padded token buffer: one contiguous interior store + two thin
    # zero strips per scale; the 9 taps are contiguous shifted reads, with
    # host-precomputed column masks killing the row-wrap contributions.
    # fc2 + residual are fused per scale (no (N, hidden) scratch at all).
    for t0, Hs, Ws in ((0, 2 * H, 2 * W), (16 * n, H, W), (20 * n, H // 2, W // 2)):
        hw = Hs * Ws
        zrow = jnp.zeros((Ws + 1, hidden), f32)
        tpad_ref[0:Ws + 1, :] = zrow                              # top pad (row -1)
        tpad_ref[Ws + 1 + hw:2 * (Ws + 1) + hw, :] = zrow         # bottom pad (row Hs)
        tpad_ref[Ws + 1:Ws + 1 + hw, :] = h1[t0:t0 + hw, :]       # interior, one store

        lmask = wm_ref[t0:t0 + hw, 0:1].astype(f32)   # 0.0 where col j == 0
        rmask = wm_ref[t0:t0 + hw, 1:2].astype(f32)   # 0.0 where col j == Ws-1

        acc = jnp.zeros((hw, hidden), f32)
        for di in range(3):
            for dj in range(3):
                off = (Ws + 1) + (di - 1) * Ws + (dj - 1)
                tap = tpad_ref[off:off + hw, :] * dww[di, dj, :]
                if dj == 0:
                    tap = tap * lmask
                elif dj == 2:
                    tap = tap * rmask
                acc = acc + tap
        act = jax.nn.gelu(acc + dwb, approximate=True)  # TODO(synk): torch GELU is erf-exact
        ffn = _mm(act, f2w, f2b)                                   # fc2 -> (hw, C)
        o_ref[0, t0:t0 + hw, :] = (q2[t0:t0 + hw, :] + ffn).astype(o_ref.dtype)


# ----------------------------------------------------------------------------
# pallas_call wrappers
# ----------------------------------------------------------------------------

def _tok_spec(N, C):
    return pl.BlockSpec((1, N, C), lambda b: (b, 0, 0))


def _const_spec(shape):
    nd = len(shape)
    return pl.BlockSpec(shape, lambda b: (0,) * nd)   # whole array, every step


def _dwconv_col_masks(H, W):
    """(N, 2) f32: for each token (in the 21n pyramid layout) whether its
    left / right spatial neighbour lies in the same image row."""
    segs = []
    for Hs, Ws in ((2 * H, 2 * W), (H, W), (H // 2, W // 2)):
        j = np.tile(np.arange(Ws), Hs)
        segs.append(np.stack([j != 0, j != Ws - 1], axis=-1).astype(np.float32))
    return jnp.asarray(np.concatenate(segs, axis=0))


def injector_forward(p, query, feat, num_heads):
    B, N, C = query.shape
    a = p['attn']
    return pl.pallas_call(
        partial(_injector_kernel, num_heads=num_heads),
        out_shape=jax.ShapeDtypeStruct((B, N, C), query.dtype),
        grid=(B,),
        in_specs=[_tok_spec(N, C), _tok_spec(N, C),
                  _const_spec((1, C)), _const_spec((1, C)),
                  _const_spec((1, C)), _const_spec((1, C)),
                  _const_spec((C, C)), _const_spec((1, C)),
                  _const_spec((C, 2 * C)), _const_spec((1, 2 * C)),
                  _const_spec((C, C)), _const_spec((1, C)),
                  _const_spec((1, C))],
        out_specs=_tok_spec(N, C),
        compiler_params=_COMPILER_PARAMS,
    )(query, feat,
      p['qn_g'].reshape(1, C), p['qn_b'].reshape(1, C),
      p['fn_g'].reshape(1, C), p['fn_b'].reshape(1, C),
      a['q_w'], a['q_b'].reshape(1, C),
      a['kv_w'], a['kv_b'].reshape(1, 2 * C),
      a['proj_w'], a['proj_b'].reshape(1, C),
      p['gamma'].reshape(1, C))


def extractor_forward(p, query, feat, H, W, num_heads):
    B, N, C = query.shape
    a = p['attn']
    hidden = p['fc1_w'].shape[1]
    wmask = _dwconv_col_masks(H, W)                 # tiny, host-built, batch-invariant
    pad_rows = 4 * H * W + 2 * (2 * W + 1)          # flat pad buffer for the largest scale
    return pl.pallas_call(
        partial(_extractor_kernel, num_heads=num_heads, H=H, W=W),
        out_shape=jax.ShapeDtypeStruct((B, N, C), query.dtype),
        grid=(B,),
        in_specs=[_tok_spec(N, C), _tok_spec(N, C),
                  _const_spec((1, C)), _const_spec((1, C)),
                  _const_spec((1, C)), _const_spec((1, C)),
                  _const_spec((C, C)), _const_spec((1, C)),
                  _const_spec((C, 2 * C)), _const_spec((1, 2 * C)),
                  _const_spec((C, C)), _const_spec((1, C)),
                  _const_spec((1, C)), _const_spec((1, C)),
                  _const_spec((C, hidden)), _const_spec((1, hidden)),
                  _const_spec((3, 3, hidden)), _const_spec((1, hidden)),
                  _const_spec((hidden, C)), _const_spec((1, C)),
                  _const_spec((N, 2))],
        out_specs=_tok_spec(N, C),
        scratch_shapes=[pltpu.VMEM((pad_rows, hidden), jnp.float32)],
        compiler_params=_COMPILER_PARAMS,
    )(query, feat,
      p['qn_g'].reshape(1, C), p['qn_b'].reshape(1, C),
      p['fn_g'].reshape(1, C), p['fn_b'].reshape(1, C),
      a['q_w'], a['q_b'].reshape(1, C),
      a['kv_w'], a['kv_b'].reshape(1, 2 * C),
      a['proj_w'], a['proj_b'].reshape(1, C),
      p['ffn_norm_g'].reshape(1, C), p['ffn_norm_b'].reshape(1, C),
      p['fc1_w'], p['fc1_b'].reshape(1, hidden),
      p['dw_w'], p['dw_b'].reshape(1, hidden),
      p['fc2_w'], p['fc2_b'].reshape(1, C),
      wmask)


def interaction_block_forward(params, x, c, blocks, deform_inputs1, deform_inputs2,
                              H, W, num_heads):
    # deform_inputs are ignored by the CrossAttention branch (see TODO at top).
    del deform_inputs1, deform_inputs2
    x = injector_forward(params['injector'], query=x, feat=c, num_heads=num_heads)
    for blk in blocks:                       # external ViT blocks (passed by caller)
        x = blk(x, H, W)
    c = extractor_forward(params['extractor'], query=c, feat=x, H=H, W=W,
                          num_heads=num_heads)
    # extra_extractors is None for extra_extractor=False (default)
    return x, c


# ----------------------------------------------------------------------------
# Deterministic parameter init
# ----------------------------------------------------------------------------

def init_params(key, dim, num_heads, cffn_ratio=0.25, init_values=0.01):
    hidden = int(dim * cffn_ratio)
    keys = iter(jax.random.split(key, 32))

    def w(shape, scale=0.02):
        return (scale * jax.random.normal(next(keys), shape)).astype(jnp.float32)

    def attn_params():
        return dict(q_w=w((dim, dim)), q_b=w((dim,)),
                    kv_w=w((dim, 2 * dim)), kv_b=w((2 * dim,)),
                    proj_w=w((dim, dim)), proj_b=w((dim,)))

    ones, zeros = jnp.ones((dim,), jnp.float32), jnp.zeros((dim,), jnp.float32)
    injector = dict(qn_g=ones, qn_b=zeros, fn_g=ones, fn_b=zeros,
                    attn=attn_params(),
                    gamma=jnp.full((dim,), init_values, jnp.float32))
    extractor = dict(qn_g=ones, qn_b=zeros, fn_g=ones, fn_b=zeros,
                     attn=attn_params(),
                     ffn_norm_g=ones, ffn_norm_b=zeros,
                     fc1_w=w((dim, hidden)), fc1_b=w((hidden,)),
                     dw_w=w((3, 3, hidden)), dw_b=w((hidden,)),
                     fc2_w=w((hidden, dim)), fc2_b=w((dim,)))
    return dict(injector=injector, extractor=extractor)


# ----------------------------------------------------------------------------

if __name__ == "__main__":
    key = jax.random.PRNGKey(0)
    B, dim, num_heads, H, W = 2, 48, 6, 4, 4
    n = (H * W) // 4
    N = 21 * n                                  # 84 tokens (3 pyramid levels)

    k1, k2, k3 = jax.random.split(key, 3)
    x = jax.random.normal(k1, (B, N, dim), jnp.float32)   # ViT tokens (query of injector)
    c = jax.random.normal(k2, (B, N, dim), jnp.float32)   # SPM tokens (query of extractor)
    params = init_params(k3, dim, num_heads)

    deform_inputs1 = (None, None, None)   # (reference_points, spatial_shapes, level_start_index)
    deform_inputs2 = (None, None, None)   # unused by the CrossAttention branch
    blocks = []                           # external transformer blocks; empty in this test

    x_out, c_out = interaction_block_forward(params, x, c, blocks,
                                             deform_inputs1, deform_inputs2,
                                             H, W, num_heads)
    jax.block_until_ready((x_out, c_out))
    assert x_out.shape == (B, N, dim) and c_out.shape == (B, N, dim)
    assert bool(jnp.all(jnp.isfinite(x_out))) and bool(jnp.all(jnp.isfinite(c_out)))
    print("KERNEL_OK")
</pallas_src>

<mosaic_0001>
module attributes {stable_mosaic.version = 11 : i64} {
  func.func @_injector_kernel(%arg0: i32, %arg1: memref<1x84x48xf32, #tpu.memory_space<vmem>>, %arg2: memref<1x84x48xf32, #tpu.memory_space<vmem>>, %arg3: memref<1x48xf32, #tpu.memory_space<vmem>>, %arg4: memref<1x48xf32, #tpu.memory_space<vmem>>, %arg5: memref<1x48xf32, #tpu.memory_space<vmem>>, %arg6: memref<1x48xf32, #tpu.memory_space<vmem>>, %arg7: memref<48x48xf32, #tpu.memory_space<vmem>>, %arg8: memref<1x48xf32, #tpu.memory_space<vmem>>, %arg9: memref<48x96xf32, #tpu.memory_space<vmem>>, %arg10: memref<1x96xf32, #tpu.memory_space<vmem>>, %arg11: memref<48x48xf32, #tpu.memory_space<vmem>>, %arg12: memref<1x48xf32, #tpu.memory_space<vmem>>, %arg13: memref<1x48xf32, #tpu.memory_space<vmem>>, %arg14: memref<1x84x48xf32, #tpu.memory_space<vmem>>) attributes {dimension_semantics = [#tpu.dimension_semantics<parallel>], iteration_bounds = array<i64: 2>, scalar_prefetch = 0 : i64, scratch_operands = 0 : i64, tpu.core_type = #tpu.core_type<tc>, window_params = [{transform_indices = @transform_0, window_bounds = array<i64: 1, 84, 48>}, {transform_indices = @transform_1, window_bounds = array<i64: 1, 84, 48>}, {pipeline_mode = #tpu.pipeline_mode<synchronous>, transform_indices = @transform_2, window_bounds = array<i64: 1, 48>}, {pipeline_mode = #tpu.pipeline_mode<synchronous>, transform_indices = @transform_3, window_bounds = array<i64: 1, 48>}, {pipeline_mode = #tpu.pipeline_mode<synchronous>, transform_indices = @transform_4, window_bounds = array<i64: 1, 48>}, {pipeline_mode = #tpu.pipeline_mode<synchronous>, transform_indices = @transform_5, window_bounds = array<i64: 1, 48>}, {pipeline_mode = #tpu.pipeline_mode<synchronous>, transform_indices = @transform_6, window_bounds = array<i64: 48, 48>}, {pipeline_mode = #tpu.pipeline_mode<synchronous>, transform_indices = @transform_7, window_bounds = array<i64: 1, 48>}, {pipeline_mode = #tpu.pipeline_mode<synchronous>, transform_indices = @transform_8, window_bounds = array<i64: 48, 96>}, {pipeline_mode = #tpu.pipeline_mode<synchronous>, transform_indices = @transform_9, window_bounds = array<i64: 1, 96>}, {pipeline_mode = #tpu.pipeline_mode<synchronous>, transform_indices = @transform_10, window_bounds = array<i64: 48, 48>}, {pipeline_mode = #tpu.pipeline_mode<synchronous>, transform_indices = @transform_11, window_bounds = array<i64: 1, 48>}, {pipeline_mode = #tpu.pipeline_mode<synchronous>, transform_indices = @transform_12, window_bounds = array<i64: 1, 48>}, {transform_indices = @transform_13, window_bounds = array<i64: 1, 84, 48>}]} {
    %c0 = arith.constant 0 : index
    %c0_0 = arith.constant 0 : index
    %c0_1 = arith.constant 0 : index
    %0 = vector.load %arg1[%c0, %c0_0, %c0_1] : memref<1x84x48xf32, #tpu.memory_space<vmem>>, vector<1x84x48xf32>
    %1 = vector.shape_cast %0 : vector<1x84x48xf32> to vector<84x48xf32>
    %cst = arith.constant dense<0.000000e+00> : vector<84xf32>
    %2 = vector.multi_reduction <add>, %1, %cst [1] : vector<84x48xf32> to vector<84xf32>
    %3 = vector.shape_cast %2 : vector<84xf32> to vector<84x1xf32>
    %cst_2 = arith.constant 4.800000e+01 : f32
    %4 = vector.broadcast %cst_2 : f32 to vector<84x1xf32>
    %5 = arith.divf %3, %4 : vector<84x1xf32>
    %6 = vector.broadcast %5 : vector<84x1xf32> to vector<84x48xf32>
    %7 = arith.subf %1, %6 : vector<84x48xf32>
    %8 = arith.mulf %7, %7 : vector<84x48xf32>
    %cst_3 = arith.constant dense<0.000000e+00> : vector<84xf32>
    %9 = vector.multi_reduction <add>, %8, %cst_3 [1] : vector<84x48xf32> to vector<84xf32>
    %10 = vector.shape_cast %9 : vector<84xf32> to vector<84x1xf32>
    %cst_4 = arith.constant 4.800000e+01 : f32
    %11 = vector.broadcast %cst_4 : f32 to vector<84x1xf32>
    %12 = arith.divf %10, %11 : vector<84x1xf32>
    %cst_5 = arith.constant 9.99999997E-7 : f32
    %13 = vector.broadcast %cst_5 : f32 to vector<84x1xf32>
    %14 = arith.addf %12, %13 : vector<84x1xf32>
    %15 = math.rsqrt %14 : vector<84x1xf32>
    %16 = vector.broadcast %15 : vector<84x1xf32> to vector<84x48xf32>
    %17 = arith.mulf %7, %16 : vector<84x48xf32>
    %c0_6 = arith.constant 0 : index
    %c0_7 = arith.constant 0 : index
    %18 = vector.load %arg3[%c0_6, %c0_7] : memref<1x48xf32, #tpu.memory_space<vmem>>, vector<1x48xf32>
    %19 = vector.broadcast %18 : vector<1x48xf32> to vector<84x48xf32>
    %20 = arith.mulf %17, %19 : vector<84x48xf32>
    %c0_8 = arith.constant 0 : index
    %c0_9 = arith.constant 0 : index
    %21 = vector.load %arg4[%c0_8, %c0_9] : memref<1x48xf32, #tpu.memory_space<vmem>>, vector<1x48xf32>
    %22 = vector.broadcast %21 : vector<1x48xf32> to vector<84x48xf32>
    %23 = arith.addf %20, %22 : vector<84x48xf32>
    %c0_10 = arith.constant 0 : index
    %c0_11 = arith.constant 0 : index
    %c0_12 = arith.constant 0 : index
    %24 = vector.load %arg2[%c0_10, %c0_11, %c0_12] : memref<1x84x48xf32, #tpu.memory_space<vmem>>, vector<1x84x48xf32>
    %25 = vector.shape_cast %24 : vector<1x84x48xf32> to vector<84x48xf32>
    %cst_13 = arith.constant dense<0.000000e+00> : vector<84xf32>
    %26 = vector.multi_reduction <add>, %25, %cst_13 [1] : vector<84x48xf32> to vector<84xf32>
    %27 = vector.shape_cast %26 : vector<84xf32> to vector<84x1xf32>
    %cst_14 = arith.constant 4.800000e+01 : f32
    %28 = vector.broadcast %cst_14 : f32 to vector<84x1xf32>
    %29 = arith.divf %27, %28 : vector<84x1xf32>
    %30 = vector.broadcast %29 : vector<84x1xf32> to vector<84x48xf32>
    %31 = arith.subf %25, %30 : vector<84x48xf32>
    %32 = arith.mulf %31, %31 : vector<84x48xf32>
    %cst_15 = arith.constant dense<0.000000e+00> : vector<84xf32>
    %33 = vector.multi_reduction <add>, %32, %cst_15 [1] : vector<84x48xf32> to vector<84xf32>
    %34 = vector.shape_cast %33 : vector<84xf32> to vector<84x1xf32>
    %cst_16 = arith.constant 4.800000e+01 : f32
    %35 = vector.broadcast %cst_16 : f32 to vector<84x1xf32>
    %36 = arith.divf %34, %35 : vector<84x1xf32>
    %cst_17 = arith.constant 9.99999997E-7 : f32
    %37 = vector.broadcast %cst_17 : f32 to vector<84x1xf32>
    %38 = arith.addf %36, %37 : vector<84x1xf32>
    %39 = math.rsqrt %38 : vector<84x1xf32>
    %40 = vector.broadcast %39 : vector<84x1xf32> to vector<84x48xf32>
    %41 = arith.mulf %31, %40 : vector<84x48xf32>
    %c0_18 = arith.constant 0 : index
    %c0_19 = arith.constant 0 : index
    %42 = vector.load %arg5[%c0_18, %c0_19] : memref<1x48xf32, #tpu.memory_space<vmem>>, vector<1x48xf32>
    %43 = vector.broadcast %42 : vector<1x48xf32> to vector<84x48xf32>
    %44 = arith.mulf %41, %43 : vector<84x48xf32>
    %c0_20 = arith.constant 0 : index
    %c0_21 = arith.constant 0 : index
    %45 = vector.load %arg6[%c0_20, %c0_21] : memref<1x48xf32, #tpu.memory_space<vmem>>, vector<1x48xf32>
    %46 = vector.broadcast %45 : vector<1x48xf32> to vector<84x48xf32>
    %47 = arith.addf %44, %46 : vector<84x48xf32>
    %c0_22 = arith.constant 0 : index
    %c0_23 = arith.constant 0 : index
    %48 = vector.load %arg7[%c0_22, %c0_23] : memref<48x48xf32, #tpu.memory_space<vmem>>, vector<48x48xf32>
    %cst_24 = arith.constant dense<0.000000e+00> : vector<84x48xf32>
    %49 = tpu.matmul %23, %48, %cst_24 {dimension_numbers = #tpu.dot_dimension_numbers<[1], [0], [0], [1], [0, 0, 1, 1], [], []>} : vector<84x48xf32>, vector<48x48xf32>, vector<84x48xf32> -> vector<84x48xf32>
    %c0_25 = arith.constant 0 : index
    %c0_26 = arith.constant 0 : index
    %50 = vector.load %arg8[%c0_25, %c0_26] : memref<1x48xf32, #tpu.memory_space<vmem>>, vector<1x48xf32>
    %51 = vector.broadcast %50 : vector<1x48xf32> to vector<84x48xf32>
    %52 = arith.addf %49, %51 : vector<84x48xf32>
    %c0_27 = arith.constant 0 : index
    %c0_28 = arith.constant 0 : index
    %53 = vector.load %arg9[%c0_27, %c0_28] : memref<48x96xf32, #tpu.memory_space<vmem>>, vector<48x96xf32>
    %cst_29 = arith.constant dense<0.000000e+00> : vector<84x96xf32>
    %54 = tpu.matmul %47, %53, %cst_29 {dimension_numbers = #tpu.dot_dimension_numbers<[1], [0], [0], [1], [0, 0, 1, 1], [], []>} : vector<84x48xf32>, vector<48x96xf32>, vector<84x96xf32> -> vector<84x96xf32>
    %c0_30 = arith.constant 0 : index
    %c0_31 = arith.constant 0 : index
    %55 = vector.load %arg10[%c0_30, %c0_31] : memref<1x96xf32, #tpu.memory_space<vmem>>, vector<1x96xf32>
    %56 = vector.broadcast %55 : vector<1x96xf32> to vector<84x96xf32>
    %57 = arith.addf %54, %56 : vector<84x96xf32>
    %cst_32 = arith.constant 0.353553385 : f32
    %58 = vector.broadcast %cst_32 : f32 to vector<84x48xf32>
    %59 = arith.mulf %52, %58 : vector<84x48xf32>
    %60 = vector.extract_strided_slice %57 {offsets = [0, 0], sizes = [84, 48], strides = [1, 1]} : vector<84x96xf32> to vector<84x48xf32>
    %61 = vector.extract_strided_slice %57 {offsets = [0, 48], sizes = [84, 48], strides = [1, 1]} : vector<84x96xf32> to vector<84x48xf32>
    %cst_33 = arith.constant 0.000000e+00 : f32
    %62 = vector.broadcast %cst_33 : f32 to vector<84x48xf32>
    %63 = vector.extract_strided_slice %59 {offsets = [0, 0], sizes = [84, 8], strides = [1, 1]} : vector<84x48xf32> to vector<84x8xf32>
    %64 = vector.extract_strided_slice %60 {offsets = [0, 0], sizes = [84, 8], strides = [1, 1]} : vector<84x48xf32> to vector<84x8xf32>
    %cst_34 = arith.constant dense<0.000000e+00> : vector<84x84xf32>
    %65 = tpu.matmul %63, %64, %cst_34 {dimension_numbers = #tpu.dot_dimension_numbers<[1], [1], [0], [0], [0, 0, 1, 0], [], []>} : vector<84x8xf32>, vector<84x8xf32>, vector<84x84xf32> -> vector<84x84xf32>
    %cst_35 = arith.constant dense<0xFF800000> : vector<84xf32>
    %66 = vector.multi_reduction <maximumf>, %65, %cst_35 [1] : vector<84x84xf32> to vector<84xf32>
    %67 = vector.shape_cast %66 : vector<84xf32> to vector<84x1xf32>
    %68 = vector.broadcast %67 : vector<84x1xf32> to vector<84x84xf32>
    %69 = arith.subf %65, %68 : vector<84x84xf32>
    %70 = math.exp %69 : vector<84x84xf32>
    %cst_36 = arith.constant dense<0.000000e+00> : vector<84xf32>
    %71 = vector.multi_reduction <add>, %70, %cst_36 [1] : vector<84x84xf32> to vector<84xf32>
    %72 = vector.shape_cast %71 : vector<84xf32> to vector<84x1xf32>
    %73 = tpu.reciprocal %72 {approx = true} : vector<84x1xf32> -> vector<84x1xf32>
    %74 = vector.broadcast %73 : vector<84x1xf32> to vector<84x84xf32>
    %75 = arith.mulf %70, %74 : vector<84x84xf32>
    %76 = vector.extract_strided_slice %61 {offsets = [0, 0], sizes = [84, 8], strides = [1, 1]} : vector<84x48xf32> to vector<84x8xf32>
    %cst_37 = arith.constant dense<0.000000e+00> : vector<84x8xf32>
    %77 = tpu.matmul %75, %76, %cst_37 {dimension_numbers = #tpu.dot_dimension_numbers<[1], [0], [0], [1], [0, 0, 1, 1], [], []>} : vector<84x84xf32>, vector<84x8xf32>, vector<84x8xf32> -> vector<84x8xf32>
    %c0_38 = arith.constant 0 : index
    %c0_39 = arith.constant 0 : index
    %78 = vector.load %arg11[%c0_38, %c0_39] : memref<48x48xf32, #tpu.memory_space<vmem>>, vector<8x48xf32>
    %cst_40 = arith.constant dense<0.000000e+00> : vector<84x48xf32>
    %79 = tpu.matmul %77, %78, %cst_40 {dimension_numbers = #tpu.dot_dimension_numbers<[1], [0], [0], [1], [0, 0, 1, 1], [], []>} : vector<84x8xf32>, vector<8x48xf32>, vector<84x48xf32> -> vector<84x48xf32>
    %80 = arith.addf %62, %79 : vector<84x48xf32>
    %81 = vector.extract_strided_slice %59 {offsets = [0, 8], sizes = [84, 8], strides = [1, 1]} : vector<84x48xf32> to vector<84x8xf32>
    %82 = vector.extract_strided_slice %60 {offsets = [0, 8], sizes = [84, 8], strides = [1, 1]} : vector<84x48xf32> to vector<84x8xf32>
    %cst_41 = arith.constant dense<0.000000e+00> : vector<84x84xf32>
    %83 = tpu.matmul %81, %82, %cst_41 {dimension_numbers = #tpu.dot_dimension_numbers<[1], [1], [0], [0], [0, 0, 1, 0], [], []>} : vector<84x8xf32>, vector<84x8xf32>, vector<84x84xf32> -> vector<84x84xf32>
    %cst_42 = arith.constant dense<0xFF800000> : vector<84xf32>
    %84 = vector.multi_reduction <maximumf>, %83, %cst_42 [1] : vector<84x84xf32> to vector<84xf32>
    %85 = vector.shape_cast %84 : vector<84xf32> to vector<84x1xf32>
    %86 = vector.broadcast %85 : vector<84x1xf32> to vector<84x84xf32>
    %87 = arith.subf %83, %86 : vector<84x84xf32>
    %88 = math.exp %87 : vector<84x84xf32>
    %cst_43 = arith.constant dense<0.000000e+00> : vector<84xf32>
    %89 = vector.multi_reduction <add>, %88, %cst_43 [1] : vector<84x84xf32> to vector<84xf32>
    %90 = vector.shape_cast %89 : vector<84xf32> to vector<84x1xf32>
    %91 = tpu.reciprocal %90 {approx = true} : vector<84x1xf32> -> vector<84x1xf32>
    %92 = vector.broadcast %91 : vector<84x1xf32> to vector<84x84xf32>
    %93 = arith.mulf %88, %92 : vector<84x84xf32>
    %94 = vector.extract_strided_slice %61 {offsets = [0, 8], sizes = [84, 8], strides = [1, 1]} : vector<84x48xf32> to vector<84x8xf32>
    %cst_44 = arith.constant dense<0.000000e+00> : vector<84x8xf32>
    %95 = tpu.matmul %93, %94, %cst_44 {dimension_numbers = #tpu.dot_dimension_numbers<[1], [0], [0], [1], [0, 0, 1, 1], [], []>} : vector<84x84xf32>, vector<84x8xf32>, vector<84x8xf32> -> vector<84x8xf32>
    %c8 = arith.constant 8 : index
    %c0_45 = arith.constant 0 : index
    %96 = vector.load %arg11[%c8, %c0_45] : memref<48x48xf32, #tpu.memory_space<vmem>>, vector<8x48xf32>
    %cst_46 = arith.constant dense<0.000000e+00> : vector<84x48xf32>
    %97 = tpu.matmul %95, %96, %cst_46 {dimension_numbers = #tpu.dot_dimension_numbers<[1], [0], [0], [1], [0, 0, 1, 1], [], []>} : vector<84x8xf32>, vector<8x48xf32>, vector<84x48xf32> -> vector<84x48xf32>
    %98 = arith.addf %80, %97 : vector<84x48xf32>
    %99 = vector.extract_strided_slice %59 {offsets = [0, 16], sizes = [84, 8], strides = [1, 1]} : vector<84x48xf32> to vector<84x8xf32>
    %100 = vector.extract_strided_slice %60 {offsets = [0, 16], sizes = [84, 8], strides = [1, 1]} : vector<84x48xf32> to vector<84x8xf32>
    %cst_47 = arith.constant dense<0.000000e+00> : vector<84x84xf32>
    %101 = tpu.matmul %99, %100, %cst_47 {dimension_numbers = #tpu.dot_dimension_numbers<[1], [1], [0], [0], [0, 0, 1, 0], [], []>} : vector<84x8xf32>, vector<84x8xf32>, vector<84x84xf32> -> vector<84x84xf32>
    %cst_48 = arith.constant dense<0xFF800000> : vector<84xf32>
    %102 = vector.multi_reduction <maximumf>, %101, %cst_48 [1] : vector<84x84xf32> to vector<84xf32>
    %103 = vector.shape_cast %102 : vector<84xf32> to vector<84x1xf32>
    %104 = vector.broadcast %103 : vector<84x1xf32> to vector<84x84xf32>
    %105 = arith.subf %101, %104 : vector<84x84xf32>
    %106 = math.exp %105 : vector<84x84xf32>
    %cst_49 = arith.constant dense<0.000000e+00> : vector<84xf32>
    %107 = vector.multi_reduction <add>, %106, %cst_49 [1] : vector<84x84xf32> to vector<84xf32>
    %108 = vector.shape_cast %107 : vector<84xf32> to vector<84x1xf32>
    %109 = tpu.reciprocal %108 {approx = true} : vector<84x1xf32> -> vector<84x1xf32>
    %110 = vector.broadcast %109 : vector<84x1xf32> to vector<84x84xf32>
    %111 = arith.mulf %106, %110 : vector<84x84xf32>
    %112 = vector.extract_strided_slice %61 {offsets = [0, 16], sizes = [84, 8], strides = [1, 1]} : vector<84x48xf32> to vector<84x8xf32>
    %cst_50 = arith.constant dense<0.000000e+00> : vector<84x8xf32>
    %113 = tpu.matmul %111, %112, %cst_50 {dimension_numbers = #tpu.dot_dimension_numbers<[1], [0], [0], [1], [0, 0, 1, 1], [], []>} : vector<84x84xf32>, vector<84x8xf32>, vector<84x8xf32> -> vector<84x8xf32>
    %c16 = arith.constant 16 : index
    %c0_51 = arith.constant 0 : index
    %114 = vector.load %arg11[%c16, %c0_51] : memref<48x48xf32, #tpu.memory_space<vmem>>, vector<8x48xf32>
    %cst_52 = arith.constant dense<0.000000e+00> : vector<84x48xf32>
    %115 = tpu.matmul %113, %114, %cst_52 {dimension_numbers = #tpu.dot_dimension_numbers<[1], [0], [0], [1], [0, 0, 1, 1], [], []>} : vector<84x8xf32>, vector<8x48xf32>, vector<84x48xf32> -> vector<84x48xf32>
    %116 = arith.addf %98, %115 : vector<84x48xf32>
    %117 = vector.extract_strided_slice %59 {offsets = [0, 24], sizes = [84, 8], strides = [1, 1]} : vector<84x48xf32> to vector<84x8xf32>
    %118 = vector.extract_strided_slice %60 {offsets = [0, 24], sizes = [84, 8], strides = [1, 1]} : vector<84x48xf32> to vector<84x8xf32>
    %cst_53 = arith.constant dense<0.000000e+00> : vector<84x84xf32>
    %119 = tpu.matmul %117, %118, %cst_53 {dimension_numbers = #tpu.dot_dimension_numbers<[1], [1], [0], [0], [0, 0, 1, 0], [], []>} : vector<84x8xf32>, vector<84x8xf32>, vector<84x84xf32> -> vector<84x84xf32>
    %cst_54 = arith.constant dense<0xFF800000> : vector<84xf32>
    %120 = vector.multi_reduction <maximumf>, %119, %cst_54 [1] : vector<84x84xf32> to vector<84xf32>
    %121 = vector.shape_cast %120 : vector<84xf32> to vector<84x1xf32>
    %122 = vector.broadcast %121 : vector<84x1xf32> to vector<84x84xf32>
    %123 = arith.subf %119, %122 : vector<84x84xf32>
    %124 = math.exp %123 : vector<84x84xf32>
    %cst_55 = arith.constant dense<0.000000e+00> : vector<84xf32>
    %125 = vector.multi_reduction <add>, %124, %cst_55 [1] : vector<84x84xf32> to vector<84xf32>
    %126 = vector.shape_cast %125 : vector<84xf32> to vector<84x1xf32>
    %127 = tpu.reciprocal %126 {approx = true} : vector<84x1xf32> -> vector<84x1xf32>
    %128 = vector.broadcast %127 : vector<84x1xf32> to vector<84x84xf32>
    %129 = arith.mulf %124, %128 : vector<84x84xf32>
    %130 = vector.extract_strided_slice %61 {offsets = [0, 24], sizes = [84, 8], strides = [1, 1]} : vector<84x48xf32> to vector<84x8xf32>
    %cst_56 = arith.constant dense<0.000000e+00> : vector<84x8xf32>
    %131 = tpu.matmul %129, %130, %cst_56 {dimension_numbers = #tpu.dot_dimension_numbers<[1], [0], [0], [1], [0, 0, 1, 1], [], []>} : vector<84x84xf32>, vector<84x8xf32>, vector<84x8xf32> -> vector<84x8xf32>
    %c24 = arith.constant 24 : index
    %c0_57 = arith.constant 0 : index
    %132 = vector.load %arg11[%c24, %c0_57] : memref<48x48xf32, #tpu.memory_space<vmem>>, vector<8x48xf32>
    %cst_58 = arith.constant dense<0.000000e+00> : vector<84x48xf32>
    %133 = tpu.matmul %131, %132, %cst_58 {dimension_numbers = #tpu.dot_dimension_numbers<[1], [0], [0], [1], [0, 0, 1, 1], [], []>} : vector<84x8xf32>, vector<8x48xf32>, vector<84x48xf32> -> vector<84x48xf32>
    %134 = arith.addf %116, %133 : vector<84x48xf32>
    %135 = vector.extract_strided_slice %59 {offsets = [0, 32], sizes = [84, 8], strides = [1, 1]} : vector<84x48xf32> to vector<84x8xf32>
    %136 = vector.extract_strided_slice %60 {offsets = [0, 32], sizes = [84, 8], strides = [1, 1]} : vector<84x48xf32> to vector<84x8xf32>
    %cst_59 = arith.constant dense<0.000000e+00> : vector<84x84xf32>
    %137 = tpu.matmul %135, %136, %cst_59 {dimension_numbers = #tpu.dot_dimension_numbers<[1], [1], [0], [0], [0, 0, 1, 0], [], []>} : vector<84x8xf32>, vector<84x8xf32>, vector<84x84xf32> -> vector<84x84xf32>
    %cst_60 = arith.constant dense<0xFF800000> : vector<84xf32>
    %138 = vector.multi_reduction <maximumf>, %137, %cst_60 [1] : vector<84x84xf32> to vector<84xf32>
    %139 = vector.shape_cast %138 : vector<84xf32> to vector<84x1xf32>
    %140 = vector.broadcast %139 : vector<84x1xf32> to vector<84x84xf32>
    %141 = arith.subf %137, %140 : vector<84x84xf32>
    %142 = math.exp %141 : vector<84x84xf32>
    %cst_61 = arith.constant dense<0.000000e+00> : vector<84xf32>
    %143 = vector.multi_reduction <add>, %142, %cst_61 [1] : vector<84x84xf32> to vector<84xf32>
    %144 = vector.shape_cast %143 : vector<84xf32> to vector<84x1xf32>
    %145 = tpu.reciprocal %144 {approx = true} : vector<84x1xf32> -> vector<84x1xf32>
    %146 = vector.broadcast %145 : vector<84x1xf32> to vector<84x84xf32>
    %147 = arith.mulf %142, %146 : vector<84x84xf32>
    %148 = vector.extract_strided_slice %61 {offsets = [0, 32], sizes = [84, 8], strides = [1, 1]} : vector<84x48xf32> to vector<84x8xf32>
    %cst_62 = arith.constant dense<0.000000e+00> : vector<84x8xf32>
    %149 = tpu.matmul %147, %148, %cst_62 {dimension_numbers = #tpu.dot_dimension_numbers<[1], [0], [0], [1], [0, 0, 1, 1], [], []>} : vector<84x84xf32>, vector<84x8xf32>, vector<84x8xf32> -> vector<84x8xf32>
    %c32 = arith.constant 32 : index
    %c0_63 = arith.constant 0 : index
    %150 = vector.load %arg11[%c32, %c0_63] : memref<48x48xf32, #tpu.memory_space<vmem>>, vector<8x48xf32>
    %cst_64 = arith.constant dense<0.000000e+00> : vector<84x48xf32>
    %151 = tpu.matmul %149, %150, %cst_64 {dimension_numbers = #tpu.dot_dimension_numbers<[1], [0], [0], [1], [0, 0, 1, 1], [], []>} : vector<84x8xf32>, vector<8x48xf32>, vector<84x48xf32> -> vector<84x48xf32>
    %152 = arith.addf %134, %151 : vector<84x48xf32>
    %153 = vector.extract_strided_slice %59 {offsets = [0, 40], sizes = [84, 8], strides = [1, 1]} : vector<84x48xf32> to vector<84x8xf32>
    %154 = vector.extract_strided_slice %60 {offsets = [0, 40], sizes = [84, 8], strides = [1, 1]} : vector<84x48xf32> to vector<84x8xf32>
    %cst_65 = arith.constant dense<0.000000e+00> : vector<84x84xf32>
    %155 = tpu.matmul %153, %154, %cst_65 {dimension_numbers = #tpu.dot_dimension_numbers<[1], [1], [0], [0], [0, 0, 1, 0], [], []>} : vector<84x8xf32>, vector<84x8xf32>, vector<84x84xf32> -> vector<84x84xf32>
    %cst_66 = arith.constant dense<0xFF800000> : vector<84xf32>
    %156 = vector.multi_reduction <maximumf>, %155, %cst_66 [1] : vector<84x84xf32> to vector<84xf32>
    %157 = vector.shape_cast %156 : vector<84xf32> to vector<84x1xf32>
    %158 = vector.broadcast %157 : vector<84x1xf32> to vector<84x84xf32>
    %159 = arith.subf %155, %158 : vector<84x84xf32>
    %160 = math.exp %159 : vector<84x84xf32>
    %cst_67 = arith.constant dense<0.000000e+00> : vector<84xf32>
    %161 = vector.multi_reduction <add>, %160, %cst_67 [1] : vector<84x84xf32> to vector<84xf32>
    %162 = vector.shape_cast %161 : vector<84xf32> to vector<84x1xf32>
    %163 = tpu.reciprocal %162 {approx = true} : vector<84x1xf32> -> vector<84x1xf32>
    %164 = vector.broadcast %163 : vector<84x1xf32> to vector<84x84xf32>
    %165 = arith.mulf %160, %164 : vector<84x84xf32>
    %166 = vector.extract_strided_slice %61 {offsets = [0, 40], sizes = [84, 8], strides = [1, 1]} : vector<84x48xf32> to vector<84x8xf32>
    %cst_68 = arith.constant dense<0.000000e+00> : vector<84x8xf32>
    %167 = tpu.matmul %165, %166, %cst_68 {dimension_numbers = #tpu.dot_dimension_numbers<[1], [0], [0], [1], [0, 0, 1, 1], [], []>} : vector<84x84xf32>, vector<84x8xf32>, vector<84x8xf32> -> vector<84x8xf32>
    %c40 = arith.constant 40 : index
    %c0_69 = arith.constant 0 : index
    %168 = vector.load %arg11[%c40, %c0_69] : memref<48x48xf32, #tpu.memory_space<vmem>>, vector<8x48xf32>
    %cst_70 = arith.constant dense<0.000000e+00> : vector<84x48xf32>
    %169 = tpu.matmul %167, %168, %cst_70 {dimension_numbers = #tpu.dot_dimension_numbers<[1], [0], [0], [1], [0, 0, 1, 1], [], []>} : vector<84x8xf32>, vector<8x48xf32>, vector<84x48xf32> -> vector<84x48xf32>
    %170 = arith.addf %152, %169 : vector<84x48xf32>
    %c0_71 = arith.constant 0 : index
    %c0_72 = arith.constant 0 : index
    %171 = vector.load %arg12[%c0_71, %c0_72] : memref<1x48xf32, #tpu.memory_space<vmem>>, vector<1x48xf32>
    %172 = vector.broadcast %171 : vector<1x48xf32> to vector<84x48xf32>
    %173 = arith.addf %170, %172 : vector<84x48xf32>
    %c0_73 = arith.constant 0 : index
    %c0_74 = arith.constant 0 : index
    %c0_75 = arith.constant 0 : index
    %174 = vector.load %arg1[%c0_73, %c0_74, %c0_75] : memref<1x84x48xf32, #tpu.memory_space<vmem>>, vector<1x84x48xf32>
    %175 = vector.shape_cast %174 : vector<1x84x48xf32> to vector<84x48xf32>
    %c0_76 = arith.constant 0 : index
    %c0_77 = arith.constant 0 : index
    %176 = vector.load %arg13[%c0_76, %c0_77] : memref<1x48xf32, #tpu.memory_space<vmem>>, vector<1x48xf32>
    %177 = vector.broadcast %176 : vector<1x48xf32> to vector<84x48xf32>
    %178 = arith.mulf %177, %173 : vector<84x48xf32>
    %179 = arith.addf %175, %178 : vector<84x48xf32>
    %c0_78 = arith.constant 0 : index
    %c0_79 = arith.constant 0 : index
    %c0_80 = arith.constant 0 : index
    %180 = vector.load %arg14[%c0_78, %c0_79, %c0_80] : memref<1x84x48xf32, #tpu.memory_space<vmem>>, vector<1x84x48xf32>
    %181 = vector.shape_cast %180 : vector<1x84x48xf32> to vector<84x48xf32>
    %182 = vector.shape_cast %179 : vector<84x48xf32> to vector<1x84x48xf32>
    tpu.vector_store %arg14[%c0_78, %c0_79, %c0_80], %182 {strides = array<i32>} : memref<1x84x48xf32, #tpu.memory_space<vmem>>, vector<1x84x48xf32>,
    return
  }
  func.func @transform_0(%arg0: i32) -> (i32, i32, i32) {
    %c0_i32 = arith.constant 0 : i32
    %c0_i32_0 = arith.constant 0 : i32
    %c0_i32_1 = arith.constant 0 : i32
    return %arg0, %c0_i32, %c0_i32_0 : i32, i32, i32
  }
  func.func @transform_1(%arg0: i32) -> (i32, i32, i32) {
    %c0_i32 = arith.constant 0 : i32
    %c0_i32_0 = arith.constant 0 : i32
    %c0_i32_1 = arith.constant 0 : i32
    return %arg0, %c0_i32, %c0_i32_0 : i32, i32, i32
  }
  func.func @transform_2(%arg0: i32) -> (i32, i32) {
    %c0_i32 = arith.constant 0 : i32
    %c0_i32_0 = arith.constant 0 : i32
    %c0_i32_1 = arith.constant 0 : i32
    return %c0_i32, %c0_i32_0 : i32, i32
  }
  func.func @transform_3(%arg0: i32) -> (i32, i32) {
    %c0_i32 = arith.constant 0 : i32
    %c0_i32_0 = arith.constant 0 : i32
    %c0_i32_1 = arith.constant 0 : i32
    return %c0_i32, %c0_i32_0 : i32, i32
  }
  func.func @transform_4(%arg0: i32) -> (i32, i32) {
    %c0_i32 = arith.constant 0 : i32
    %c0_i32_0 = arith.constant 0 : i32
    %c0_i32_1 = arith.constant 0 : i32
    return %c0_i32, %c0_i32_0 : i32, i32
  }
  func.func @transform_5(%arg0: i32) -> (i32, i32) {
    %c0_i32 = arith.constant 0 : i32
    %c0_i32_0 = arith.constant 0 : i32
    %c0_i32_1 = arith.constant 0 : i32
    return %c0_i32, %c0_i32_0 : i32, i32
  }
  func.func @transform_6(%arg0: i32) -> (i32, i32) {
    %c0_i32 = arith.constant 0 : i32
    %c0_i32_0 = arith.constant 0 : i32
    %c0_i32_1 = arith.constant 0 : i32
    return %c0_i32, %c0_i32_0 : i32, i32
  }
  func.func @transform_7(%arg0: i32) -> (i32, i32) {
    %c0_i32 = arith.constant 0 : i32
    %c0_i32_0 = arith.constant 0 : i32
    %c0_i32_1 = arith.constant 0 : i32
    return %c0_i32, %c0_i32_0 : i32, i32
  }
  func.func @transform_8(%arg0: i32) -> (i32, i32) {
    %c0_i32 = arith.constant 0 : i32
    %c0_i32_0 = arith.constant 0 : i32
    %c0_i32_1 = arith.constant 0 : i32
    return %c0_i32, %c0_i32_0 : i32, i32
  }
  func.func @transform_9(%arg0: i32) -> (i32, i32) {
    %c0_i32 = arith.constant 0 : i32
    %c0_i32_0 = arith.constant 0 : i32
    %c0_i32_1 = arith.constant 0 : i32
    return %c0_i32, %c0_i32_0 : i32, i32
  }
  func.func @transform_10(%arg0: i32) -> (i32, i32) {
    %c0_i32 = arith.constant 0 : i32
    %c0_i32_0 = arith.constant 0 : i32
    %c0_i32_1 = arith.constant 0 : i32
    return %c0_i32, %c0_i32_0 : i32, i32
  }
  func.func @transform_11(%arg0: i32) -> (i32, i32) {
    %c0_i32 = arith.constant 0 : i32
    %c0_i32_0 = arith.constant 0 : i32
    %c0_i32_1 = arith.constant 0 : i32
    return %c0_i32, %c0_i32_0 : i32, i32
  }
  func.func @transform_12(%arg0: i32) -> (i32, i32) {
    %c0_i32 = arith.constant 0 : i32
    %c0_i32_0 = arith.constant 0 : i32
    %c0_i32_1 = arith.constant 0 : i32
    return %c0_i32, %c0_i32_0 : i32, i32
  }
  func.func @transform_13(%arg0: i32) -> (i32, i32, i32) {
    %c0_i32 = arith.constant 0 : i32
    %c0_i32_0 = arith.constant 0 : i32
    %c0_i32_1 = arith.constant 0 : i32
    return %arg0, %c0_i32, %c0_i32_0 : i32, i32, i32
  }
}

</mosaic_0001>

<llo_original>
// kernel: tpu_custom_call.1
$region0: #{tpu_custom_call.1}
  #allocation0 [shape = 'u32[]', space=smem, size = 0x4, offset = 0x4, fixed_abs, tag = 'smem constant byte address 0x4 - core index']
  #allocation1 [shape = 'u32[144,128]{1,0:T(1,128)}', space=vmem, size = 0x12000, scoped, tag = 'internal scratch']
  %s0 = inlined_call_operand.vmem [shape: f32[2,84,48], index: 0, kind: input, shape index: {}]
  %s1 = inlined_call_operand.vmem [shape: f32[2,84,48], index: 1, kind: input, shape index: {}]
  %s2 = inlined_call_operand.vmem [shape: f32[1,48], index: 2, kind: input, shape index: {}]
  %s3 = inlined_call_operand.vmem [shape: f32[1,48], index: 3, kind: input, shape index: {}]
  %s4 = inlined_call_operand.vmem [shape: f32[1,48], index: 4, kind: input, shape index: {}]
  %s5 = inlined_call_operand.vmem [shape: f32[1,48], index: 5, kind: input, shape index: {}]
  %s6 = inlined_call_operand.vmem [shape: f32[48,48], index: 6, kind: input, shape index: {}]
  %s7 = inlined_call_operand.vmem [shape: f32[1,48], index: 7, kind: input, shape index: {}]
  %s8 = inlined_call_operand.vmem [shape: f32[48,96], index: 8, kind: input, shape index: {}]
  %s9 = inlined_call_operand.vmem [shape: f32[1,96], index: 9, kind: input, shape index: {}]
  %s10 = inlined_call_operand.vmem [shape: f32[48,48], index: 10, kind: input, shape index: {}]
  %s11 = inlined_call_operand.vmem [shape: f32[1,48], index: 11, kind: input, shape index: {}]
  %s12 = inlined_call_operand.vmem [shape: f32[1,48], index: 12, kind: input, shape index: {}]
  %s13 = inlined_call_operand.vmem [shape: f32[2,84,48], index: 13, kind: output, shape index: {}]
  %s14 = sld [smem:[#allocation0]]
  $region85: #{tpu_custom_call.1} parent=0
    _
  %s16 = ssub.s32 1, %s14
  %s17 = scalar_select 0, %s16, %s14
  loop: start=0, step=1, limit=4
  $region2: #{tpu_custom_call.1} parent=0 // loop_pre_header
    _
  $region3: #{tpu_custom_call.1} parent=0 // loop_header
    %s19 = sphi 0, %s23
    %p20 = scmp.ge.s32.totalorder %s19, 4
    %s29 = sphi 0, %s31
    %s32 = sphi 0, %s29
    %s33 = sphi 0, %s32
    %s49 = sphi 0, %s33
    %s55 = sphi 0, %s57
    %s58 = sphi 0, %s55
    %s59 = sphi 0, %s58
    %s75 = sphi 0, %s59
    %s79 = sphi 0, %s79
    %s81 = sphi 0, %s79
    %s82 = sphi 0, %s81
    %s96 = sphi 0, %s82
    %s100 = sphi 0, %s100
    %s102 = sphi 0, %s100
    %s103 = sphi 0, %s102
    %s117 = sphi 0, %s103
    %s121 = sphi 0, %s121
    %s123 = sphi 0, %s121
    %s124 = sphi 0, %s123
    %s138 = sphi 0, %s124
    %s142 = sphi 0, %s142
    %s144 = sphi 0, %s142
    %s145 = sphi 0, %s144
    %s159 = sphi 0, %s145
    %s163 = sphi 0, %s163
    %s165 = sphi 0, %s163
    %s166 = sphi 0, %s165
    %s180 = sphi 0, %s166
    %s184 = sphi 0, %s184
    %s186 = sphi 0, %s184
    %s187 = sphi 0, %s186
    %s201 = sphi 0, %s187
    %s205 = sphi 0, %s205
    %s207 = sphi 0, %s205
    %s208 = sphi 0, %s207
    %s222 = sphi 0, %s208
    %s226 = sphi 0, %s226
    %s228 = sphi 0, %s226
    %s229 = sphi 0, %s228
    %s243 = sphi 0, %s229
    %s247 = sphi 0, %s247
    %s249 = sphi 0, %s247
    %s250 = sphi 0, %s249
    %s264 = sphi 0, %s250
    %s268 = sphi 0, %s268
    %s270 = sphi 0, %s268
    %s271 = sphi 0, %s270
    %s285 = sphi 0, %s271
    %s289 = sphi 0, %s289
    %s291 = sphi 0, %s289
    %s292 = sphi 0, %s291
    %s306 = sphi 0, %s292
    %s312 = sphi 0, %s314
    %s315 = sphi 0, %s312
    %s316 = sphi 0, %s315
    %s332 = sphi 0, %s316
  $region4: #{tpu_custom_call.1} parent=0 // loop_header_branch
    %22 = sbr.rel (%p20) target = $region8
  $region5: #{tpu_custom_call.1} parent=0 // loop_body
    %s24 = ssub.s32 %s19, 1
    %s25 = ssub.s32 %s19, 2
    %s26 = sadd.s32 %s19, 1
    %s27 = ssub.s32 %s19, %s26
    %p28 = scmp.eq.s32.totalorder %s27, 0
    %s30 = sadd.s32 %s29, 1
    %s31 = scalar_select %p28, %s29, %s30
    %p34 = pneg %p28
    %p35 = scmp.eq.s32.totalorder %s19, 1
    %p36 = por %p34, %p35
    %p37 = scmp.ne.s32.totalorder %s29, %s32
    %p38 = scmp.eq.s32.totalorder %s19, 0
    %p39 = por %p37, %p38
    %p40 = scmp.ne.s32.totalorder %s29, %s32
    %p41 = scmp.eq.s32.totalorder %s24, 1
    %p42 = por %p40, %p41
    %p43 = scmp.ne.s32.totalorder %s32, %s33
    %p44 = scmp.eq.s32.totalorder %s24, 0
    %p45 = por %p43, %p44
    %p46 = scmp.ne.s32.totalorder %s32, %s33
    %p47 = scmp.eq.s32.totalorder %s25, 1
    %p48 = por %p46, %p47
    %p50 = scmp.ne.s32.totalorder %s33, %s49
    %p51 = scmp.eq.s32.totalorder %s25, 0
    %p52 = por %p50, %p51
    %s53 = ssub.s32 %s19, %s26
    %p54 = scmp.eq.s32.totalorder %s53, 0
    %s56 = sadd.s32 %s55, 1
    %s57 = scalar_select %p54, %s55, %s56
    %p60 = pneg %p54
    %p61 = scmp.eq.s32.totalorder %s19, 1
    %p62 = por %p60, %p61
    %p63 = scmp.ne.s32.totalorder %s55, %s58
    %p64 = scmp.eq.s32.totalorder %s19, 0
    %p65 = por %p63, %p64
    %p66 = scmp.ne.s32.totalorder %s55, %s58
    %p67 = scmp.eq.s32.totalorder %s24, 1
    %p68 = por %p66, %p67
    %p69 = scmp.ne.s32.totalorder %s58, %s59
    %p70 = scmp.eq.s32.totalorder %s24, 0
    %p71 = por %p69, %p70
    %p72 = scmp.ne.s32.totalorder %s58, %s59
    %p73 = scmp.eq.s32.totalorder %s25, 1
    %p74 = por %p72, %p73
    %p76 = scmp.ne.s32.totalorder %s59, %s75
    %p77 = scmp.eq.s32.totalorder %s25, 0
    %p78 = por %p76, %p77
    %s80 = sadd.s32 %s79, 1
    %p83 = scmp.eq.s32.totalorder %s19, 1
    %p84 = scmp.ne.s32.totalorder %s79, %s81
    %p85 = scmp.eq.s32.totalorder %s19, 0
    %p86 = por %p84, %p85
    %p87 = scmp.ne.s32.totalorder %s79, %s81
    %p88 = scmp.eq.s32.totalorder %s24, 1
    %p89 = por %p87, %p88
    %p90 = scmp.ne.s32.totalorder %s81, %s82
    %p91 = scmp.eq.s32.totalorder %s24, 0
    %p92 = por %p90, %p91
    %p93 = scmp.ne.s32.totalorder %s81, %s82
    %p94 = scmp.eq.s32.totalorder %s25, 1
    %p95 = por %p93, %p94
    %p97 = scmp.ne.s32.totalorder %s82, %s96
    %p98 = scmp.eq.s32.totalorder %s25, 0
    %p99 = por %p97, %p98
    %s101 = sadd.s32 %s100, 1
    %p104 = scmp.eq.s32.totalorder %s19, 1
    %p105 = scmp.ne.s32.totalorder %s100, %s102
    %p106 = scmp.eq.s32.totalorder %s19, 0
    %p107 = por %p105, %p106
    %p108 = scmp.ne.s32.totalorder %s100, %s102
    %p109 = scmp.eq.s32.totalorder %s24, 1
    %p110 = por %p108, %p109
    %p111 = scmp.ne.s32.totalorder %s102, %s103
    %p112 = scmp.eq.s32.totalorder %s24, 0
    %p113 = por %p111, %p112
    %p114 = scmp.ne.s32.totalorder %s102, %s103
    %p115 = scmp.eq.s32.totalorder %s25, 1
    %p116 = por %p114, %p115
    %p118 = scmp.ne.s32.totalorder %s103, %s117
    %p119 = scmp.eq.s32.totalorder %s25, 0
    %p120 = por %p118, %p119
    %s122 = sadd.s32 %s121, 1
    %p125 = scmp.eq.s32.totalorder %s19, 1
    %p126 = scmp.ne.s32.totalorder %s121, %s123
    %p127 = scmp.eq.s32.totalorder %s19, 0
    %p128 = por %p126, %p127
    %p129 = scmp.ne.s32.totalorder %s121, %s123
    %p130 = scmp.eq.s32.totalorder %s24, 1
    %p131 = por %p129, %p130
    %p132 = scmp.ne.s32.totalorder %s123, %s124
    %p133 = scmp.eq.s32.totalorder %s24, 0
    %p134 = por %p132, %p133
    %p135 = scmp.ne.s32.totalorder %s123, %s124
    %p136 = scmp.eq.s32.totalorder %s25, 1
    %p137 = por %p135, %p136
    %p139 = scmp.ne.s32.totalorder %s124, %s138
    %p140 = scmp.eq.s32.totalorder %s25, 0
    %p141 = por %p139, %p140
    %s143 = sadd.s32 %s142, 1
    %p146 = scmp.eq.s32.totalorder %s19, 1
    %p147 = scmp.ne.s32.totalorder %s142, %s144
    %p148 = scmp.eq.s32.totalorder %s19, 0
    %p149 = por %p147, %p148
    %p150 = scmp.ne.s32.totalorder %s142, %s144
    %p151 = scmp.eq.s32.totalorder %s24, 1
    %p152 = por %p150, %p151
    %p153 = scmp.ne.s32.totalorder %s144, %s145
    %p154 = scmp.eq.s32.totalorder %s24, 0
    %p155 = por %p153, %p154
    %p156 = scmp.ne.s32.totalorder %s144, %s145
    %p157 = scmp.eq.s32.totalorder %s25, 1
    %p158 = por %p156, %p157
    %p160 = scmp.ne.s32.totalorder %s145, %s159
    %p161 = scmp.eq.s32.totalorder %s25, 0
    %p162 = por %p160, %p161
    %s164 = sadd.s32 %s163, 1
    %p167 = scmp.eq.s32.totalorder %s19, 1
    %p168 = scmp.ne.s32.totalorder %s163, %s165
    %p169 = scmp.eq.s32.totalorder %s19, 0
    %p170 = por %p168, %p169
    %p171 = scmp.ne.s32.totalorder %s163, %s165
    %p172 = scmp.eq.s32.totalorder %s24, 1
    %p173 = por %p171, %p172
    %p174 = scmp.ne.s32.totalorder %s165, %s166
    %p175 = scmp.eq.s32.totalorder %s24, 0
    %p176 = por %p174, %p175
    %p177 = scmp.ne.s32.totalorder %s165, %s166
    %p178 = scmp.eq.s32.totalorder %s25, 1
    %p179 = por %p177, %p178
    %p181 = scmp.ne.s32.totalorder %s166, %s180
    %p182 = scmp.eq.s32.totalorder %s25, 0
    %p183 = por %p181, %p182
    %s185 = sadd.s32 %s184, 1
    %p188 = scmp.eq.s32.totalorder %s19, 1
    %p189 = scmp.ne.s32.totalorder %s184, %s186
    %p190 = scmp.eq.s32.totalorder %s19, 0
    %p191 = por %p189, %p190
    %p192 = scmp.ne.s32.totalorder %s184, %s186
    %p193 = scmp.eq.s32.totalorder %s24, 1
    %p194 = por %p192, %p193
    %p195 = scmp.ne.s32.totalorder %s186, %s187
    %p196 = scmp.eq.s32.totalorder %s24, 0
    %p197 = por %p195, %p196
    %p198 = scmp.ne.s32.totalorder %s186, %s187
    %p199 = scmp.eq.s32.totalorder %s25, 1
    %p200 = por %p198, %p199
    %p202 = scmp.ne.s32.totalorder %s187, %s201
    %p203 = scmp.eq.s32.totalorder %s25, 0
    %p204 = por %p202, %p203
    %s206 = sadd.s32 %s205, 1
    %p209 = scmp.eq.s32.totalorder %s19, 1
    %p210 = scmp.ne.s32.totalorder %s205, %s207
    %p211 = scmp.eq.s32.totalorder %s19, 0
    %p212 = por %p210, %p211
    %p213 = scmp.ne.s32.totalorder %s205, %s207
    %p214 = scmp.eq.s32.totalorder %s24, 1
    %p215 = por %p213, %p214
    %p216 = scmp.ne.s32.totalorder %s207, %s208
    %p217 = scmp.eq.s32.totalorder %s24, 0
    %p218 = por %p216, %p217
    %p219 = scmp.ne.s32.totalorder %s207, %s208
    %p220 = scmp.eq.s32.totalorder %s25, 1
    %p221 = por %p219, %p220
    %p223 = scmp.ne.s32.totalorder %s208, %s222
    %p224 = scmp.eq.s32.totalorder %s25, 0
    %p225 = por %p223, %p224
    %s227 = sadd.s32 %s226, 1
    %p230 = scmp.eq.s32.totalorder %s19, 1
    %p231 = scmp.ne.s32.totalorder %s226, %s228
    %p232 = scmp.eq.s32.totalorder %s19, 0
    %p233 = por %p231, %p232
    %p234 = scmp.ne.s32.totalorder %s226, %s228
    %p235 = scmp.eq.s32.totalorder %s24, 1
    %p236 = por %p234, %p235
    %p237 = scmp.ne.s32.totalorder %s228, %s229
    %p238 = scmp.eq.s32.totalorder %s24, 0
    %p239 = por %p237, %p238
    %p240 = scmp.ne.s32.totalorder %s228, %s229
    %p241 = scmp.eq.s32.totalorder %s25, 1
    %p242 = por %p240, %p241
    %p244 = scmp.ne.s32.totalorder %s229, %s243
    %p245 = scmp.eq.s32.totalorder %s25, 0
    %p246 = por %p244, %p245
    %s248 = sadd.s32 %s247, 1
    %p251 = scmp.eq.s32.totalorder %s19, 1
    %p252 = scmp.ne.s32.totalorder %s247, %s249
    %p253 = scmp.eq.s32.totalorder %s19, 0
    %p254 = por %p252, %p253
    %p255 = scmp.ne.s32.totalorder %s247, %s249
    %p256 = scmp.eq.s32.totalorder %s24, 1
    %p257 = por %p255, %p256
    %p258 = scmp.ne.s32.totalorder %s249, %s250
    %p259 = scmp.eq.s32.totalorder %s24, 0
    %p260 = por %p258, %p259
    %p261 = scmp.ne.s32.totalorder %s249, %s250
    %p262 = scmp.eq.s32.totalorder %s25, 1
    %p263 = por %p261, %p262
    %p265 = scmp.ne.s32.totalorder %s250, %s264
    %p266 = scmp.eq.s32.totalorder %s25, 0
    %p267 = por %p265, %p266
    %s269 = sadd.s32 %s268, 1
    %p272 = scmp.eq.s32.totalorder %s19, 1
    %p273 = scmp.ne.s32.totalorder %s268, %s270
    %p274 = scmp.eq.s32.totalorder %s19, 0
    %p275 = por %p273, %p274
    %p276 = scmp.ne.s32.totalorder %s268, %s270
    %p277 = scmp.eq.s32.totalorder %s24, 1
    %p278 = por %p276, %p277
    %p279 = scmp.ne.s32.totalorder %s270, %s271
    %p280 = scmp.eq.s32.totalorder %s24, 0
    %p281 = por %p279, %p280
    %p282 = scmp.ne.s32.totalorder %s270, %s271
    %p283 = scmp.eq.s32.totalorder %s25, 1
    %p284 = por %p282, %p283
    %p286 = scmp.ne.s32.totalorder %s271, %s285
    %p287 = scmp.eq.s32.totalorder %s25, 0
    %p288 = por %p286, %p287
    %s290 = sadd.s32 %s289, 1
    %p293 = scmp.eq.s32.totalorder %s19, 1
    %p294 = scmp.ne.s32.totalorder %s289, %s291
    %p295 = scmp.eq.s32.totalorder %s19, 0
    %p296 = por %p294, %p295
    %p297 = scmp.ne.s32.totalorder %s289, %s291
    %p298 = scmp.eq.s32.totalorder %s24, 1
    %p299 = por %p297, %p298
    %p300 = scmp.ne.s32.totalorder %s291, %s292
    %p301 = scmp.eq.s32.totalorder %s24, 0
    %p302 = por %p300, %p301
    %p303 = scmp.ne.s32.totalorder %s291, %s292
    %p304 = scmp.eq.s32.totalorder %s25, 1
    %p305 = por %p303, %p304
    %p307 = scmp.ne.s32.totalorder %s292, %s306
    %p308 = scmp.eq.s32.totalorder %s25, 0
    %p309 = por %p307, %p308
    %s310 = ssub.s32 %s19, %s26
    %p311 = scmp.eq.s32.totalorder %s310, 0
    %s313 = sadd.s32 %s312, 1
    %s314 = scalar_select %p311, %s312, %s313
    %p317 = pneg %p311
    %p318 = scmp.eq.s32.totalorder %s19, 1
    %p319 = por %p317, %p318
    %p320 = scmp.ne.s32.totalorder %s312, %s315
    %p321 = scmp.eq.s32.totalorder %s19, 0
    %p322 = por %p320, %p321
    %p323 = scmp.ne.s32.totalorder %s312, %s315
    %p324 = scmp.eq.s32.totalorder %s24, 1
    %p325 = por %p323, %p324
    %p326 = scmp.ne.s32.totalorder %s315, %s316
    %p327 = scmp.eq.s32.totalorder %s24, 0
    %p328 = por %p326, %p327
    %p329 = scmp.ne.s32.totalorder %s315, %s316
    %p330 = scmp.eq.s32.totalorder %s25, 1
    %p331 = por %p329, %p330
    %p333 = scmp.ne.s32.totalorder %s316, %s332
    %p334 = scmp.eq.s32.totalorder %s25, 0
    %p335 = por %p333, %p334
    %p336 = scmp.le.s32.totalorder 1, %s19
    %p337 = scmp.lt.s32.totalorder %s19, 3
    %p338 = pnand %p336, %p337
    %p339 = pneg %p338
    // Predicated region
    $region9: #{tpu_custom_call.1} parent=5 // pred_check
      _
    $region10: #{tpu_custom_call.1} parent=5 // pred_check_branch
      %341 = sbr.rel (%p338) target = $region12
    $region11: #{tpu_custom_call.1} parent=5 // pred_region
      %s342 = ssub.s32 %s19, 1
      // Predicated region
      $region13: #{tpu_custom_call.1} parent=11 // pred_check
        %p343 = pneg %p92
      $region14: #{tpu_custom_call.1} parent=11 // pred_check_branch
        %345 = sbr.rel (%p343) target = $region16
      $region15: #{tpu_custom_call.1} parent=11 // pred_region
        _
      $region16: #{tpu_custom_call.1} parent=11 // pred_fallthru
        _
      // Predicated region
      $region17: #{tpu_custom_call.1} parent=11 // pred_check
        %p346 = pneg %p113
      $region18: #{tpu_custom_call.1} parent=11 // pred_check_branch
        %348 = sbr.rel (%p346) target = $region20
      $region19: #{tpu_custom_call.1} parent=11 // pred_region
        _
      $region20: #{tpu_custom_call.1} parent=11 // pred_fallthru
        _
      // Predicated region
      $region21: #{tpu_custom_call.1} parent=11 // pred_check
        %p349 = pneg %p134
      $region22: #{tpu_custom_call.1} parent=11 // pred_check_branch
        %351 = sbr.rel (%p349) target = $region24
      $region23: #{tpu_custom_call.1} parent=11 // pred_region
        _
      $region24: #{tpu_custom_call.1} parent=11 // pred_fallthru
        _
      // Predicated region
      $region25: #{tpu_custom_call.1} parent=11 // pred_check
        %p352 = pneg %p155
      $region26: #{tpu_custom_call.1} parent=11 // pred_check_branch
        %354 = sbr.rel (%p352) target = $region28
      $region27: #{tpu_custom_call.1} parent=11 // pred_region
        _
      $region28: #{tpu_custom_call.1} parent=11 // pred_fallthru
        _
      // Predicated region
      $region29: #{tpu_custom_call.1} parent=11 // pred_check
        %p355 = pneg %p176
      $region30: #{tpu_custom_call.1} parent=11 // pred_check_branch
        %357 = sbr.rel (%p355) target = $region32
      $region31: #{tpu_custom_call.1} parent=11 // pred_region
        _
      $region32: #{tpu_custom_call.1} parent=11 // pred_fallthru
        _
      // Predicated region
      $region33: #{tpu_custom_call.1} parent=11 // pred_check
        %p358 = pneg %p197
      $region34: #{tpu_custom_call.1} parent=11 // pred_check_branch
        %360 = sbr.rel (%p358) target = $region36
      $region35: #{tpu_custom_call.1} parent=11 // pred_region
        _
      $region36: #{tpu_custom_call.1} parent=11 // pred_fallthru
        _
      // Predicated region
      $region37: #{tpu_custom_call.1} parent=11 // pred_check
        %p361 = pneg %p218
      $region38: #{tpu_custom_call.1} parent=11 // pred_check_branch
        %363 = sbr.rel (%p361) target = $region40
      $region39: #{tpu_custom_call.1} parent=11 // pred_region
        _
      $region40: #{tpu_custom_call.1} parent=11 // pred_fallthru
        _
      // Predicated region
      $region41: #{tpu_custom_call.1} parent=11 // pred_check
        %p364 = pneg %p239
      $region42: #{tpu_custom_call.1} parent=11 // pred_check_branch
        %366 = sbr.rel (%p364) target = $region44
      $region43: #{tpu_custom_call.1} parent=11 // pred_region
        _
      $region44: #{tpu_custom_call.1} parent=11 // pred_fallthru
        _
      // Predicated region
      $region45: #{tpu_custom_call.1} parent=11 // pred_check
        %p367 = pneg %p260
      $region46: #{tpu_custom_call.1} parent=11 // pred_check_branch
        %369 = sbr.rel (%p367) target = $region48
      $region47: #{tpu_custom_call.1} parent=11 // pred_region
        _
      $region48: #{tpu_custom_call.1} parent=11 // pred_fallthru
        _
      // Predicated region
      $region49: #{tpu_custom_call.1} parent=11 // pred_check
        %p370 = pneg %p281
      $region50: #{tpu_custom_call.1} parent=11 // pred_check_branch
        %372 = sbr.rel (%p370) target = $region52
      $region51: #{tpu_custom_call.1} parent=11 // pred_region
        _
      $region52: #{tpu_custom_call.1} parent=11 // pred_fallthru
        _
      // Predicated region
      $region53: #{tpu_custom_call.1} parent=11 // pred_check
        %p373 = pneg %p302
      $region54: #{tpu_custom_call.1} parent=11 // pred_check_branch
        %375 = sbr.rel (%p373) target = $region56
      $region55: #{tpu_custom_call.1} parent=11 // pred_region
        _
      $region56: #{tpu_custom_call.1} parent=11 // pred_fallthru
        _
    $region12: #{tpu_custom_call.1} parent=5 // pred_fallthru
      _
    %p376 = scmp.lt.s32.totalorder %s19, 2
    // Predicated region
    $region57: #{tpu_custom_call.1} parent=5 // pred_check
      %p377 = pneg %p376
    $region58: #{tpu_custom_call.1} parent=5 // pred_check_branch
      %379 = sbr.rel (%p377) target = $region60
    $region59: #{tpu_custom_call.1} parent=5 // pred_region
      // Predicated region
      $region61: #{tpu_custom_call.1} parent=59 // pred_check
        %p380 = pneg %p39
      $region62: #{tpu_custom_call.1} parent=59 // pred_check_branch
        %382 = sbr.rel (%p380) target = $region64
      $region63: #{tpu_custom_call.1} parent=59 // pred_region
        %p383 = scmp.lt.s32.totalorder %s19, 1
        %s384 = scalar_select %p383, %s19, 1
        %s385 = smul.addr %s384, 11
        %s386 = smul.addr %s385, 8
        %s387 = scalar_lea.vmem %s0, %s386
      $region64: #{tpu_custom_call.1} parent=59 // pred_fallthru
        _
      // Predicated region
      $region65: #{tpu_custom_call.1} parent=59 // pred_check
        %p388 = pneg %p65
      $region66: #{tpu_custom_call.1} parent=59 // pred_check_branch
        %390 = sbr.rel (%p388) target = $region68
      $region67: #{tpu_custom_call.1} parent=59 // pred_region
        %p391 = scmp.lt.s32.totalorder %s19, 1
        %s392 = scalar_select %p391, %s19, 1
        %s393 = smul.addr %s392, 11
        %s394 = smul.addr %s393, 8
        %s395 = scalar_lea.vmem %s1, %s394
      $region68: #{tpu_custom_call.1} parent=59 // pred_fallthru
        _
    $region60: #{tpu_custom_call.1} parent=5 // pred_fallthru
      _
    %p396 = scmp.le.s32.totalorder 1, %s19
    %p397 = scmp.lt.s32.totalorder %s19, 3
    %p398 = pnand %p396, %p397
    %p399 = pneg %p398
    // Predicated region
    $region69: #{tpu_custom_call.1} parent=5 // pred_check
      _
    $region70: #{tpu_custom_call.1} parent=5 // pred_check_branch
      %401 = sbr.rel (%p398) target = $region72
    $region71: #{tpu_custom_call.1} parent=5 // pred_region
      %s402 = ssub.s32 %s19, 1
      %p403 = scmp.lt.s32.totalorder %s24, 1
      %s404 = scalar_select %p403, %s24, 1
      %s405 = smul.addr %s404, 11
      %s406 = smul.addr %s405, 8
      %s407 = scalar_lea.vmem %s0, %s406
      %p408 = pneg %p45
      %p409 = pneg %p42
      %p410 = scmp.lt.s32.totalorder %s24, 1
      %s411 = scalar_select %p410, %s24, 1
      %s412 = smul.addr %s411, 11
      %s413 = smul.addr %s412, 8
      %s414 = scalar_lea.vmem %s1, %s413
      %p415 = pneg %p71
      %p416 = pneg %p68
      %p417 = pneg %p92
      %p418 = pneg %p89
      %p419 = pneg %p113
      %p420 = pneg %p110
      %p421 = pneg %p134
      %p422 = pneg %p131
      %p423 = pneg %p155
      %p424 = pneg %p152
      %p425 = pneg %p176
      %p426 = pneg %p173
      %p427 = pneg %p197
      %p428 = pneg %p194
      %p429 = pneg %p218
      %p430 = pneg %p215
      %p431 = pneg %p239
      %p432 = pneg %p236
      %p433 = pneg %p260
      %p434 = pneg %p257
      %p435 = pneg %p281
      %p436 = pneg %p278
      %p437 = pneg %p302
      %p438 = pneg %p299
      %p439 = pneg %p328
      %p440 = pneg %p325
      %p441 = scmp.lt.s32.totalorder %s24, 1
      %s442 = scalar_select %p441, %s24, 1
      %s443 = smul.addr %s442, 11
      %s444 = smul.addr %s443, 8
      %s445 = scalar_lea.vmem %s13, %s444
      %p446 = scmp.lt.s32.totalorder %s24, 1
      %s447 = scalar_select %p446, %s24, 1
      %s448 = smul.addr %s447, 11
      %s449 = smul.addr %s448, 8
      %s450 = scalar_lea.vmem %s0, %s449
      %p451 = scmp.lt.s32.totalorder %s24, 1
      %s452 = scalar_select %p451, %s24, 1
      %s453 = smul.addr %s452, 11
      %s454 = smul.addr %s453, 8
      %s455 = scalar_lea.vmem %s1, %s454
      %p456 = scmp.lt.s32.totalorder %s24, 1
      %s457 = scalar_select %p456, %s24, 1
      %s458 = smul.addr %s457, 11
      %s459 = smul.addr %s458, 8
      %s460 = scalar_lea.vmem %s13, %s459
      %v461 = vld [vmem:[%s450] sm:$0xff]
      %v462 = vld [vmem:[%s450 + $0x8] sm:$0xff]
      %v463 = vld [vmem:[%s450 + $0x10] sm:$0xff]
      %v464 = vld [vmem:[%s450 + $0x18] sm:$0xff]
      %v465 = vld [vmem:[%s450 + $0x20] sm:$0xff]
      %v466 = vld [vmem:[%s450 + $0x28] sm:$0xff]
      %v467 = vld [vmem:[%s450 + $0x30] sm:$0xff]
      %v468 = vld [vmem:[%s450 + $0x38] sm:$0xff]
      %v469 = vld [vmem:[%s450 + $0x40] sm:$0xff]
      %v470 = vld [vmem:[%s450 + $0x48] sm:$0xff]
      %v471 = vld [vmem:[%s450 + $0x50] sm:$0xf]
      %vm472 = vcmask 392192
      %v473 = vsel %vm472, %v461, 0.0
      %474 = vadd.xlane.f32.xlu0 %v473
      %v475 = vpop.xlane.xlu0 %474
      %v476 = vsel %vm472, %v462, 0.0
      %477 = vadd.xlane.f32.xlu0 %v476
      %v478 = vpop.xlane.xlu0 %477
      %v479 = vsel %vm472, %v463, 0.0
      %480 = vadd.xlane.f32.xlu0 %v479
      %v481 = vpop.xlane.xlu0 %480
      %v482 = vsel %vm472, %v464, 0.0
      %483 = vadd.xlane.f32.xlu0 %v482
      %v484 = vpop.xlane.xlu0 %483
      %v485 = vsel %vm472, %v465, 0.0
      %486 = vadd.xlane.f32.xlu0 %v485
      %v487 = vpop.xlane.xlu0 %486
      %v488 = vsel %vm472, %v466, 0.0
      %489 = vadd.xlane.f32.xlu0 %v488
      %v490 = vpop.xlane.xlu0 %489
      %v491 = vsel %vm472, %v467, 0.0
      %492 = vadd.xlane.f32.xlu0 %v491
      %v493 = vpop.xlane.xlu0 %492
      %v494 = vsel %vm472, %v468, 0.0
      %495 = vadd.xlane.f32.xlu0 %v494
      %v496 = vpop.xlane.xlu0 %495
      %v497 = vsel %vm472, %v469, 0.0
      %498 = vadd.xlane.f32.xlu0 %v497
      %v499 = vpop.xlane.xlu0 %498
      %v500 = vsel %vm472, %v470, 0.0
      %501 = vadd.xlane.f32.xlu0 %v500
      %v502 = vpop.xlane.xlu0 %501
      %vm503 = vcmask 388096
      %v504 = vsel %vm503, %v471, 0.0
      %505 = vadd.xlane.f32.xlu0 %v504
      %v506 = vpop.xlane.xlu0 %505
      %v507 = vrcp.pop 48.0
      %v508 = vmul.f32 %v475, %v507
      %v509 = vmul.f32 %v478, %v507
      %v510 = vmul.f32 %v481, %v507
      %v511 = vmul.f32 %v484, %v507
      %v512 = vmul.f32 %v487, %v507
      %v513 = vmul.f32 %v490, %v507
      %v514 = vmul.f32 %v493, %v507
      %v515 = vmul.f32 %v496, %v507
      %v516 = vmul.f32 %v499, %v507
      %v517 = vmul.f32 %v502, %v507
      %v518 = vmul.f32 %v506, %v507
      %v519 = vsub.f32 %v461, %v508
      %v520 = vsub.f32 %v462, %v509
      %v521 = vsub.f32 %v463, %v510
      %v522 = vsub.f32 %v464, %v511
      %v523 = vsub.f32 %v465, %v512
      %v524 = vsub.f32 %v466, %v513
      %v525 = vsub.f32 %v467, %v514
      %v526 = vsub.f32 %v468, %v515
      %v527 = vsub.f32 %v469, %v516
      %v528 = vsub.f32 %v470, %v517
      %v529 = vsub.f32 %v471, %v518
      %v530 = vmul.f32 %v519, %v519
      %v531 = vmul.f32 %v520, %v520
      %v532 = vmul.f32 %v521, %v521
      %v533 = vmul.f32 %v522, %v522
      %v534 = vmul.f32 %v523, %v523
      %v535 = vmul.f32 %v524, %v524
      %v536 = vmul.f32 %v525, %v525
      %v537 = vmul.f32 %v526, %v526
      %v538 = vmul.f32 %v527, %v527
      %v539 = vmul.f32 %v528, %v528
      %v540 = vmul.f32 %v529, %v529
      %v541 = vsel %vm472, %v530, 0.0
      %542 = vadd.xlane.f32.xlu0 %v541
      %v543 = vpop.xlane.xlu0 %542
      %v544 = vsel %vm472, %v531, 0.0
      %545 = vadd.xlane.f32.xlu0 %v544
      %v546 = vpop.xlane.xlu0 %545
      %v547 = vsel %vm472, %v532, 0.0
      %548 = vadd.xlane.f32.xlu0 %v547
      %v549 = vpop.xlane.xlu0 %548
      %v550 = vsel %vm472, %v533, 0.0
      %551 = vadd.xlane.f32.xlu0 %v550
      %v552 = vpop.xlane.xlu0 %551
      %v553 = vsel %vm472, %v534, 0.0
      %554 = vadd.xlane.f32.xlu0 %v553
      %v555 = vpop.xlane.xlu0 %554
      %v556 = vsel %vm472, %v535, 0.0
      %557 = vadd.xlane.f32.xlu0 %v556
      %v558 = vpop.xlane.xlu0 %557
      %v559 = vsel %vm472, %v536, 0.0
      %560 = vadd.xlane.f32.xlu0 %v559
      %v561 = vpop.xlane.xlu0 %560
      %v562 = vsel %vm472, %v537, 0.0
      %563 = vadd.xlane.f32.xlu0 %v562
      %v564 = vpop.xlane.xlu0 %563
      %v565 = vsel %vm472, %v538, 0.0
      %566 = vadd.xlane.f32.xlu0 %v565
      %v567 = vpop.xlane.xlu0 %566
      %v568 = vsel %vm472, %v539, 0.0
      %569 = vadd.xlane.f32.xlu0 %v568
      %v570 = vpop.xlane.xlu0 %569
      %v571 = vsel %vm503, %v540, 0.0
      %572 = vadd.xlane.f32.xlu0 %v571
      %v573 = vpop.xlane.xlu0 %572
      %v574 = vmul.f32 %v543, %v507
      %v575 = vmul.f32 %v546, %v507
      %v576 = vmul.f32 %v549, %v507
      %v577 = vmul.f32 %v552, %v507
      %v578 = vmul.f32 %v555, %v507
      %v579 = vmul.f32 %v558, %v507
      %v580 = vmul.f32 %v561, %v507
      %v581 = vmul.f32 %v564, %v507
      %v582 = vmul.f32 %v567, %v507
      %v583 = vmul.f32 %v570, %v507
      %v584 = vmul.f32 %v573, %v507
      %v585 = vadd.f32 %v574, 1e-06
      %v586 = vadd.f32 %v575, 1e-06
      %v587 = vadd.f32 %v576, 1e-06
      %v588 = vadd.f32 %v577, 1e-06
      %v589 = vadd.f32 %v578, 1e-06
      %v590 = vadd.f32 %v579, 1e-06
      %v591 = vadd.f32 %v580, 1e-06
      %v592 = vadd.f32 %v581, 1e-06
      %v593 = vadd.f32 %v582, 1e-06
      %v594 = vadd.f32 %v583, 1e-06
      %v595 = vadd.f32 %v584, 1e-06
      %v596 = vrsqrt.pop %v585
      %v597 = vrsqrt.pop %v586
      %v598 = vrsqrt.pop %v587
      %v599 = vrsqrt.pop %v588
      %v600 = vrsqrt.pop %v589
      %v601 = vrsqrt.pop %v590
      %v602 = vrsqrt.pop %v591
      %v603 = vrsqrt.pop %v592
      %v604 = vrsqrt.pop %v593
      %v605 = vrsqrt.pop %v594
      %v606 = vrsqrt.pop %v595
      %v607 = vmul.f32 %v519, %v596
      %v608 = vmul.f32 %v520, %v597
      %v609 = vmul.f32 %v521, %v598
      %v610 = vmul.f32 %v522, %v599
      %v611 = vmul.f32 %v523, %v600
      %v612 = vmul.f32 %v524, %v601
      %v613 = vmul.f32 %v525, %v602
      %v614 = vmul.f32 %v526, %v603
      %v615 = vmul.f32 %v527, %v604
      %v616 = vmul.f32 %v528, %v605
      %v617 = vmul.f32 %v529, %v606
      %v618 = vld [vmem:[%s2] sm:$0x1]
      %v620 = vlaneseq
      %v621 = vshrl.u32 %v620, 7
      %v622 = vsub.s32 0, %v621
      %v623 = vrot.slane %v618, %v622
      %v625 = vmul.f32 %v607, %v623
      %v626 = vmul.f32 %v608, %v623
      %v627 = vmul.f32 %v609, %v623
      %v628 = vmul.f32 %v610, %v623
      %v629 = vmul.f32 %v611, %v623
      %v630 = vmul.f32 %v612, %v623
      %v631 = vmul.f32 %v613, %v623
      %v632 = vmul.f32 %v614, %v623
      %v633 = vmul.f32 %v615, %v623
      %v634 = vmul.f32 %v616, %v623
      %v635 = vmul.f32 %v617, %v623
      %v636 = vld [vmem:[%s3] sm:$0x1]
      %v638 = vlaneseq
      %v639 = vshrl.u32 %v638, 7
      %v640 = vsub.s32 0, %v639
      %v641 = vrot.slane %v636, %v640
      %v643 = vadd.f32 %v625, %v641
      %v644 = vadd.f32 %v626, %v641
      %v645 = vadd.f32 %v627, %v641
      %v646 = vadd.f32 %v628, %v641
      %v647 = vadd.f32 %v629, %v641
      %v648 = vadd.f32 %v630, %v641
      %v649 = vadd.f32 %v631, %v641
      %v650 = vadd.f32 %v632, %v641
      %v651 = vadd.f32 %v633, %v641
      %v652 = vadd.f32 %v634, %v641
      %v653 = vadd.f32 %v635, %v641
      %v654 = vld [vmem:[%s455] sm:$0xff]
      %v655 = vld [vmem:[%s455 + $0x8] sm:$0xff]
      %v656 = vld [vmem:[%s455 + $0x10] sm:$0xff]
      %v657 = vld [vmem:[%s455 + $0x18] sm:$0xff]
      %v658 = vld [vmem:[%s455 + $0x20] sm:$0xff]
      %v659 = vld [vmem:[%s455 + $0x28] sm:$0xff]
      %v660 = vld [vmem:[%s455 + $0x30] sm:$0xff]
      %v661 = vld [vmem:[%s455 + $0x38] sm:$0xff]
      %v662 = vld [vmem:[%s455 + $0x40] sm:$0xff]
      %v663 = vld [vmem:[%s455 + $0x48] sm:$0xff]
      %v664 = vld [vmem:[%s455 + $0x50] sm:$0xf]
      %v665 = vsel %vm472, %v654, 0.0
      %666 = vadd.xlane.f32.xlu0 %v665
      %v667 = vpop.xlane.xlu0 %666
      %v668 = vsel %vm472, %v655, 0.0
      %669 = vadd.xlane.f32.xlu0 %v668
      %v670 = vpop.xlane.xlu0 %669
      %v671 = vsel %vm472, %v656, 0.0
      %672 = vadd.xlane.f32.xlu0 %v671
      %v673 = vpop.xlane.xlu0 %672
      %v674 = vsel %vm472, %v657, 0.0
      %675 = vadd.xlane.f32.xlu0 %v674
      %v676 = vpop.xlane.xlu0 %675
      %v677 = vsel %vm472, %v658, 0.0
      %678 = vadd.xlane.f32.xlu0 %v677
      %v679 = vpop.xlane.xlu0 %678
      %v680 = vsel %vm472, %v659, 0.0
      %681 = vadd.xlane.f32.xlu0 %v680
      %v682 = vpop.xlane.xlu0 %681
      %v683 = vsel %vm472, %v660, 0.0
      %684 = vadd.xlane.f32.xlu0 %v683
      %v685 = vpop.xlane.xlu0 %684
      %v686 = vsel %vm472, %v661, 0.0
      %687 = vadd.xlane.f32.xlu0 %v686
      %v688 = vpop.xlane.xlu0 %687
      %v689 = vsel %vm472, %v662, 0.0
      %690 = vadd.xlane.f32.xlu0 %v689
      %v691 = vpop.xlane.xlu0 %690
      %v692 = vsel %vm472, %v663, 0.0
      %693 = vadd.xlane.f32.xlu0 %v692
      %v694 = vpop.xlane.xlu0 %693
      %v695 = vsel %vm503, %v664, 0.0
      %696 = vadd.xlane.f32.xlu0 %v695
      %v697 = vpop.xlane.xlu0 %696
      %v698 = vmul.f32 %v667, %v507
      %v699 = vmul.f32 %v670, %v507
      %v700 = vmul.f32 %v673, %v507
      %v701 = vmul.f32 %v676, %v507
      %v702 = vmul.f32 %v679, %v507
      %v703 = vmul.f32 %v682, %v507
      %v704 = vmul.f32 %v685, %v507
      %v705 = vmul.f32 %v688, %v507
      %v706 = vmul.f32 %v691, %v507
      %v707 = vmul.f32 %v694, %v507
      %v708 = vmul.f32 %v697, %v507
      %v709 = vsub.f32 %v654, %v698
      %v710 = vsub.f32 %v655, %v699
      %v711 = vsub.f32 %v656, %v700
      %v712 = vsub.f32 %v657, %v701
      %v713 = vsub.f32 %v658, %v702
      %v714 = vsub.f32 %v659, %v703
      %v715 = vsub.f32 %v660, %v704
      %v716 = vsub.f32 %v661, %v705
      %v717 = vsub.f32 %v662, %v706
      %v718 = vsub.f32 %v663, %v707
      %v719 = vsub.f32 %v664, %v708
      %v720 = vmul.f32 %v709, %v709
      %v721 = vmul.f32 %v710, %v710
      %v722 = vmul.f32 %v711, %v711
      %v723 = vmul.f32 %v712, %v712
      %v724 = vmul.f32 %v713, %v713
      %v725 = vmul.f32 %v714, %v714
      %v726 = vmul.f32 %v715, %v715
      %v727 = vmul.f32 %v716, %v716
      %v728 = vmul.f32 %v717, %v717
      %v729 = vmul.f32 %v718, %v718
      %v730 = vmul.f32 %v719, %v719
      %v731 = vsel %vm472, %v720, 0.0
      %732 = vadd.xlane.f32.xlu0 %v731
      %v733 = vpop.xlane.xlu0 %732
      %v734 = vsel %vm472, %v721, 0.0
      %735 = vadd.xlane.f32.xlu0 %v734
      %v736 = vpop.xlane.xlu0 %735
      %v737 = vsel %vm472, %v722, 0.0
      %738 = vadd.xlane.f32.xlu0 %v737
      %v739 = vpop.xlane.xlu0 %738
      %v740 = vsel %vm472, %v723, 0.0
      %741 = vadd.xlane.f32.xlu0 %v740
      %v742 = vpop.xlane.xlu0 %741
      %v743 = vsel %vm472, %v724, 0.0
      %744 = vadd.xlane.f32.xlu0 %v743
      %v745 = vpop.xlane.xlu0 %744
      %v746 = vsel %vm472, %v725, 0.0
      %747 = vadd.xlane.f32.xlu0 %v746
      %v748 = vpop.xlane.xlu0 %747
      %v749 = vsel %vm472, %v726, 0.0
      %750 = vadd.xlane.f32.xlu0 %v749
      %v751 = vpop.xlane.xlu0 %750
      %v752 = vsel %vm472, %v727, 0.0
      %753 = vadd.xlane.f32.xlu0 %v752
      %v754 = vpop.xlane.xlu0 %753
      %v755 = vsel %vm472, %v728, 0.0
      %756 = vadd.xlane.f32.xlu0 %v755
      %v757 = vpop.xlane.xlu0 %756
      %v758 = vsel %vm472, %v729, 0.0
      %759 = vadd.xlane.f32.xlu0 %v758
      %v760 = vpop.xlane.xlu0 %759
      %v761 = vsel %vm503, %v730, 0.0
      %762 = vadd.xlane.f32.xlu0 %v761
      %v763 = vpop.xlane.xlu0 %762
      %v764 = vmul.f32 %v733, %v507
      %v765 = vmul.f32 %v736, %v507
      %v766 = vmul.f32 %v739, %v507
      %v767 = vmul.f32 %v742, %v507
      %v768 = vmul.f32 %v745, %v507
      %v769 = vmul.f32 %v748, %v507
      %v770 = vmul.f32 %v751, %v507
      %v771 = vmul.f32 %v754, %v507
      %v772 = vmul.f32 %v757, %v507
      %v773 = vmul.f32 %v760, %v507
      %v774 = vmul.f32 %v763, %v507
      %v775 = vadd.f32 %v764, 1e-06
      %v776 = vadd.f32 %v765, 1e-06
      %v777 = vadd.f32 %v766, 1e-06
      %v778 = vadd.f32 %v767, 1e-06
      %v779 = vadd.f32 %v768, 1e-06
      %v780 = vadd.f32 %v769, 1e-06
      %v781 = vadd.f32 %v770, 1e-06
      %v782 = vadd.f32 %v771, 1e-06
      %v783 = vadd.f32 %v772, 1e-06
      %v784 = vadd.f32 %v773, 1e-06
      %v785 = vadd.f32 %v774, 1e-06
      %v786 = vrsqrt.pop %v775
      %v787 = vrsqrt.pop %v776
      %v788 = vrsqrt.pop %v777
      %v789 = vrsqrt.pop %v778
      %v790 = vrsqrt.pop %v779
      %v791 = vrsqrt.pop %v780
      %v792 = vrsqrt.pop %v781
      %v793 = vrsqrt.pop %v782
      %v794 = vrsqrt.pop %v783
      %v795 = vrsqrt.pop %v784
      %v796 = vrsqrt.pop %v785
      %v797 = vmul.f32 %v709, %v786
      %v798 = vmul.f32 %v710, %v787
      %v799 = vmul.f32 %v711, %v788
      %v800 = vmul.f32 %v712, %v789
      %v801 = vmul.f32 %v713, %v790
      %v802 = vmul.f32 %v714, %v791
      %v803 = vmul.f32 %v715, %v792
      %v804 = vmul.f32 %v716, %v793
      %v805 = vmul.f32 %v717, %v794
      %v806 = vmul.f32 %v718, %v795
      %v807 = vmul.f32 %v719, %v796
      %v808 = vld [vmem:[%s4] sm:$0x1]
      %v810 = vlaneseq
      %v811 = vshrl.u32 %v810, 7
      %v812 = vsub.s32 0, %v811
      %v813 = vrot.slane %v808, %v812
      %v815 = vmul.f32 %v797, %v813
      %v816 = vmul.f32 %v798, %v813
      %v817 = vmul.f32 %v799, %v813
      %v818 = vmul.f32 %v800, %v813
      %v819 = vmul.f32 %v801, %v813
      %v820 = vmul.f32 %v802, %v813
      %v821 = vmul.f32 %v803, %v813
      %v822 = vmul.f32 %v804, %v813
      %v823 = vmul.f32 %v805, %v813
      %v824 = vmul.f32 %v806, %v813
      %v825 = vmul.f32 %v807, %v813
      %v826 = vld [vmem:[%s5] sm:$0x1]
      %v828 = vlaneseq
      %v829 = vshrl.u32 %v828, 7
      %v830 = vsub.s32 0, %v829
      %v831 = vrot.slane %v826, %v830
      %v833 = vadd.f32 %v815, %v831
      %v834 = vadd.f32 %v816, %v831
      %v835 = vadd.f32 %v817, %v831
      %v836 = vadd.f32 %v818, %v831
      %v837 = vadd.f32 %v819, %v831
      %v838 = vadd.f32 %v820, %v831
      %v839 = vadd.f32 %v821, %v831
      %v840 = vadd.f32 %v822, %v831
      %v841 = vadd.f32 %v823, %v831
      %v842 = vadd.f32 %v824, %v831
      %v843 = vadd.f32 %v825, %v831
      %v844 = vld [vmem:[%s6] sm:$0xff]
      %v845 = vld [vmem:[%s6 + $0x8] sm:$0xff]
      %v846 = vld [vmem:[%s6 + $0x10] sm:$0xff]
      %v847 = vld [vmem:[%s6 + $0x18] sm:$0xff]
      %v848 = vld [vmem:[%s6 + $0x20] sm:$0xff]
      %v849 = vld [vmem:[%s6 + $0x28] sm:$0xff]
      %v850 = vld [vmem:[%s7] sm:$0x1]
      %v852 = vlaneseq
      %v853 = vshrl.u32 %v852, 7
      %v854 = vsub.s32 0, %v853
      %v855 = vrot.slane %v850, %v854
      %v858 = vsel %vm472, %v643, 0
      %v861 = vsel %vm472, %v644, 0
      %v864 = vsel %vm472, %v645, 0
      %v867 = vsel %vm472, %v646, 0
      %v870 = vsel %vm472, %v647, 0
      %v873 = vsel %vm472, %v648, 0
      %v876 = vsel %vm472, %v649, 0
      %v879 = vsel %vm472, %v650, 0
      %v882 = vsel %vm472, %v651, 0
      %v885 = vsel %vm472, %v652, 0
      %v888 = vsel %vm472, %v653, 0
      %890 = vmatprep.subr.mxu0 0.0
      %891 = vmatpush1.msra.mxu0 0.0
      %892 = vmatprep.subr.mxu0 0.0
      %893 = vmatpush1.msra.mxu0 0.0
      %894 = vmatprep.subr.mxu0 0.0
      %895 = vmatpush1.msra.mxu0 0.0
      %896 = vmatprep.subr.mxu0 0.0
      %897 = vmatpush1.msra.mxu0 0.0
      %898 = vmatprep.subr.mxu0 0.0
      %899 = vmatpush1.msra.mxu0 0.0
      %900 = vmatprep.subr.mxu0 0.0
      %901 = vmatpush1.msra.mxu0 0.0
      %902 = vmatprep.subr.mxu0 0.0
      %903 = vmatpush1.msra.mxu0 0.0
      %904 = vmatprep.subr.mxu0 0.0
      %905 = vmatpush1.msra.mxu0 0.0
      %906 = vmatprep.subr.mxu0 0.0
      %907 = vmatpush1.msra.mxu0 0.0
      %908 = vmatprep.subr.mxu0 0.0
      %909 = vmatpush1.msra.mxu0 0.0
      %910 = vmatprep.subr.mxu0 0.0
      %911 = vmatpush1.msra.mxu0 %v849
      %912 = vmatprep.subr.mxu0 0.0
      %913 = vmatpush1.msra.mxu0 %v848
      %914 = vmatprep.subr.mxu0 0.0
      %915 = vmatpush1.msra.mxu0 %v847
      %916 = vmatprep.subr.mxu0 0.0
      %917 = vmatpush1.msra.mxu0 %v846
      %918 = vmatprep.subr.mxu0 0.0
      %919 = vmatpush1.msra.mxu0 %v845
      %920 = vmatprep.subr.mxu0 0.0
      %921 = vmatpush1.msra.mxu0 %v844
      %922 = vmatprep.subr.mxu0 0.0
      %923 = vmatpush2.msra.mxu0 0.0
      %924 = vmatprep.subr.mxu0 0.0
      %925 = vmatpush2.msra.mxu0 0.0
      %926 = vmatprep.subr.mxu0 0.0
      %927 = vmatpush2.msra.mxu0 0.0
      %928 = vmatprep.subr.mxu0 0.0
      %929 = vmatpush2.msra.mxu0 0.0
      %930 = vmatprep.subr.mxu0 0.0
      %931 = vmatpush2.msra.mxu0 0.0
      %932 = vmatprep.subr.mxu0 0.0
      %933 = vmatpush2.msra.mxu0 0.0
      %934 = vmatprep.subr.mxu0 0.0
      %935 = vmatpush2.msra.mxu0 0.0
      %936 = vmatprep.subr.mxu0 0.0
      %937 = vmatpush2.msra.mxu0 0.0
      %938 = vmatprep.subr.mxu0 0.0
      %939 = vmatpush2.msra.mxu0 0.0
      %940 = vmatprep.subr.mxu0 0.0
      %941 = vmatpush2.msra.mxu0 0.0
      %942 = vmatprep.subr.mxu0 0.0
      %943 = vmatpush2.msra.mxu0 0.0
      %944 = vmatprep.subr.mxu0 0.0
      %945 = vmatpush2.msra.mxu0 0.0
      %946 = vmatprep.subr.mxu0 0.0
      %947 = vmatpush2.msra.mxu0 0.0
      %948 = vmatprep.subr.mxu0 0.0
      %949 = vmatpush2.msra.mxu0 0.0
      %950 = vmatprep.subr.mxu0 0.0
      %951 = vmatpush2.msra.mxu0 0.0
      %952 = vmatprep.subr.mxu0 0.0
      %953 = vmatpush2.msra.mxu0 0.0
      %954 = vmatprep.mubr.f32.mxu0 0.0
      %955 = vmatmul.mubr.f32.gmra.mxu0 %v858
      %v956 = vpop.f32.mrf.mxu0
      %v957 = vadd.f32 %v855, %v956
      %v958 = vpop.f32.mrf.mxu0
      %959 = vmatprep.mubr.f32.mxu0 0.0
      %960 = vmatmul.mubr.f32.gmra.mxu0 %v861
      %v961 = vpop.f32.mrf.mxu0
      %v962 = vadd.f32 %v855, %v961
      %v963 = vpop.f32.mrf.mxu0
      %964 = vmatprep.mubr.f32.mxu0 0.0
      %965 = vmatmul.mubr.f32.gmra.mxu0 %v864
      %v966 = vpop.f32.mrf.mxu0
      %v967 = vadd.f32 %v855, %v966
      %v968 = vpop.f32.mrf.mxu0
      %969 = vmatprep.mubr.f32.mxu0 0.0
      %970 = vmatmul.mubr.f32.gmra.mxu0 %v867
      %v971 = vpop.f32.mrf.mxu0
      %v972 = vadd.f32 %v855, %v971
      %v973 = vpop.f32.mrf.mxu0
      %974 = vmatprep.mubr.f32.mxu0 0.0
      %975 = vmatmul.mubr.f32.gmra.mxu0 %v870
      %v976 = vpop.f32.mrf.mxu0
      %v977 = vadd.f32 %v855, %v976
      %v978 = vpop.f32.mrf.mxu0
      %979 = vmatprep.mubr.f32.mxu0 0.0
      %980 = vmatmul.mubr.f32.gmra.mxu0 %v873
      %v981 = vpop.f32.mrf.mxu0
      %v982 = vadd.f32 %v855, %v981
      %v983 = vpop.f32.mrf.mxu0
      %984 = vmatprep.mubr.f32.mxu0 0.0
      %985 = vmatmul.mubr.f32.gmra.mxu0 %v876
      %v986 = vpop.f32.mrf.mxu0
      %v987 = vadd.f32 %v855, %v986
      %v988 = vpop.f32.mrf.mxu0
      %989 = vmatprep.mubr.f32.mxu0 0.0
      %990 = vmatmul.mubr.f32.gmra.mxu0 %v879
      %v991 = vpop.f32.mrf.mxu0
      %v992 = vadd.f32 %v855, %v991
      %v993 = vpop.f32.mrf.mxu0
      %994 = vmatprep.mubr.f32.mxu0 0.0
      %995 = vmatmul.mubr.f32.gmra.mxu0 %v882
      %v996 = vpop.f32.mrf.mxu0
      %v997 = vadd.f32 %v855, %v996
      %v998 = vpop.f32.mrf.mxu0
      %999 = vmatprep.mubr.f32.mxu0 0.0
      %1000 = vmatmul.mubr.f32.gmra.mxu0 %v885
      %v1001 = vpop.f32.mrf.mxu0
      %v1002 = vadd.f32 %v855, %v1001
      %v1003 = vpop.f32.mrf.mxu0
      %1004 = vmatprep.mubr.f32.mxu0 0.0
      %1005 = vmatmul.mubr.f32.gmra.mxu0 %v888
      %v1006 = vpop.f32.mrf.mxu0
      %v1007 = vadd.f32 %v855, %v1006
      %v1008 = vpop.f32.mrf.mxu0
      %1009 = vdwg.mxu0
      %v1010 = vld [vmem:[%s8] sm:$0xff]
      %v1011 = vld [vmem:[%s8 + $0x8] sm:$0xff]
      %v1012 = vld [vmem:[%s8 + $0x10] sm:$0xff]
      %v1013 = vld [vmem:[%s8 + $0x18] sm:$0xff]
      %v1014 = vld [vmem:[%s8 + $0x20] sm:$0xff]
      %v1015 = vld [vmem:[%s8 + $0x28] sm:$0xff]
      %v1016 = vld [vmem:[%s9] sm:$0x1]
      %v1018 = vlaneseq
      %v1019 = vshrl.u32 %v1018, 7
      %v1020 = vsub.s32 0, %v1019
      %v1021 = vrot.slane %v1016, %v1020
      %v1024 = vsel %vm472, %v833, 0
      %v1027 = vsel %vm472, %v834, 0
      %v1030 = vsel %vm472, %v835, 0
      %v1033 = vsel %vm472, %v836, 0
      %v1036 = vsel %vm472, %v837, 0
      %v1039 = vsel %vm472, %v838, 0
      %v1042 = vsel %vm472, %v839, 0
      %v1045 = vsel %vm472, %v840, 0
      %v1048 = vsel %vm472, %v841, 0
      %v1051 = vsel %vm472, %v842, 0
      %v1054 = vsel %vm472, %v843, 0
      %1056 = vmatprep.subr.mxu0 0.0
      %1057 = vmatpush1.msra.mxu0 0.0
      %1058 = vmatprep.subr.mxu0 0.0
      %1059 = vmatpush1.msra.mxu0 0.0
      %1060 = vmatprep.subr.mxu0 0.0
      %1061 = vmatpush1.msra.mxu0 0.0
      %1062 = vmatprep.subr.mxu0 0.0
      %1063 = vmatpush1.msra.mxu0 0.0
      %1064 = vmatprep.subr.mxu0 0.0
      %1065 = vmatpush1.msra.mxu0 0.0
      %1066 = vmatprep.subr.mxu0 0.0
      %1067 = vmatpush1.msra.mxu0 0.0
      %1068 = vmatprep.subr.mxu0 0.0
      %1069 = vmatpush1.msra.mxu0 0.0
      %1070 = vmatprep.subr.mxu0 0.0
      %1071 = vmatpush1.msra.mxu0 0.0
      %1072 = vmatprep.subr.mxu0 0.0
      %1073 = vmatpush1.msra.mxu0 0.0
      %1074 = vmatprep.subr.mxu0 0.0
      %1075 = vmatpush1.msra.mxu0 0.0
      %1076 = vmatprep.subr.mxu0 0.0
      %1077 = vmatpush1.msra.mxu0 %v1015
      %1078 = vmatprep.subr.mxu0 0.0
      %1079 = vmatpush1.msra.mxu0 %v1014
      %1080 = vmatprep.subr.mxu0 0.0
      %1081 = vmatpush1.msra.mxu0 %v1013
      %1082 = vmatprep.subr.mxu0 0.0
      %1083 = vmatpush1.msra.mxu0 %v1012
      %1084 = vmatprep.subr.mxu0 0.0
      %1085 = vmatpush1.msra.mxu0 %v1011
      %1086 = vmatprep.subr.mxu0 0.0
      %1087 = vmatpush1.msra.mxu0 %v1010
      %1088 = vmatprep.subr.mxu0 0.0
      %1089 = vmatpush2.msra.mxu0 0.0
      %1090 = vmatprep.subr.mxu0 0.0
      %1091 = vmatpush2.msra.mxu0 0.0
      %1092 = vmatprep.subr.mxu0 0.0
      %1093 = vmatpush2.msra.mxu0 0.0
      %1094 = vmatprep.subr.mxu0 0.0
      %1095 = vmatpush2.msra.mxu0 0.0
      %1096 = vmatprep.subr.mxu0 0.0
      %1097 = vmatpush2.msra.mxu0 0.0
      %1098 = vmatprep.subr.mxu0 0.0
      %1099 = vmatpush2.msra.mxu0 0.0
      %1100 = vmatprep.subr.mxu0 0.0
      %1101 = vmatpush2.msra.mxu0 0.0
      %1102 = vmatprep.subr.mxu0 0.0
      %1103 = vmatpush2.msra.mxu0 0.0
      %1104 = vmatprep.subr.mxu0 0.0
      %1105 = vmatpush2.msra.mxu0 0.0
      %1106 = vmatprep.subr.mxu0 0.0
      %1107 = vmatpush2.msra.mxu0 0.0
      %1108 = vmatprep.subr.mxu0 0.0
      %1109 = vmatpush2.msra.mxu0 0.0
      %1110 = vmatprep.subr.mxu0 0.0
      %1111 = vmatpush2.msra.mxu0 0.0
      %1112 = vmatprep.subr.mxu0 0.0
      %1113 = vmatpush2.msra.mxu0 0.0
      %1114 = vmatprep.subr.mxu0 0.0
      %1115 = vmatpush2.msra.mxu0 0.0
      %1116 = vmatprep.subr.mxu0 0.0
      %1117 = vmatpush2.msra.mxu0 0.0
      %1118 = vmatprep.subr.mxu0 0.0
      %1119 = vmatpush2.msra.mxu0 0.0
      %1120 = vmatprep.mubr.f32.mxu0 0.0
      %1121 = vmatmul.mubr.f32.gmra.mxu0 %v1024
      %v1122 = vpop.f32.mrf.mxu0
      %v1123 = vadd.f32 %v1021, %v1122
      %v1124 = vpop.f32.mrf.mxu0
      %1125 = vmatprep.mubr.f32.mxu0 0.0
      %1126 = vmatmul.mubr.f32.gmra.mxu0 %v1027
      %v1127 = vpop.f32.mrf.mxu0
      %v1128 = vadd.f32 %v1021, %v1127
      %v1129 = vpop.f32.mrf.mxu0
      %1130 = vmatprep.mubr.f32.mxu0 0.0
      %1131 = vmatmul.mubr.f32.gmra.mxu0 %v1030
      %v1132 = vpop.f32.mrf.mxu0
      %v1133 = vadd.f32 %v1021, %v1132
      %v1134 = vpop.f32.mrf.mxu0
      %1135 = vmatprep.mubr.f32.mxu0 0.0
      %1136 = vmatmul.mubr.f32.gmra.mxu0 %v1033
      %v1137 = vpop.f32.mrf.mxu0
      %v1138 = vadd.f32 %v1021, %v1137
      %v1139 = vpop.f32.mrf.mxu0
      %1140 = vmatprep.mubr.f32.mxu0 0.0
      %1141 = vmatmul.mubr.f32.gmra.mxu0 %v1036
      %v1142 = vpop.f32.mrf.mxu0
      %v1143 = vadd.f32 %v1021, %v1142
      %v1144 = vpop.f32.mrf.mxu0
      %1145 = vmatprep.mubr.f32.mxu0 0.0
      %1146 = vmatmul.mubr.f32.gmra.mxu0 %v1039
      %v1147 = vpop.f32.mrf.mxu0
      %v1148 = vadd.f32 %v1021, %v1147
      %v1149 = vpop.f32.mrf.mxu0
      %1150 = vmatprep.mubr.f32.mxu0 0.0
      %1151 = vmatmul.mubr.f32.gmra.mxu0 %v1042
      %v1152 = vpop.f32.mrf.mxu0
      %v1153 = vadd.f32 %v1021, %v1152
      %v1154 = vpop.f32.mrf.mxu0
      %1155 = vmatprep.mubr.f32.mxu0 0.0
      %1156 = vmatmul.mubr.f32.gmra.mxu0 %v1045
      %v1157 = vpop.f32.mrf.mxu0
      %v1158 = vadd.f32 %v1021, %v1157
      %v1159 = vpop.f32.mrf.mxu0
      %1160 = vmatprep.mubr.f32.mxu0 0.0
      %1161 = vmatmul.mubr.f32.gmra.mxu0 %v1048
      %v1162 = vpop.f32.mrf.mxu0
      %v1163 = vadd.f32 %v1021, %v1162
      %v1164 = vpop.f32.mrf.mxu0
      %1165 = vmatprep.mubr.f32.mxu0 0.0
      %1166 = vmatmul.mubr.f32.gmra.mxu0 %v1051
      %v1167 = vpop.f32.mrf.mxu0
      %v1168 = vadd.f32 %v1021, %v1167
      %v1169 = vpop.f32.mrf.mxu0
      %1170 = vmatprep.mubr.f32.mxu0 0.0
      %1171 = vmatmul.mubr.f32.gmra.mxu0 %v1054
      %v1172 = vpop.f32.mrf.mxu0
      %v1173 = vadd.f32 %v1021, %v1172
      %v1174 = vpop.f32.mrf.mxu0
      %1175 = vdwg.mxu0
      %v1176 = vmul.f32 %v957, 0.35355338
      %v1177 = vmul.f32 %v962, 0.35355338
      %v1178 = vmul.f32 %v967, 0.35355338
      %v1179 = vmul.f32 %v972, 0.35355338
      %v1180 = vmul.f32 %v977, 0.35355338
      %v1181 = vmul.f32 %v982, 0.35355338
      %v1182 = vmul.f32 %v987, 0.35355338
      %v1183 = vmul.f32 %v992, 0.35355338
      %v1184 = vmul.f32 %v997, 0.35355338
      %v1185 = vmul.f32 %v1002, 0.35355338
      %v1186 = vmul.f32 %v1007, 0.35355338
      %vm1187 = vcmask 64512
      %v1189 = vsel %vm1187, %v1176, 0
      %v1192 = vsel %vm1187, %v1177, 0
      %v1195 = vsel %vm1187, %v1178, 0
      %v1198 = vsel %vm1187, %v1179, 0
      %v1201 = vsel %vm1187, %v1180, 0
      %v1204 = vsel %vm1187, %v1181, 0
      %v1207 = vsel %vm1187, %v1182, 0
      %v1210 = vsel %vm1187, %v1183, 0
      %v1213 = vsel %vm1187, %v1184, 0
      %v1216 = vsel %vm1187, %v1185, 0
      %v1219 = vsel %vm1187, %v1186, 0
      %v1222 = vsel %vm1187, %v1123, 0
      %v1225 = vsel %vm1187, %v1128, 0
      %v1228 = vsel %vm1187, %v1133, 0
      %v1231 = vsel %vm1187, %v1138, 0
      %v1234 = vsel %vm1187, %v1143, 0
      %v1237 = vsel %vm1187, %v1148, 0
      %v1240 = vsel %vm1187, %v1153, 0
      %v1243 = vsel %vm1187, %v1158, 0
      %v1246 = vsel %vm1187, %v1163, 0
      %v1249 = vsel %vm1187, %v1168, 0
      %v1252 = vsel %vm1187, %v1173, 0
      %1254 = vmatprep.subr.mxu0 0.0
      %1255 = vmatpush1.xpose.msra.mxu0 0.0
      %1256 = vmatprep.subr.mxu0 0.0
      %1257 = vmatpush1.xpose.msra.mxu0 0.0
      %1258 = vmatprep.subr.mxu0 0.0
      %1259 = vmatpush1.xpose.msra.mxu0 0.0
      %1260 = vmatprep.subr.mxu0 0.0
      %1261 = vmatpush1.xpose.msra.mxu0 0.0
      %1262 = vmatprep.subr.mxu0 0.0
      %1263 = vmatpush1.xpose.msra.mxu0 0.0
      %1264 = vmatprep.subr.mxu0 0.0
      %1265 = vmatpush1.xpose.msra.mxu0 %v1252
      %1266 = vmatprep.subr.mxu0 0.0
      %1267 = vmatpush1.xpose.msra.mxu0 %v1249
      %1268 = vmatprep.subr.mxu0 0.0
      %1269 = vmatpush1.xpose.msra.mxu0 %v1246
      %1270 = vmatprep.subr.mxu0 0.0
      %1271 = vmatpush1.xpose.msra.mxu0 %v1243
      %1272 = vmatprep.subr.mxu0 0.0
      %1273 = vmatpush1.xpose.msra.mxu0 %v1240
      %1274 = vmatprep.subr.mxu0 0.0
      %1275 = vmatpush1.xpose.msra.mxu0 %v1237
      %1276 = vmatprep.subr.mxu0 0.0
      %1277 = vmatpush1.xpose.msra.mxu0 %v1234
      %1278 = vmatprep.subr.mxu0 0.0
      %1279 = vmatpush1.xpose.msra.mxu0 %v1231
      %1280 = vmatprep.subr.mxu0 0.0
      %1281 = vmatpush1.xpose.msra.mxu0 %v1228
      %1282 = vmatprep.subr.mxu0 0.0
      %1283 = vmatpush1.xpose.msra.mxu0 %v1225
      %1284 = vmatprep.subr.mxu0 0.0
      %1285 = vmatpush1.xpose.msra.mxu0 %v1222
      %1286 = vmatprep.subr.mxu0 0.0
      %1287 = vmatpush2.xpose.msra.mxu0 0.0
      %1288 = vmatprep.subr.mxu0 0.0
      %1289 = vmatpush2.xpose.msra.mxu0 0.0
      %1290 = vmatprep.subr.mxu0 0.0
      %1291 = vmatpush2.xpose.msra.mxu0 0.0
      %1292 = vmatprep.subr.mxu0 0.0
      %1293 = vmatpush2.xpose.msra.mxu0 0.0
      %1294 = vmatprep.subr.mxu0 0.0
      %1295 = vmatpush2.xpose.msra.mxu0 0.0
      %1296 = vmatprep.subr.mxu0 0.0
      %1297 = vmatpush2.xpose.msra.mxu0 0.0
      %1298 = vmatprep.subr.mxu0 0.0
      %1299 = vmatpush2.xpose.msra.mxu0 0.0
      %1300 = vmatprep.subr.mxu0 0.0
      %1301 = vmatpush2.xpose.msra.mxu0 0.0
      %1302 = vmatprep.subr.mxu0 0.0
      %1303 = vmatpush2.xpose.msra.mxu0 0.0
      %1304 = vmatprep.subr.mxu0 0.0
      %1305 = vmatpush2.xpose.msra.mxu0 0.0
      %1306 = vmatprep.subr.mxu0 0.0
      %1307 = vmatpush2.xpose.msra.mxu0 0.0
      %1308 = vmatprep.subr.mxu0 0.0
      %1309 = vmatpush2.xpose.msra.mxu0 0.0
      %1310 = vmatprep.subr.mxu0 0.0
      %1311 = vmatpush2.xpose.msra.mxu0 0.0
      %1312 = vmatprep.subr.mxu0 0.0
      %1313 = vmatpush2.xpose.msra.mxu0 0.0
      %1314 = vmatprep.subr.mxu0 0.0
      %1315 = vmatpush2.xpose.msra.mxu0 0.0
      %1316 = vmatprep.subr.mxu0 0.0
      %1317 = vmatpush2.xpose.msra.mxu0 0.0
      %1318 = vmatprep.mubr.f32.mxu0 0.0
      %1319 = vmatmul.mubr.f32.gmra.mxu0 %v1189
      %v1320 = vpop.f32.mrf.mxu0
      %v1321 = vadd.f32 0.0, %v1320
      %v1322 = vpop.f32.mrf.mxu0
      %1323 = vmatprep.mubr.f32.mxu0 0.0
      %1324 = vmatmul.mubr.f32.gmra.mxu0 %v1192
      %v1325 = vpop.f32.mrf.mxu0
      %v1326 = vadd.f32 0.0, %v1325
      %v1327 = vpop.f32.mrf.mxu0
      %1328 = vmatprep.mubr.f32.mxu0 0.0
      %1329 = vmatmul.mubr.f32.gmra.mxu0 %v1195
      %v1330 = vpop.f32.mrf.mxu0
      %v1331 = vadd.f32 0.0, %v1330
      %v1332 = vpop.f32.mrf.mxu0
      %1333 = vmatprep.mubr.f32.mxu0 0.0
      %1334 = vmatmul.mubr.f32.gmra.mxu0 %v1198
      %v1335 = vpop.f32.mrf.mxu0
      %v1336 = vadd.f32 0.0, %v1335
      %v1337 = vpop.f32.mrf.mxu0
      %1338 = vmatprep.mubr.f32.mxu0 0.0
      %1339 = vmatmul.mubr.f32.gmra.mxu0 %v1201
      %v1340 = vpop.f32.mrf.mxu0
      %v1341 = vadd.f32 0.0, %v1340
      %v1342 = vpop.f32.mrf.mxu0
      %1343 = vmatprep.mubr.f32.mxu0 0.0
      %1344 = vmatmul.mubr.f32.gmra.mxu0 %v1204
      %v1345 = vpop.f32.mrf.mxu0
      %v1346 = vadd.f32 0.0, %v1345
      %v1347 = vpop.f32.mrf.mxu0
      %1348 = vmatprep.mubr.f32.mxu0 0.0
      %1349 = vmatmul.mubr.f32.gmra.mxu0 %v1207
      %v1350 = vpop.f32.mrf.mxu0
      %v1351 = vadd.f32 0.0, %v1350
      %v1352 = vpop.f32.mrf.mxu0
      %1353 = vmatprep.mubr.f32.mxu0 0.0
      %1354 = vmatmul.mubr.f32.gmra.mxu0 %v1210
      %v1355 = vpop.f32.mrf.mxu0
      %v1356 = vadd.f32 0.0, %v1355
      %v1357 = vpop.f32.mrf.mxu0
      %1358 = vmatprep.mubr.f32.mxu0 0.0
      %1359 = vmatmul.mubr.f32.gmra.mxu0 %v1213
      %v1360 = vpop.f32.mrf.mxu0
      %v1361 = vadd.f32 0.0, %v1360
      %v1362 = vpop.f32.mrf.mxu0
      %1363 = vmatprep.mubr.f32.mxu0 0.0
      %1364 = vmatmul.mubr.f32.gmra.mxu0 %v1216
      %v1365 = vpop.f32.mrf.mxu0
      %v1366 = vadd.f32 0.0, %v1365
      %v1367 = vpop.f32.mrf.mxu0
      %1368 = vmatprep.mubr.f32.mxu0 0.0
      %1369 = vmatmul.mubr.f32.gmra.mxu0 %v1219
      %v1370 = vpop.f32.mrf.mxu0
      %v1371 = vadd.f32 0.0, %v1370
      %v1372 = vpop.f32.mrf.mxu0
      %1373 = vdwg.mxu0
      %vm1374 = vcmask 687104
      %v1375 = vsel %vm1374, %v1321, -inf
      %1376 = vmax.xlane.f32.xlu0 %v1375
      %v1377 = vpop.xlane.xlu0 %1376
      %v1378 = vsel %vm1374, %v1326, -inf
      %1379 = vmax.xlane.f32.xlu0 %v1378
      %v1380 = vpop.xlane.xlu0 %1379
      %v1381 = vsel %vm1374, %v1331, -inf
      %1382 = vmax.xlane.f32.xlu0 %v1381
      %v1383 = vpop.xlane.xlu0 %1382
      %v1384 = vsel %vm1374, %v1336, -inf
      %1385 = vmax.xlane.f32.xlu0 %v1384
      %v1386 = vpop.xlane.xlu0 %1385
      %v1387 = vsel %vm1374, %v1341, -inf
      %1388 = vmax.xlane.f32.xlu0 %v1387
      %v1389 = vpop.xlane.xlu0 %1388
      %v1390 = vsel %vm1374, %v1346, -inf
      %1391 = vmax.xlane.f32.xlu0 %v1390
      %v1392 = vpop.xlane.xlu0 %1391
      %v1393 = vsel %vm1374, %v1351, -inf
      %1394 = vmax.xlane.f32.xlu0 %v1393
      %v1395 = vpop.xlane.xlu0 %1394
      %v1396 = vsel %vm1374, %v1356, -inf
      %1397 = vmax.xlane.f32.xlu0 %v1396
      %v1398 = vpop.xlane.xlu0 %1397
      %v1399 = vsel %vm1374, %v1361, -inf
      %1400 = vmax.xlane.f32.xlu0 %v1399
      %v1401 = vpop.xlane.xlu0 %1400
      %v1402 = vsel %vm1374, %v1366, -inf
      %1403 = vmax.xlane.f32.xlu0 %v1402
      %v1404 = vpop.xlane.xlu0 %1403
      %vm1405 = vcmask 683008
      %v1406 = vsel %vm1405, %v1371, -inf
      %1407 = vmax.xlane.f32.xlu0 %v1406
      %v1408 = vpop.xlane.xlu0 %1407
      %v1409 = vsub.f32 %v1321, %v1377
      %v1410 = vsub.f32 %v1326, %v1380
      %v1411 = vsub.f32 %v1331, %v1383
      %v1412 = vsub.f32 %v1336, %v1386
      %v1413 = vsub.f32 %v1341, %v1389
      %v1414 = vsub.f32 %v1346, %v1392
      %v1415 = vsub.f32 %v1351, %v1395
      %v1416 = vsub.f32 %v1356, %v1398
      %v1417 = vsub.f32 %v1361, %v1401
      %v1418 = vsub.f32 %v1366, %v1404
      %v1419 = vsub.f32 %v1371, %v1408
      %v1420 = vmul.f32 %v1409, 1.442695
      %v1421 = vpow.pop %v1420
      %v1422 = vmul.f32 %v1410, 1.442695
      %v1423 = vpow.pop %v1422
      %v1424 = vmul.f32 %v1411, 1.442695
      %v1425 = vpow.pop %v1424
      %v1426 = vmul.f32 %v1412, 1.442695
      %v1427 = vpow.pop %v1426
      %v1428 = vmul.f32 %v1413, 1.442695
      %v1429 = vpow.pop %v1428
      %v1430 = vmul.f32 %v1414, 1.442695
      %v1431 = vpow.pop %v1430
      %v1432 = vmul.f32 %v1415, 1.442695
      %v1433 = vpow.pop %v1432
      %v1434 = vmul.f32 %v1416, 1.442695
      %v1435 = vpow.pop %v1434
      %v1436 = vmul.f32 %v1417, 1.442695
      %v1437 = vpow.pop %v1436
      %v1438 = vmul.f32 %v1418, 1.442695
      %v1439 = vpow.pop %v1438
      %v1440 = vmul.f32 %v1419, 1.442695
      %v1441 = vpow.pop %v1440
      %v1442 = vsel %vm1374, %v1421, 0.0
      %1443 = vadd.xlane.f32.xlu0 %v1442
      %v1444 = vpop.xlane.xlu0 %1443
      %v1445 = vsel %vm1374, %v1423, 0.0
      %1446 = vadd.xlane.f32.xlu0 %v1445
      %v1447 = vpop.xlane.xlu0 %1446
      %v1448 = vsel %vm1374, %v1425, 0.0
      %1449 = vadd.xlane.f32.xlu0 %v1448
      %v1450 = vpop.xlane.xlu0 %1449
      %v1451 = vsel %vm1374, %v1427, 0.0
      %1452 = vadd.xlane.f32.xlu0 %v1451
      %v1453 = vpop.xlane.xlu0 %1452
      %v1454 = vsel %vm1374, %v1429, 0.0
      %1455 = vadd.xlane.f32.xlu0 %v1454
      %v1456 = vpop.xlane.xlu0 %1455
      %v1457 = vsel %vm1374, %v1431, 0.0
      %1458 = vadd.xlane.f32.xlu0 %v1457
      %v1459 = vpop.xlane.xlu0 %1458
      %v1460 = vsel %vm1374, %v1433, 0.0
      %1461 = vadd.xlane.f32.xlu0 %v1460
      %v1462 = vpop.xlane.xlu0 %1461
      %v1463 = vsel %vm1374, %v1435, 0.0
      %1464 = vadd.xlane.f32.xlu0 %v1463
      %v1465 = vpop.xlane.xlu0 %1464
      %v1466 = vsel %vm1374, %v1437, 0.0
      %1467 = vadd.xlane.f32.xlu0 %v1466
      %v1468 = vpop.xlane.xlu0 %1467
      %v1469 = vsel %vm1374, %v1439, 0.0
      %1470 = vadd.xlane.f32.xlu0 %v1469
      %v1471 = vpop.xlane.xlu0 %1470
      %v1472 = vsel %vm1405, %v1441, 0.0
      %1473 = vadd.xlane.f32.xlu0 %v1472
      %v1474 = vpop.xlane.xlu0 %1473
      %v1475 = vrcp.pop %v1444
      %v1476 = vrcp.pop %v1447
      %v1477 = vrcp.pop %v1450
      %v1478 = vrcp.pop %v1453
      %v1479 = vrcp.pop %v1456
      %v1480 = vrcp.pop %v1459
      %v1481 = vrcp.pop %v1462
      %v1482 = vrcp.pop %v1465
      %v1483 = vrcp.pop %v1468
      %v1484 = vrcp.pop %v1471
      %v1485 = vrcp.pop %v1474
      %v1486 = vmul.f32 %v1421, %v1475
      %v1487 = vmul.f32 %v1423, %v1476
      %v1488 = vmul.f32 %v1425, %v1477
      %v1489 = vmul.f32 %v1427, %v1478
      %v1490 = vmul.f32 %v1429, %v1479
      %v1491 = vmul.f32 %v1431, %v1480
      %v1492 = vmul.f32 %v1433, %v1481
      %v1493 = vmul.f32 %v1435, %v1482
      %v1494 = vmul.f32 %v1437, %v1483
      %v1495 = vmul.f32 %v1439, %v1484
      %v1496 = vmul.f32 %v1441, %v1485
      %1497 = vrot.lane.b32.xlu0 %v1123, 80
      %v1498 = vpop.permute.xlu0 %1497
      %1499 = vrot.lane.b32.xlu0 %v1128, 80
      %v1500 = vpop.permute.xlu0 %1499
      %1501 = vrot.lane.b32.xlu0 %v1133, 80
      %v1502 = vpop.permute.xlu0 %1501
      %1503 = vrot.lane.b32.xlu0 %v1138, 80
      %v1504 = vpop.permute.xlu0 %1503
      %1505 = vrot.lane.b32.xlu0 %v1143, 80
      %v1506 = vpop.permute.xlu0 %1505
      %1507 = vrot.lane.b32.xlu0 %v1148, 80
      %v1508 = vpop.permute.xlu0 %1507
      %1509 = vrot.lane.b32.xlu0 %v1153, 80
      %v1510 = vpop.permute.xlu0 %1509
      %1511 = vrot.lane.b32.xlu0 %v1158, 80
      %v1512 = vpop.permute.xlu0 %1511
      %1513 = vrot.lane.b32.xlu0 %v1163, 80
      %v1514 = vpop.permute.xlu0 %1513
      %1515 = vrot.lane.b32.xlu0 %v1168, 80
      %v1516 = vpop.permute.xlu0 %1515
      %1517 = vrot.lane.b32.xlu0 %v1173, 80
      %v1518 = vpop.permute.xlu0 %1517
      %v1530 = vsel %vm1374, %v1486, 0
      %v1533 = vsel %vm1374, %v1487, 0
      %v1536 = vsel %vm1374, %v1488, 0
      %v1539 = vsel %vm1374, %v1489, 0
      %v1542 = vsel %vm1374, %v1490, 0
      %v1545 = vsel %vm1374, %v1491, 0
      %v1548 = vsel %vm1374, %v1492, 0
      %v1551 = vsel %vm1374, %v1493, 0
      %v1554 = vsel %vm1374, %v1494, 0
      %v1557 = vsel %vm1374, %v1495, 0
      %v1560 = vsel %vm1374, %v1496, 0
      %vm1562 = vcmask 1043456
      %v1563 = vsel %vm1562, %v1518, 0
      %1565 = vmatprep.subr.mxu0 0.0
      %1566 = vmatpush1.msra.mxu0 0.0
      %1567 = vmatprep.subr.mxu0 0.0
      %1568 = vmatpush1.msra.mxu0 0.0
      %1569 = vmatprep.subr.mxu0 0.0
      %1570 = vmatpush1.msra.mxu0 0.0
      %1571 = vmatprep.subr.mxu0 0.0
      %1572 = vmatpush1.msra.mxu0 0.0
      %1573 = vmatprep.subr.mxu0 0.0
      %1574 = vmatpush1.msra.mxu0 0.0
      %1575 = vmatprep.subr.mxu0 0.0
      %1576 = vmatpush1.msra.mxu0 %v1563
      %1577 = vmatprep.subr.mxu0 0.0
      %1578 = vmatpush1.msra.mxu0 %v1516
      %1579 = vmatprep.subr.mxu0 0.0
      %1580 = vmatpush1.msra.mxu0 %v1514
      %1581 = vmatprep.subr.mxu0 0.0
      %1582 = vmatpush1.msra.mxu0 %v1512
      %1583 = vmatprep.subr.mxu0 0.0
      %1584 = vmatpush1.msra.mxu0 %v1510
      %1585 = vmatprep.subr.mxu0 0.0
      %1586 = vmatpush1.msra.mxu0 %v1508
      %1587 = vmatprep.subr.mxu0 0.0
      %1588 = vmatpush1.msra.mxu0 %v1506
      %1589 = vmatprep.subr.mxu0 0.0
      %1590 = vmatpush1.msra.mxu0 %v1504
      %1591 = vmatprep.subr.mxu0 0.0
      %1592 = vmatpush1.msra.mxu0 %v1502
      %1593 = vmatprep.subr.mxu0 0.0
      %1594 = vmatpush1.msra.mxu0 %v1500
      %1595 = vmatprep.subr.mxu0 0.0
      %1596 = vmatpush1.msra.mxu0 %v1498
      %1597 = vmatprep.subr.mxu0 0.0
      %1598 = vmatpush2.msra.mxu0 0.0
      %1599 = vmatprep.subr.mxu0 0.0
      %1600 = vmatpush2.msra.mxu0 0.0
      %1601 = vmatprep.subr.mxu0 0.0
      %1602 = vmatpush2.msra.mxu0 0.0
      %1603 = vmatprep.subr.mxu0 0.0
      %1604 = vmatpush2.msra.mxu0 0.0
      %1605 = vmatprep.subr.mxu0 0.0
      %1606 = vmatpush2.msra.mxu0 0.0
      %1607 = vmatprep.subr.mxu0 0.0
      %1608 = vmatpush2.msra.mxu0 0.0
      %1609 = vmatprep.subr.mxu0 0.0
      %1610 = vmatpush2.msra.mxu0 0.0
      %1611 = vmatprep.subr.mxu0 0.0
      %1612 = vmatpush2.msra.mxu0 0.0
      %1613 = vmatprep.subr.mxu0 0.0
      %1614 = vmatpush2.msra.mxu0 0.0
      %1615 = vmatprep.subr.mxu0 0.0
      %1616 = vmatpush2.msra.mxu0 0.0
      %1617 = vmatprep.subr.mxu0 0.0
      %1618 = vmatpush2.msra.mxu0 0.0
      %1619 = vmatprep.subr.mxu0 0.0
      %1620 = vmatpush2.msra.mxu0 0.0
      %1621 = vmatprep.subr.mxu0 0.0
      %1622 = vmatpush2.msra.mxu0 0.0
      %1623 = vmatprep.subr.mxu0 0.0
      %1624 = vmatpush2.msra.mxu0 0.0
      %1625 = vmatprep.subr.mxu0 0.0
      %1626 = vmatpush2.msra.mxu0 0.0
      %1627 = vmatprep.subr.mxu0 0.0
      %1628 = vmatpush2.msra.mxu0 0.0
      %1629 = vmatprep.mubr.f32.mxu0 0.0
      %1630 = vmatmul.mubr.f32.gmra.mxu0 %v1530
      %v1631 = vpop.f32.mrf.mxu0
      %v1632 = vadd.f32 0.0, %v1631
      %v1633 = vpop.f32.mrf.mxu0
      %1634 = vmatprep.mubr.f32.mxu0 0.0
      %1635 = vmatmul.mubr.f32.gmra.mxu0 %v1533
      %v1636 = vpop.f32.mrf.mxu0
      %v1637 = vadd.f32 0.0, %v1636
      %v1638 = vpop.f32.mrf.mxu0
      %1639 = vmatprep.mubr.f32.mxu0 0.0
      %1640 = vmatmul.mubr.f32.gmra.mxu0 %v1536
      %v1641 = vpop.f32.mrf.mxu0
      %v1642 = vadd.f32 0.0, %v1641
      %v1643 = vpop.f32.mrf.mxu0
      %1644 = vmatprep.mubr.f32.mxu0 0.0
      %1645 = vmatmul.mubr.f32.gmra.mxu0 %v1539
      %v1646 = vpop.f32.mrf.mxu0
      %v1647 = vadd.f32 0.0, %v1646
      %v1648 = vpop.f32.mrf.mxu0
      %1649 = vmatprep.mubr.f32.mxu0 0.0
      %1650 = vmatmul.mubr.f32.gmra.mxu0 %v1542
      %v1651 = vpop.f32.mrf.mxu0
      %v1652 = vadd.f32 0.0, %v1651
      %v1653 = vpop.f32.mrf.mxu0
      %1654 = vmatprep.mubr.f32.mxu0 0.0
      %1655 = vmatmul.mubr.f32.gmra.mxu0 %v1545
      %v1656 = vpop.f32.mrf.mxu0
      %v1657 = vadd.f32 0.0, %v1656
      %v1658 = vpop.f32.mrf.mxu0
      %1659 = vmatprep.mubr.f32.mxu0 0.0
      %1660 = vmatmul.mubr.f32.gmra.mxu0 %v1548
      %v1661 = vpop.f32.mrf.mxu0
      %v1662 = vadd.f32 0.0, %v1661
      %v1663 = vpop.f32.mrf.mxu0
      %1664 = vmatprep.mubr.f32.mxu0 0.0
      %1665 = vmatmul.mubr.f32.gmra.mxu0 %v1551
      %v1666 = vpop.f32.mrf.mxu0
      %v1667 = vadd.f32 0.0, %v1666
      %v1668 = vpop.f32.mrf.mxu0
      %1669 = vmatprep.mubr.f32.mxu0 0.0
      %1670 = vmatmul.mubr.f32.gmra.mxu0 %v1554
      %v1671 = vpop.f32.mrf.mxu0
      %v1672 = vadd.f32 0.0, %v1671
      %v1673 = vpop.f32.mrf.mxu0
      %1674 = vmatprep.mubr.f32.mxu0 0.0
      %1675 = vmatmul.mubr.f32.gmra.mxu0 %v1557
      %v1676 = vpop.f32.mrf.mxu0
      %v1677 = vadd.f32 0.0, %v1676
      %v1678 = vpop.f32.mrf.mxu0
      %1679 = vmatprep.mubr.f32.mxu0 0.0
      %1680 = vmatmul.mubr.f32.gmra.mxu0 %v1560
      %v1681 = vpop.f32.mrf.mxu0
      %v1682 = vadd.f32 0.0, %v1681
      %v1683 = vpop.f32.mrf.mxu0
      %1684 = vdwg.mxu0
      %v1685 = vld [vmem:[%s10] sm:$0xff]
      %1686 = vrot.lane.b32.xlu0 %v1176, 120
      %v1687 = vpop.permute.xlu0 %1686
      %1688 = vrot.lane.b32.xlu0 %v1177, 120
      %v1689 = vpop.permute.xlu0 %1688
      %1690 = vrot.lane.b32.xlu0 %v1178, 120
      %v1691 = vpop.permute.xlu0 %1690
      %1692 = vrot.lane.b32.xlu0 %v1179, 120
      %v1693 = vpop.permute.xlu0 %1692
      %1694 = vrot.lane.b32.xlu0 %v1180, 120
      %v1695 = vpop.permute.xlu0 %1694
      %1696 = vrot.lane.b32.xlu0 %v1181, 120
      %v1697 = vpop.permute.xlu0 %1696
      %1698 = vrot.lane.b32.xlu0 %v1182, 120
      %v1699 = vpop.permute.xlu0 %1698
      %1700 = vrot.lane.b32.xlu0 %v1183, 120
      %v1701 = vpop.permute.xlu0 %1700
      %1702 = vrot.lane.b32.xlu0 %v1184, 120
      %v1703 = vpop.permute.xlu0 %1702
      %1704 = vrot.lane.b32.xlu0 %v1185, 120
      %v1705 = vpop.permute.xlu0 %1704
      %1706 = vrot.lane.b32.xlu0 %v1186, 120
      %v1707 = vpop.permute.xlu0 %1706
      %1708 = vrot.lane.b32.xlu0 %v1123, 120
      %v1709 = vpop.permute.xlu0 %1708
      %1710 = vrot.lane.b32.xlu0 %v1128, 120
      %v1711 = vpop.permute.xlu0 %1710
      %1712 = vrot.lane.b32.xlu0 %v1133, 120
      %v1713 = vpop.permute.xlu0 %1712
      %1714 = vrot.lane.b32.xlu0 %v1138, 120
      %v1715 = vpop.permute.xlu0 %1714
      %1716 = vrot.lane.b32.xlu0 %v1143, 120
      %v1717 = vpop.permute.xlu0 %1716
      %1718 = vrot.lane.b32.xlu0 %v1148, 120
      %v1719 = vpop.permute.xlu0 %1718
      %1720 = vrot.lane.b32.xlu0 %v1153, 120
      %v1721 = vpop.permute.xlu0 %1720
      %1722 = vrot.lane.b32.xlu0 %v1158, 120
      %v1723 = vpop.permute.xlu0 %1722
      %1724 = vrot.lane.b32.xlu0 %v1163, 120
      %v1725 = vpop.permute.xlu0 %1724
      %1726 = vrot.lane.b32.xlu0 %v1168, 120
      %v1727 = vpop.permute.xlu0 %1726
      %1728 = vrot.lane.b32.xlu0 %v1173, 120
      %v1729 = vpop.permute.xlu0 %1728
      %v1730 = vsel %vm1187, %v1687, 0
      %v1732 = vsel %vm1187, %v1689, 0
      %v1734 = vsel %vm1187, %v1691, 0
      %v1736 = vsel %vm1187, %v1693, 0
      %v1738 = vsel %vm1187, %v1695, 0
      %v1740 = vsel %vm1187, %v1697, 0
      %v1742 = vsel %vm1187, %v1699, 0
      %v1744 = vsel %vm1187, %v1701, 0
      %v1746 = vsel %vm1187, %v1703, 0
      %v1748 = vsel %vm1187, %v1705, 0
      %v1750 = vsel %vm1187, %v1707, 0
      %v1752 = vsel %vm1187, %v1709, 0
      %v1754 = vsel %vm1187, %v1711, 0
      %v1756 = vsel %vm1187, %v1713, 0
      %v1758 = vsel %vm1187, %v1715, 0
      %v1760 = vsel %vm1187, %v1717, 0
      %v1762 = vsel %vm1187, %v1719, 0
      %v1764 = vsel %vm1187, %v1721, 0
      %v1766 = vsel %vm1187, %v1723, 0
      %v1768 = vsel %vm1187, %v1725, 0
      %v1770 = vsel %vm1187, %v1727, 0
      %v1772 = vsel %vm1187, %v1729, 0
      %1774 = vmatprep.subr.mxu0 0.0
      %1775 = vmatpush1.xpose.msra.mxu0 0.0
      %1776 = vmatprep.subr.mxu0 0.0
      %1777 = vmatpush1.xpose.msra.mxu0 0.0
      %1778 = vmatprep.subr.mxu0 0.0
      %1779 = vmatpush1.xpose.msra.mxu0 0.0
      %1780 = vmatprep.subr.mxu0 0.0
      %1781 = vmatpush1.xpose.msra.mxu0 0.0
      %1782 = vmatprep.subr.mxu0 0.0
      %1783 = vmatpush1.xpose.msra.mxu0 0.0
      %1784 = vmatprep.subr.mxu0 0.0
      %1785 = vmatpush1.xpose.msra.mxu0 %v1772
      %1786 = vmatprep.subr.mxu0 0.0
      %1787 = vmatpush1.xpose.msra.mxu0 %v1770
      %1788 = vmatprep.subr.mxu0 0.0
      %1789 = vmatpush1.xpose.msra.mxu0 %v1768
      %1790 = vmatprep.subr.mxu0 0.0
      %1791 = vmatpush1.xpose.msra.mxu0 %v1766
      %1792 = vmatprep.subr.mxu0 0.0
      %1793 = vmatpush1.xpose.msra.mxu0 %v1764
      %1794 = vmatprep.subr.mxu0 0.0
      %1795 = vmatpush1.xpose.msra.mxu0 %v1762
      %1796 = vmatprep.subr.mxu0 0.0
      %1797 = vmatpush1.xpose.msra.mxu0 %v1760
      %1798 = vmatprep.subr.mxu0 0.0
      %1799 = vmatpush1.xpose.msra.mxu0 %v1758
      %1800 = vmatprep.subr.mxu0 0.0
      %1801 = vmatpush1.xpose.msra.mxu0 %v1756
      %1802 = vmatprep.subr.mxu0 0.0
      %1803 = vmatpush1.xpose.msra.mxu0 %v1754
      %1804 = vmatprep.subr.mxu0 0.0
      %1805 = vmatpush1.xpose.msra.mxu0 %v1752
      %1806 = vmatprep.subr.mxu0 0.0
      %1807 = vmatpush2.xpose.msra.mxu0 0.0
      %1808 = vmatprep.subr.mxu0 0.0
      %1809 = vmatpush2.xpose.msra.mxu0 0.0
      %1810 = vmatprep.subr.mxu0 0.0
      %1811 = vmatpush2.xpose.msra.mxu0 0.0
      %1812 = vmatprep.subr.mxu0 0.0
      %1813 = vmatpush2.xpose.msra.mxu0 0.0
      %1814 = vmatprep.subr.mxu0 0.0
      %1815 = vmatpush2.xpose.msra.mxu0 0.0
      %1816 = vmatprep.subr.mxu0 0.0
      %1817 = vmatpush2.xpose.msra.mxu0 0.0
      %1818 = vmatprep.subr.mxu0 0.0
      %1819 = vmatpush2.xpose.msra.mxu0 0.0
      %1820 = vmatprep.subr.mxu0 0.0
      %1821 = vmatpush2.xpose.msra.mxu0 0.0
      %1822 = vmatprep.subr.mxu0 0.0
      %1823 = vmatpush2.xpose.msra.mxu0 0.0
      %1824 = vmatprep.subr.mxu0 0.0
      %1825 = vmatpush2.xpose.msra.mxu0 0.0
      %1826 = vmatprep.subr.mxu0 0.0
      %1827 = vmatpush2.xpose.msra.mxu0 0.0
      %1828 = vmatprep.subr.mxu0 0.0
      %1829 = vmatpush2.xpose.msra.mxu0 0.0
      %1830 = vmatprep.subr.mxu0 0.0
      %1831 = vmatpush2.xpose.msra.mxu0 0.0
      %1832 = vmatprep.subr.mxu0 0.0
      %1833 = vmatpush2.xpose.msra.mxu0 0.0
      %1834 = vmatprep.subr.mxu0 0.0
      %1835 = vmatpush2.xpose.msra.mxu0 0.0
      %1836 = vmatprep.subr.mxu0 0.0
      %1837 = vmatpush2.xpose.msra.mxu0 0.0
      %1838 = vmatprep.mubr.f32.mxu0 0.0
      %1839 = vmatmul.mubr.f32.gmra.mxu0 %v1730
      %v1840 = vpop.f32.mrf.mxu0
      %v1841 = vadd.f32 0.0, %v1840
      %v1842 = vpop.f32.mrf.mxu0
      %1843 = vmatprep.mubr.f32.mxu0 0.0
      %1844 = vmatmul.mubr.f32.gmra.mxu0 %v1732
      %v1845 = vpop.f32.mrf.mxu0
      %v1846 = vadd.f32 0.0, %v1845
      %v1847 = vpop.f32.mrf.mxu0
      %1848 = vmatprep.mubr.f32.mxu0 0.0
      %1849 = vmatmul.mubr.f32.gmra.mxu0 %v1734
      %v1850 = vpop.f32.mrf.mxu0
      %v1851 = vadd.f32 0.0, %v1850
      %v1852 = vpop.f32.mrf.mxu0
      %1853 = vmatprep.mubr.f32.mxu0 0.0
      %1854 = vmatmul.mubr.f32.gmra.mxu0 %v1736
      %v1855 = vpop.f32.mrf.mxu0
      %v1856 = vadd.f32 0.0, %v1855
      %v1857 = vpop.f32.mrf.mxu0
      %1858 = vmatprep.mubr.f32.mxu0 0.0
      %1859 = vmatmul.mubr.f32.gmra.mxu0 %v1738
      %v1860 = vpop.f32.mrf.mxu0
      %v1861 = vadd.f32 0.0, %v1860
      %v1862 = vpop.f32.mrf.mxu0
      %1863 = vmatprep.mubr.f32.mxu0 0.0
      %1864 = vmatmul.mubr.f32.gmra.mxu0 %v1740
      %v1865 = vpop.f32.mrf.mxu0
      %v1866 = vadd.f32 0.0, %v1865
      %v1867 = vpop.f32.mrf.mxu0
      %1868 = vmatprep.mubr.f32.mxu0 0.0
      %1869 = vmatmul.mubr.f32.gmra.mxu0 %v1742
      %v1870 = vpop.f32.mrf.mxu0
      %v1871 = vadd.f32 0.0, %v1870
      %v1872 = vpop.f32.mrf.mxu0
      %1873 = vmatprep.mubr.f32.mxu0 0.0
      %1874 = vmatmul.mubr.f32.gmra.mxu0 %v1744
      %v1875 = vpop.f32.mrf.mxu0
      %v1876 = vadd.f32 0.0, %v1875
      %v1877 = vpop.f32.mrf.mxu0
      %1878 = vmatprep.mubr.f32.mxu0 0.0
      %1879 = vmatmul.mubr.f32.gmra.mxu0 %v1746
      %v1880 = vpop.f32.mrf.mxu0
      %v1881 = vadd.f32 0.0, %v1880
      %v1882 = vpop.f32.mrf.mxu0
      %1883 = vmatprep.mubr.f32.mxu0 0.0
      %1884 = vmatmul.mubr.f32.gmra.mxu0 %v1748
      %v1885 = vpop.f32.mrf.mxu0
      %v1886 = vadd.f32 0.0, %v1885
      %v1887 = vpop.f32.mrf.mxu0
      %1888 = vmatprep.mubr.f32.mxu0 0.0
      %1889 = vmatmul.mubr.f32.gmra.mxu0 %v1750
      %v1890 = vpop.f32.mrf.mxu0
      %v1891 = vadd.f32 0.0, %v1890
      %v1892 = vpop.f32.mrf.mxu0
      %1893 = vdwg.mxu0
      %v1894 = vsel %vm1374, %v1841, -inf
      %1895 = vmax.xlane.f32.xlu0 %v1894
      %v1896 = vpop.xlane.xlu0 %1895
      %v1897 = vsel %vm1374, %v1846, -inf
      %1898 = vmax.xlane.f32.xlu0 %v1897
      %v1899 = vpop.xlane.xlu0 %1898
      %v1900 = vsel %vm1374, %v1851, -inf
      %1901 = vmax.xlane.f32.xlu0 %v1900
      %v1902 = vpop.xlane.xlu0 %1901
      %v1903 = vsel %vm1374, %v1856, -inf
      %1904 = vmax.xlane.f32.xlu0 %v1903
      %v1905 = vpop.xlane.xlu0 %1904
      %v1906 = vsel %vm1374, %v1861, -inf
      %1907 = vmax.xlane.f32.xlu0 %v1906
      %v1908 = vpop.xlane.xlu0 %1907
      %v1909 = vsel %vm1374, %v1866, -inf
      %1910 = vmax.xlane.f32.xlu0 %v1909
      %v1911 = vpop.xlane.xlu0 %1910
      %v1912 = vsel %vm1374, %v1871, -inf
      %1913 = vmax.xlane.f32.xlu0 %v1912
      %v1914 = vpop.xlane.xlu0 %1913
      %v1915 = vsel %vm1374, %v1876, -inf
      %1916 = vmax.xlane.f32.xlu0 %v1915
      %v1917 = vpop.xlane.xlu0 %1916
      %v1918 = vsel %vm1374, %v1881, -inf
      %1919 = vmax.xlane.f32.xlu0 %v1918
      %v1920 = vpop.xlane.xlu0 %1919
      %v1921 = vsel %vm1374, %v1886, -inf
      %1922 = vmax.xlane.f32.xlu0 %v1921
      %v1923 = vpop.xlane.xlu0 %1922
      %v1924 = vsel %vm1405, %v1891, -inf
      %1925 = vmax.xlane.f32.xlu0 %v1924
      %v1926 = vpop.xlane.xlu0 %1925
      %v1927 = vsub.f32 %v1841, %v1896
      %v1928 = vsub.f32 %v1846, %v1899
      %v1929 = vsub.f32 %v1851, %v1902
      %v1930 = vsub.f32 %v1856, %v1905
      %v1931 = vsub.f32 %v1861, %v1908
      %v1932 = vsub.f32 %v1866, %v1911
      %v1933 = vsub.f32 %v1871, %v1914
      %v1934 = vsub.f32 %v1876, %v1917
      %v1935 = vsub.f32 %v1881, %v1920
      %v1936 = vsub.f32 %v1886, %v1923
      %v1937 = vsub.f32 %v1891, %v1926
      %v1938 = vmul.f32 %v1927, 1.442695
      %v1939 = vpow.pop %v1938
      %v1940 = vmul.f32 %v1928, 1.442695
      %v1941 = vpow.pop %v1940
      %v1942 = vmul.f32 %v1929, 1.442695
      %v1943 = vpow.pop %v1942
      %v1944 = vmul.f32 %v1930, 1.442695
      %v1945 = vpow.pop %v1944
      %v1946 = vmul.f32 %v1931, 1.442695
      %v1947 = vpow.pop %v1946
      %v1948 = vmul.f32 %v1932, 1.442695
      %v1949 = vpow.pop %v1948
      %v1950 = vmul.f32 %v1933, 1.442695
      %v1951 = vpow.pop %v1950
      %v1952 = vmul.f32 %v1934, 1.442695
      %v1953 = vpow.pop %v1952
      %v1954 = vmul.f32 %v1935, 1.442695
      %v1955 = vpow.pop %v1954
      %v1956 = vmul.f32 %v1936, 1.442695
      %v1957 = vpow.pop %v1956
      %v1958 = vmul.f32 %v1937, 1.442695
      %v1959 = vpow.pop %v1958
      %v1960 = vsel %vm1374, %v1939, 0.0
      %1961 = vadd.xlane.f32.xlu0 %v1960
      %v1962 = vpop.xlane.xlu0 %1961
      %v1963 = vsel %vm1374, %v1941, 0.0
      %1964 = vadd.xlane.f32.xlu0 %v1963
      %v1965 = vpop.xlane.xlu0 %1964
      %v1966 = vsel %vm1374, %v1943, 0.0
      %1967 = vadd.xlane.f32.xlu0 %v1966
      %v1968 = vpop.xlane.xlu0 %1967
      %v1969 = vsel %vm1374, %v1945, 0.0
      %1970 = vadd.xlane.f32.xlu0 %v1969
      %v1971 = vpop.xlane.xlu0 %1970
      %v1972 = vsel %vm1374, %v1947, 0.0
      %1973 = vadd.xlane.f32.xlu0 %v1972
      %v1974 = vpop.xlane.xlu0 %1973
      %v1975 = vsel %vm1374, %v1949, 0.0
      %1976 = vadd.xlane.f32.xlu0 %v1975
      %v1977 = vpop.xlane.xlu0 %1976
      %v1978 = vsel %vm1374, %v1951, 0.0
      %1979 = vadd.xlane.f32.xlu0 %v1978
      %v1980 = vpop.xlane.xlu0 %1979
      %v1981 = vsel %vm1374, %v1953, 0.0
      %1982 = vadd.xlane.f32.xlu0 %v1981
      %v1983 = vpop.xlane.xlu0 %1982
      %v1984 = vsel %vm1374, %v1955, 0.0
      %1985 = vadd.xlane.f32.xlu0 %v1984
      %v1986 = vpop.xlane.xlu0 %1985
      %v1987 = vsel %vm1374, %v1957, 0.0
      %1988 = vadd.xlane.f32.xlu0 %v1987
      %v1989 = vpop.xlane.xlu0 %1988
      %v1990 = vsel %vm1405, %v1959, 0.0
      %1991 = vadd.xlane.f32.xlu0 %v1990
      %v1992 = vpop.xlane.xlu0 %1991
      %v1993 = vrcp.pop %v1962
      %v1994 = vrcp.pop %v1965
      %v1995 = vrcp.pop %v1968
      %v1996 = vrcp.pop %v1971
      %v1997 = vrcp.pop %v1974
      %v1998 = vrcp.pop %v1977
      %v1999 = vrcp.pop %v1980
      %v2000 = vrcp.pop %v1983
      %v2001 = vrcp.pop %v1986
      %v2002 = vrcp.pop %v1989
      %v2003 = vrcp.pop %v1992
      %v2004 = vmul.f32 %v1939, %v1993
      %v2005 = vmul.f32 %v1941, %v1994
      %v2006 = vmul.f32 %v1943, %v1995
      %v2007 = vmul.f32 %v1945, %v1996
      %v2008 = vmul.f32 %v1947, %v1997
      %v2009 = vmul.f32 %v1949, %v1998
      %v2010 = vmul.f32 %v1951, %v1999
      %v2011 = vmul.f32 %v1953, %v2000
      %v2012 = vmul.f32 %v1955, %v2001
      %v2013 = vmul.f32 %v1957, %v2002
      %v2014 = vmul.f32 %v1959, %v2003
      %2015 = vrot.lane.b32.xlu0 %v1123, 72
      %v2016 = vpop.permute.xlu0 %2015
      %2017 = vrot.lane.b32.xlu0 %v1128, 72
      %v2018 = vpop.permute.xlu0 %2017
      %2019 = vrot.lane.b32.xlu0 %v1133, 72
      %v2020 = vpop.permute.xlu0 %2019
      %2021 = vrot.lane.b32.xlu0 %v1138, 72
      %v2022 = vpop.permute.xlu0 %2021
      %2023 = vrot.lane.b32.xlu0 %v1143, 72
      %v2024 = vpop.permute.xlu0 %2023
      %2025 = vrot.lane.b32.xlu0 %v1148, 72
      %v2026 = vpop.permute.xlu0 %2025
      %2027 = vrot.lane.b32.xlu0 %v1153, 72
      %v2028 = vpop.permute.xlu0 %2027
      %2029 = vrot.lane.b32.xlu0 %v1158, 72
      %v2030 = vpop.permute.xlu0 %2029
      %2031 = vrot.lane.b32.xlu0 %v1163, 72
      %v2032 = vpop.permute.xlu0 %2031
      %2033 = vrot.lane.b32.xlu0 %v1168, 72
      %v2034 = vpop.permute.xlu0 %2033
      %2035 = vrot.lane.b32.xlu0 %v1173, 72
      %v2036 = vpop.permute.xlu0 %2035
      %v2048 = vsel %vm1374, %v2004, 0
      %v2051 = vsel %vm1374, %v2005, 0
      %v2054 = vsel %vm1374, %v2006, 0
      %v2057 = vsel %vm1374, %v2007, 0
      %v2060 = vsel %vm1374, %v2008, 0
      %v2063 = vsel %vm1374, %v2009, 0
      %v2066 = vsel %vm1374, %v2010, 0
      %v2069 = vsel %vm1374, %v2011, 0
      %v2072 = vsel %vm1374, %v2012, 0
      %v2075 = vsel %vm1374, %v2013, 0
      %v2078 = vsel %vm1374, %v2014, 0
      %v2080 = vsel %vm1562, %v2036, 0
      %2082 = vmatprep.subr.mxu0 0.0
      %2083 = vmatpush1.msra.mxu0 0.0
      %2084 = vmatprep.subr.mxu0 0.0
      %2085 = vmatpush1.msra.mxu0 0.0
      %2086 = vmatprep.subr.mxu0 0.0
      %2087 = vmatpush1.msra.mxu0 0.0
      %2088 = vmatprep.subr.mxu0 0.0
      %2089 = vmatpush1.msra.mxu0 0.0
      %2090 = vmatprep.subr.mxu0 0.0
      %2091 = vmatpush1.msra.mxu0 0.0
      %2092 = vmatprep.subr.mxu0 0.0
      %2093 = vmatpush1.msra.mxu0 %v2080
      %2094 = vmatprep.subr.mxu0 0.0
      %2095 = vmatpush1.msra.mxu0 %v2034
      %2096 = vmatprep.subr.mxu0 0.0
      %2097 = vmatpush1.msra.mxu0 %v2032
      %2098 = vmatprep.subr.mxu0 0.0
      %2099 = vmatpush1.msra.mxu0 %v2030
      %2100 = vmatprep.subr.mxu0 0.0
      %2101 = vmatpush1.msra.mxu0 %v2028
      %2102 = vmatprep.subr.mxu0 0.0
      %2103 = vmatpush1.msra.mxu0 %v2026
      %2104 = vmatprep.subr.mxu0 0.0
      %2105 = vmatpush1.msra.mxu0 %v2024
      %2106 = vmatprep.subr.mxu0 0.0
      %2107 = vmatpush1.msra.mxu0 %v2022
      %2108 = vmatprep.subr.mxu0 0.0
      %2109 = vmatpush1.msra.mxu0 %v2020
      %2110 = vmatprep.subr.mxu0 0.0
      %2111 = vmatpush1.msra.mxu0 %v2018
      %2112 = vmatprep.subr.mxu0 0.0
      %2113 = vmatpush1.msra.mxu0 %v2016
      %2114 = vmatprep.subr.mxu0 0.0
      %2115 = vmatpush2.msra.mxu0 0.0
      %2116 = vmatprep.subr.mxu0 0.0
      %2117 = vmatpush2.msra.mxu0 0.0
      %2118 = vmatprep.subr.mxu0 0.0
      %2119 = vmatpush2.msra.mxu0 0.0
      %2120 = vmatprep.subr.mxu0 0.0
      %2121 = vmatpush2.msra.mxu0 0.0
      %2122 = vmatprep.subr.mxu0 0.0
      %2123 = vmatpush2.msra.mxu0 0.0
      %2124 = vmatprep.subr.mxu0 0.0
      %2125 = vmatpush2.msra.mxu0 0.0
      %2126 = vmatprep.subr.mxu0 0.0
      %2127 = vmatpush2.msra.mxu0 0.0
      %2128 = vmatprep.subr.mxu0 0.0
      %2129 = vmatpush2.msra.mxu0 0.0
      %2130 = vmatprep.subr.mxu0 0.0
      %2131 = vmatpush2.msra.mxu0 0.0
      %2132 = vmatprep.subr.mxu0 0.0
      %2133 = vmatpush2.msra.mxu0 0.0
      %2134 = vmatprep.subr.mxu0 0.0
      %2135 = vmatpush2.msra.mxu0 0.0
      %2136 = vmatprep.subr.mxu0 0.0
      %2137 = vmatpush2.msra.mxu0 0.0
      %2138 = vmatprep.subr.mxu0 0.0
      %2139 = vmatpush2.msra.mxu0 0.0
      %2140 = vmatprep.subr.mxu0 0.0
      %2141 = vmatpush2.msra.mxu0 0.0
      %2142 = vmatprep.subr.mxu0 0.0
      %2143 = vmatpush2.msra.mxu0 0.0
      %2144 = vmatprep.subr.mxu0 0.0
      %2145 = vmatpush2.msra.mxu0 0.0
      %2146 = vmatprep.mubr.f32.mxu0 0.0
      %2147 = vmatmul.mubr.f32.gmra.mxu0 %v2048
      %v2148 = vpop.f32.mrf.mxu0
      %v2149 = vadd.f32 0.0, %v2148
      %v2150 = vpop.f32.mrf.mxu0
      %2151 = vmatprep.mubr.f32.mxu0 0.0
      %2152 = vmatmul.mubr.f32.gmra.mxu0 %v2051
      %v2153 = vpop.f32.mrf.mxu0
      %v2154 = vadd.f32 0.0, %v2153
      %v2155 = vpop.f32.mrf.mxu0
      %2156 = vmatprep.mubr.f32.mxu0 0.0
      %2157 = vmatmul.mubr.f32.gmra.mxu0 %v2054
      %v2158 = vpop.f32.mrf.mxu0
      %v2159 = vadd.f32 0.0, %v2158
      %v2160 = vpop.f32.mrf.mxu0
      %2161 = vmatprep.mubr.f32.mxu0 0.0
      %2162 = vmatmul.mubr.f32.gmra.mxu0 %v2057
      %v2163 = vpop.f32.mrf.mxu0
      %v2164 = vadd.f32 0.0, %v2163
      %v2165 = vpop.f32.mrf.mxu0
      %2166 = vmatprep.mubr.f32.mxu0 0.0
      %2167 = vmatmul.mubr.f32.gmra.mxu0 %v2060
      %v2168 = vpop.f32.mrf.mxu0
      %v2169 = vadd.f32 0.0, %v2168
      %v2170 = vpop.f32.mrf.mxu0
      %2171 = vmatprep.mubr.f32.mxu0 0.0
      %2172 = vmatmul.mubr.f32.gmra.mxu0 %v2063
      %v2173 = vpop.f32.mrf.mxu0
      %v2174 = vadd.f32 0.0, %v2173
      %v2175 = vpop.f32.mrf.mxu0
      %2176 = vmatprep.mubr.f32.mxu0 0.0
      %2177 = vmatmul.mubr.f32.gmra.mxu0 %v2066
      %v2178 = vpop.f32.mrf.mxu0
      %v2179 = vadd.f32 0.0, %v2178
      %v2180 = vpop.f32.mrf.mxu0
      %2181 = vmatprep.mubr.f32.mxu0 0.0
      %2182 = vmatmul.mubr.f32.gmra.mxu0 %v2069
      %v2183 = vpop.f32.mrf.mxu0
      %v2184 = vadd.f32 0.0, %v2183
      %v2185 = vpop.f32.mrf.mxu0
      %2186 = vmatprep.mubr.f32.mxu0 0.0
      %2187 = vmatmul.mubr.f32.gmra.mxu0 %v2072
      %v2188 = vpop.f32.mrf.mxu0
      %v2189 = vadd.f32 0.0, %v2188
      %v2190 = vpop.f32.mrf.mxu0
      %2191 = vmatprep.mubr.f32.mxu0 0.0
      %2192 = vmatmul.mubr.f32.gmra.mxu0 %v2075
      %v2193 = vpop.f32.mrf.mxu0
      %v2194 = vadd.f32 0.0, %v2193
      %v2195 = vpop.f32.mrf.mxu0
      %2196 = vmatprep.mubr.f32.mxu0 0.0
      %2197 = vmatmul.mubr.f32.gmra.mxu0 %v2078
      %v2198 = vpop.f32.mrf.mxu0
      %v2199 = vadd.f32 0.0, %v2198
      %v2200 = vpop.f32.mrf.mxu0
      %2201 = vdwg.mxu0
      %v2202 = vld [vmem:[%s10 + $0x8] sm:$0xff]
      %v2204 = vsel %vm1187, %v2149, 0
      %v2207 = vsel %vm1187, %v2154, 0
      %v2210 = vsel %vm1187, %v2159, 0
      %v2213 = vsel %vm1187, %v2164, 0
      %v2216 = vsel %vm1187, %v2169, 0
      %v2219 = vsel %vm1187, %v2174, 0
      %v2222 = vsel %vm1187, %v2179, 0
      %v2225 = vsel %vm1187, %v2184, 0
      %v2228 = vsel %vm1187, %v2189, 0
      %v2231 = vsel %vm1187, %v2194, 0
      %v2234 = vsel %vm1187, %v2199, 0
      %2236 = vmatprep.subr.mxu0 0.0
      %2237 = vmatpush1.msra.mxu0 0.0
      %2238 = vmatprep.subr.mxu0 0.0
      %2239 = vmatpush1.msra.mxu0 0.0
      %2240 = vmatprep.subr.mxu0 0.0
      %2241 = vmatpush1.msra.mxu0 0.0
      %2242 = vmatprep.subr.mxu0 0.0
      %2243 = vmatpush1.msra.mxu0 0.0
      %2244 = vmatprep.subr.mxu0 0.0
      %2245 = vmatpush1.msra.mxu0 0.0
      %2246 = vmatprep.subr.mxu0 0.0
      %2247 = vmatpush1.msra.mxu0 0.0
      %2248 = vmatprep.subr.mxu0 0.0
      %2249 = vmatpush1.msra.mxu0 0.0
      %2250 = vmatprep.subr.mxu0 0.0
      %2251 = vmatpush1.msra.mxu0 0.0
      %2252 = vmatprep.subr.mxu0 0.0
      %2253 = vmatpush1.msra.mxu0 0.0
      %2254 = vmatprep.subr.mxu0 0.0
      %2255 = vmatpush1.msra.mxu0 0.0
      %2256 = vmatprep.subr.mxu0 0.0
      %2257 = vmatpush1.msra.mxu0 0.0
      %2258 = vmatprep.subr.mxu0 0.0
      %2259 = vmatpush1.msra.mxu0 0.0
      %2260 = vmatprep.subr.mxu0 0.0
      %2261 = vmatpush1.msra.mxu0 0.0
      %2262 = vmatprep.subr.mxu0 0.0
      %2263 = vmatpush1.msra.mxu0 0.0
      %2264 = vmatprep.subr.mxu0 0.0
      %2265 = vmatpush1.msra.mxu0 0.0
      %2266 = vmatprep.subr.mxu0 0.0
      %2267 = vmatpush1.msra.mxu0 %v2202
      %2268 = vmatprep.subr.mxu0 0.0
      %2269 = vmatpush2.msra.mxu0 0.0
      %2270 = vmatprep.subr.mxu0 0.0
      %2271 = vmatpush2.msra.mxu0 0.0
      %2272 = vmatprep.subr.mxu0 0.0
      %2273 = vmatpush2.msra.mxu0 0.0
      %2274 = vmatprep.subr.mxu0 0.0
      %2275 = vmatpush2.msra.mxu0 0.0
      %2276 = vmatprep.subr.mxu0 0.0
      %2277 = vmatpush2.msra.mxu0 0.0
      %2278 = vmatprep.subr.mxu0 0.0
      %2279 = vmatpush2.msra.mxu0 0.0
      %2280 = vmatprep.subr.mxu0 0.0
      %2281 = vmatpush2.msra.mxu0 0.0
      %2282 = vmatprep.subr.mxu0 0.0
      %2283 = vmatpush2.msra.mxu0 0.0
      %2284 = vmatprep.subr.mxu0 0.0
      %2285 = vmatpush2.msra.mxu0 0.0
      %2286 = vmatprep.subr.mxu0 0.0
      %2287 = vmatpush2.msra.mxu0 0.0
      %2288 = vmatprep.subr.mxu0 0.0
      %2289 = vmatpush2.msra.mxu0 0.0
      %2290 = vmatprep.subr.mxu0 0.0
      %2291 = vmatpush2.msra.mxu0 0.0
      %2292 = vmatprep.subr.mxu0 0.0
      %2293 = vmatpush2.msra.mxu0 0.0
      %2294 = vmatprep.subr.mxu0 0.0
      %2295 = vmatpush2.msra.mxu0 0.0
      %2296 = vmatprep.subr.mxu0 0.0
      %2297 = vmatpush2.msra.mxu0 0.0
      %2298 = vmatprep.subr.mxu0 0.0
      %2299 = vmatpush2.msra.mxu0 0.0
      %2300 = vmatprep.mubr.f32.mxu0 0.0
      %2301 = vmatmul.mubr.f32.gmra.mxu0 %v2204
      %v2302 = vpop.f32.mrf.mxu0
      %v2303 = vadd.f32 0.0, %v2302
      %v2304 = vpop.f32.mrf.mxu0
      %2305 = vmatprep.mubr.f32.mxu0 0.0
      %2306 = vmatmul.mubr.f32.gmra.mxu0 %v2207
      %v2307 = vpop.f32.mrf.mxu0
      %v2308 = vadd.f32 0.0, %v2307
      %v2309 = vpop.f32.mrf.mxu0
      %2310 = vmatprep.mubr.f32.mxu0 0.0
      %2311 = vmatmul.mubr.f32.gmra.mxu0 %v2210
      %v2312 = vpop.f32.mrf.mxu0
      %v2313 = vadd.f32 0.0, %v2312
      %v2314 = vpop.f32.mrf.mxu0
      %2315 = vmatprep.mubr.f32.mxu0 0.0
      %2316 = vmatmul.mubr.f32.gmra.mxu0 %v2213
      %v2317 = vpop.f32.mrf.mxu0
      %v2318 = vadd.f32 0.0, %v2317
      %v2319 = vpop.f32.mrf.mxu0
      %2320 = vmatprep.mubr.f32.mxu0 0.0
      %2321 = vmatmul.mubr.f32.gmra.mxu0 %v2216
      %v2322 = vpop.f32.mrf.mxu0
      %v2323 = vadd.f32 0.0, %v2322
      %v2324 = vpop.f32.mrf.mxu0
      %2325 = vmatprep.mubr.f32.mxu0 0.0
      %2326 = vmatmul.mubr.f32.gmra.mxu0 %v2219
      %v2327 = vpop.f32.mrf.mxu0
      %v2328 = vadd.f32 0.0, %v2327
      %v2329 = vpop.f32.mrf.mxu0
      %2330 = vmatprep.mubr.f32.mxu0 0.0
      %2331 = vmatmul.mubr.f32.gmra.mxu0 %v2222
      %v2332 = vpop.f32.mrf.mxu0
      %v2333 = vadd.f32 0.0, %v2332
      %v2334 = vpop.f32.mrf.mxu0
      %2335 = vmatprep.mubr.f32.mxu0 0.0
      %2336 = vmatmul.mubr.f32.gmra.mxu0 %v2225
      %v2337 = vpop.f32.mrf.mxu0
      %v2338 = vadd.f32 0.0, %v2337
      %v2339 = vpop.f32.mrf.mxu0
      %2340 = vmatprep.mubr.f32.mxu0 0.0
      %2341 = vmatmul.mubr.f32.gmra.mxu0 %v2228
      %v2342 = vpop.f32.mrf.mxu0
      %v2343 = vadd.f32 0.0, %v2342
      %v2344 = vpop.f32.mrf.mxu0
      %2345 = vmatprep.mubr.f32.mxu0 0.0
      %2346 = vmatmul.mubr.f32.gmra.mxu0 %v2231
      %v2347 = vpop.f32.mrf.mxu0
      %v2348 = vadd.f32 0.0, %v2347
      %v2349 = vpop.f32.mrf.mxu0
      %2350 = vmatprep.mubr.f32.mxu0 0.0
      %2351 = vmatmul.mubr.f32.gmra.mxu0 %v2234
      %v2352 = vpop.f32.mrf.mxu0
      %v2353 = vadd.f32 0.0, %v2352
      %v2354 = vpop.f32.mrf.mxu0
      %2355 = vdwg.mxu0
      %v2357 = vsel %vm1187, %v1632, 0
      %v2360 = vsel %vm1187, %v1637, 0
      %v2363 = vsel %vm1187, %v1642, 0
      %v2366 = vsel %vm1187, %v1647, 0
      %v2369 = vsel %vm1187, %v1652, 0
      %v2372 = vsel %vm1187, %v1657, 0
      %v2375 = vsel %vm1187, %v1662, 0
      %v2378 = vsel %vm1187, %v1667, 0
      %v2381 = vsel %vm1187, %v1672, 0
      %v2384 = vsel %vm1187, %v1677, 0
      %v2387 = vsel %vm1187, %v1682, 0
      %2389 = vmatprep.subr.mxu0 0.0
      %2390 = vmatpush1.msra.mxu0 0.0
      %2391 = vmatprep.subr.mxu0 0.0
      %2392 = vmatpush1.msra.mxu0 0.0
      %2393 = vmatprep.subr.mxu0 0.0
      %2394 = vmatpush1.msra.mxu0 0.0
      %2395 = vmatprep.subr.mxu0 0.0
      %2396 = vmatpush1.msra.mxu0 0.0
      %2397 = vmatprep.subr.mxu0 0.0
      %2398 = vmatpush1.msra.mxu0 0.0
      %2399 = vmatprep.subr.mxu0 0.0
      %2400 = vmatpush1.msra.mxu0 0.0
      %2401 = vmatprep.subr.mxu0 0.0
      %2402 = vmatpush1.msra.mxu0 0.0
      %2403 = vmatprep.subr.mxu0 0.0
      %2404 = vmatpush1.msra.mxu0 0.0
      %2405 = vmatprep.subr.mxu0 0.0
      %2406 = vmatpush1.msra.mxu0 0.0
      %2407 = vmatprep.subr.mxu0 0.0
      %2408 = vmatpush1.msra.mxu0 0.0
      %2409 = vmatprep.subr.mxu0 0.0
      %2410 = vmatpush1.msra.mxu0 0.0
      %2411 = vmatprep.subr.mxu0 0.0
      %2412 = vmatpush1.msra.mxu0 0.0
      %2413 = vmatprep.subr.mxu0 0.0
      %2414 = vmatpush1.msra.mxu0 0.0
      %2415 = vmatprep.subr.mxu0 0.0
      %2416 = vmatpush1.msra.mxu0 0.0
      %2417 = vmatprep.subr.mxu0 0.0
      %2418 = vmatpush1.msra.mxu0 0.0
      %2419 = vmatprep.subr.mxu0 0.0
      %2420 = vmatpush1.msra.mxu0 %v1685
      %2421 = vmatprep.subr.mxu0 0.0
      %2422 = vmatpush2.msra.mxu0 0.0
      %2423 = vmatprep.subr.mxu0 0.0
      %2424 = vmatpush2.msra.mxu0 0.0
      %2425 = vmatprep.subr.mxu0 0.0
      %2426 = vmatpush2.msra.mxu0 0.0
      %2427 = vmatprep.subr.mxu0 0.0
      %2428 = vmatpush2.msra.mxu0 0.0
      %2429 = vmatprep.subr.mxu0 0.0
      %2430 = vmatpush2.msra.mxu0 0.0
      %2431 = vmatprep.subr.mxu0 0.0
      %2432 = vmatpush2.msra.mxu0 0.0
      %2433 = vmatprep.subr.mxu0 0.0
      %2434 = vmatpush2.msra.mxu0 0.0
      %2435 = vmatprep.subr.mxu0 0.0
      %2436 = vmatpush2.msra.mxu0 0.0
      %2437 = vmatprep.subr.mxu0 0.0
      %2438 = vmatpush2.msra.mxu0 0.0
      %2439 = vmatprep.subr.mxu0 0.0
      %2440 = vmatpush2.msra.mxu0 0.0
      %2441 = vmatprep.subr.mxu0 0.0
      %2442 = vmatpush2.msra.mxu0 0.0
      %2443 = vmatprep.subr.mxu0 0.0
      %2444 = vmatpush2.msra.mxu0 0.0
      %2445 = vmatprep.subr.mxu0 0.0
      %2446 = vmatpush2.msra.mxu0 0.0
      %2447 = vmatprep.subr.mxu0 0.0
      %2448 = vmatpush2.msra.mxu0 0.0
      %2449 = vmatprep.subr.mxu0 0.0
      %2450 = vmatpush2.msra.mxu0 0.0
      %2451 = vmatprep.subr.mxu0 0.0
      %2452 = vmatpush2.msra.mxu0 0.0
      %2453 = vmatprep.mubr.f32.mxu0 0.0
      %2454 = vmatmul.mubr.f32.gmra.mxu0 %v2357
      %v2455 = vpop.f32.mrf.mxu0
      %v2456 = vadd.f32 %v2303, %v2455
      %v2457 = vpop.f32.mrf.mxu0
      %2458 = vmatprep.mubr.f32.mxu0 0.0
      %2459 = vmatmul.mubr.f32.gmra.mxu0 %v2360
      %v2460 = vpop.f32.mrf.mxu0
      %v2461 = vadd.f32 %v2308, %v2460
      %v2462 = vpop.f32.mrf.mxu0
      %2463 = vmatprep.mubr.f32.mxu0 0.0
      %2464 = vmatmul.mubr.f32.gmra.mxu0 %v2363
      %v2465 = vpop.f32.mrf.mxu0
      %v2466 = vadd.f32 %v2313, %v2465
      %v2467 = vpop.f32.mrf.mxu0
      %2468 = vmatprep.mubr.f32.mxu0 0.0
      %2469 = vmatmul.mubr.f32.gmra.mxu0 %v2366
      %v2470 = vpop.f32.mrf.mxu0
      %v2471 = vadd.f32 %v2318, %v2470
      %v2472 = vpop.f32.mrf.mxu0
      %2473 = vmatprep.mubr.f32.mxu0 0.0
      %2474 = vmatmul.mubr.f32.gmra.mxu0 %v2369
      %v2475 = vpop.f32.mrf.mxu0
      %v2476 = vadd.f32 %v2323, %v2475
      %v2477 = vpop.f32.mrf.mxu0
      %2478 = vmatprep.mubr.f32.mxu0 0.0
      %2479 = vmatmul.mubr.f32.gmra.mxu0 %v2372
      %v2480 = vpop.f32.mrf.mxu0
      %v2481 = vadd.f32 %v2328, %v2480
      %v2482 = vpop.f32.mrf.mxu0
      %2483 = vmatprep.mubr.f32.mxu0 0.0
      %2484 = vmatmul.mubr.f32.gmra.mxu0 %v2375
      %v2485 = vpop.f32.mrf.mxu0
      %v2486 = vadd.f32 %v2333, %v2485
      %v2487 = vpop.f32.mrf.mxu0
      %2488 = vmatprep.mubr.f32.mxu0 0.0
      %2489 = vmatmul.mubr.f32.gmra.mxu0 %v2378
      %v2490 = vpop.f32.mrf.mxu0
      %v2491 = vadd.f32 %v2338, %v2490
      %v2492 = vpop.f32.mrf.mxu0
      %2493 = vmatprep.mubr.f32.mxu0 0.0
      %2494 = vmatmul.mubr.f32.gmra.mxu0 %v2381
      %v2495 = vpop.f32.mrf.mxu0
      %v2496 = vadd.f32 %v2343, %v2495
      %v2497 = vpop.f32.mrf.mxu0
      %2498 = vmatprep.mubr.f32.mxu0 0.0
      %2499 = vmatmul.mubr.f32.gmra.mxu0 %v2384
      %v2500 = vpop.f32.mrf.mxu0
      %v2501 = vadd.f32 %v2348, %v2500
      %v2502 = vpop.f32.mrf.mxu0
      %2503 = vmatprep.mubr.f32.mxu0 0.0
      %2504 = vmatmul.mubr.f32.gmra.mxu0 %v2387
      %v2505 = vpop.f32.mrf.mxu0
      %v2506 = vadd.f32 %v2353, %v2505
      %v2507 = vpop.f32.mrf.mxu0
      %2508 = vdwg.mxu0
      %2509 = vrot.lane.b32.xlu0 %v1176, 112
      %v2510 = vpop.permute.xlu0 %2509
      %2511 = vrot.lane.b32.xlu0 %v1177, 112
      %v2512 = vpop.permute.xlu0 %2511
      %2513 = vrot.lane.b32.xlu0 %v1178, 112
      %v2514 = vpop.permute.xlu0 %2513
      %2515 = vrot.lane.b32.xlu0 %v1179, 112
      %v2516 = vpop.permute.xlu0 %2515
      %2517 = vrot.lane.b32.xlu0 %v1180, 112
      %v2518 = vpop.permute.xlu0 %2517
      %2519 = vrot.lane.b32.xlu0 %v1181, 112
      %v2520 = vpop.permute.xlu0 %2519
      %2521 = vrot.lane.b32.xlu0 %v1182, 112
      %v2522 = vpop.permute.xlu0 %2521
      %2523 = vrot.lane.b32.xlu0 %v1183, 112
      %v2524 = vpop.permute.xlu0 %2523
      %2525 = vrot.lane.b32.xlu0 %v1184, 112
      %v2526 = vpop.permute.xlu0 %2525
      %2527 = vrot.lane.b32.xlu0 %v1185, 112
      %v2528 = vpop.permute.xlu0 %2527
      %2529 = vrot.lane.b32.xlu0 %v1186, 112
      %v2530 = vpop.permute.xlu0 %2529
      %2531 = vrot.lane.b32.xlu0 %v1123, 112
      %v2532 = vpop.permute.xlu0 %2531
      %2533 = vrot.lane.b32.xlu0 %v1128, 112
      %v2534 = vpop.permute.xlu0 %2533
      %2535 = vrot.lane.b32.xlu0 %v1133, 112
      %v2536 = vpop.permute.xlu0 %2535
      %2537 = vrot.lane.b32.xlu0 %v1138, 112
      %v2538 = vpop.permute.xlu0 %2537
      %2539 = vrot.lane.b32.xlu0 %v1143, 112
      %v2540 = vpop.permute.xlu0 %2539
      %2541 = vrot.lane.b32.xlu0 %v1148, 112
      %v2542 = vpop.permute.xlu0 %2541
      %2543 = vrot.lane.b32.xlu0 %v1153, 112
      %v2544 = vpop.permute.xlu0 %2543
      %2545 = vrot.lane.b32.xlu0 %v1158, 112
      %v2546 = vpop.permute.xlu0 %2545
      %2547 = vrot.lane.b32.xlu0 %v1163, 112
      %v2548 = vpop.permute.xlu0 %2547
      %2549 = vrot.lane.b32.xlu0 %v1168, 112
      %v2550 = vpop.permute.xlu0 %2549
      %2551 = vrot.lane.b32.xlu0 %v1173, 112
      %v2552 = vpop.permute.xlu0 %2551
      %v2553 = vsel %vm1187, %v2510, 0
      %v2555 = vsel %vm1187, %v2512, 0
      %v2557 = vsel %vm1187, %v2514, 0
      %v2559 = vsel %vm1187, %v2516, 0
      %v2561 = vsel %vm1187, %v2518, 0
      %v2563 = vsel %vm1187, %v2520, 0
      %v2565 = vsel %vm1187, %v2522, 0
      %v2567 = vsel %vm1187, %v2524, 0
      %v2569 = vsel %vm1187, %v2526, 0
      %v2571 = vsel %vm1187, %v2528, 0
      %v2573 = vsel %vm1187, %v2530, 0
      %v2575 = vsel %vm1187, %v2532, 0
      %v2577 = vsel %vm1187, %v2534, 0
      %v2579 = vsel %vm1187, %v2536, 0
      %v2581 = vsel %vm1187, %v2538, 0
      %v2583 = vsel %vm1187, %v2540, 0
      %v2585 = vsel %vm1187, %v2542, 0
      %v2587 = vsel %vm1187, %v2544, 0
      %v2589 = vsel %vm1187, %v2546, 0
      %v2591 = vsel %vm1187, %v2548, 0
      %v2593 = vsel %vm1187, %v2550, 0
      %v2595 = vsel %vm1187, %v2552, 0
      %2597 = vmatprep.subr.mxu0 0.0
      %2598 = vmatpush1.xpose.msra.mxu0 0.0
      %2599 = vmatprep.subr.mxu0 0.0
      %2600 = vmatpush1.xpose.msra.mxu0 0.0
      %2601 = vmatprep.subr.mxu0 0.0
      %2602 = vmatpush1.xpose.msra.mxu0 0.0
      %2603 = vmatprep.subr.mxu0 0.0
      %2604 = vmatpush1.xpose.msra.mxu0 0.0
      %2605 = vmatprep.subr.mxu0 0.0
      %2606 = vmatpush1.xpose.msra.mxu0 0.0
      %2607 = vmatprep.subr.mxu0 0.0
      %2608 = vmatpush1.xpose.msra.mxu0 %v2595
      %2609 = vmatprep.subr.mxu0 0.0
      %2610 = vmatpush1.xpose.msra.mxu0 %v2593
      %2611 = vmatprep.subr.mxu0 0.0
      %2612 = vmatpush1.xpose.msra.mxu0 %v2591
      %2613 = vmatprep.subr.mxu0 0.0
      %2614 = vmatpush1.xpose.msra.mxu0 %v2589
      %2615 = vmatprep.subr.mxu0 0.0
      %2616 = vmatpush1.xpose.msra.mxu0 %v2587
      %2617 = vmatprep.subr.mxu0 0.0
      %2618 = vmatpush1.xpose.msra.mxu0 %v2585
      %2619 = vmatprep.subr.mxu0 0.0
      %2620 = vmatpush1.xpose.msra.mxu0 %v2583
      %2621 = vmatprep.subr.mxu0 0.0
      %2622 = vmatpush1.xpose.msra.mxu0 %v2581
      %2623 = vmatprep.subr.mxu0 0.0
      %2624 = vmatpush1.xpose.msra.mxu0 %v2579
      %2625 = vmatprep.subr.mxu0 0.0
      %2626 = vmatpush1.xpose.msra.mxu0 %v2577
      %2627 = vmatprep.subr.mxu0 0.0
      %2628 = vmatpush1.xpose.msra.mxu0 %v2575
      %2629 = vmatprep.subr.mxu0 0.0
      %2630 = vmatpush2.xpose.msra.mxu0 0.0
      %2631 = vmatprep.subr.mxu0 0.0
      %2632 = vmatpush2.xpose.msra.mxu0 0.0
      %2633 = vmatprep.subr.mxu0 0.0
      %2634 = vmatpush2.xpose.msra.mxu0 0.0
      %2635 = vmatprep.subr.mxu0 0.0
      %2636 = vmatpush2.xpose.msra.mxu0 0.0
      %2637 = vmatprep.subr.mxu0 0.0
      %2638 = vmatpush2.xpose.msra.mxu0 0.0
      %2639 = vmatprep.subr.mxu0 0.0
      %2640 = vmatpush2.xpose.msra.mxu0 0.0
      %2641 = vmatprep.subr.mxu0 0.0
      %2642 = vmatpush2.xpose.msra.mxu0 0.0
      %2643 = vmatprep.subr.mxu0 0.0
      %2644 = vmatpush2.xpose.msra.mxu0 0.0
      %2645 = vmatprep.subr.mxu0 0.0
      %2646 = vmatpush2.xpose.msra.mxu0 0.0
      %2647 = vmatprep.subr.mxu0 0.0
      %2648 = vmatpush2.xpose.msra.mxu0 0.0
      %2649 = vmatprep.subr.mxu0 0.0
      %2650 = vmatpush2.xpose.msra.mxu0 0.0
      %2651 = vmatprep.subr.mxu0 0.0
      %2652 = vmatpush2.xpose.msra.mxu0 0.0
      %2653 = vmatprep.subr.mxu0 0.0
      %2654 = vmatpush2.xpose.msra.mxu0 0.0
      %2655 = vmatprep.subr.mxu0 0.0
      %2656 = vmatpush2.xpose.msra.mxu0 0.0
      %2657 = vmatprep.subr.mxu0 0.0
      %2658 = vmatpush2.xpose.msra.mxu0 0.0
      %2659 = vmatprep.subr.mxu0 0.0
      %2660 = vmatpush2.xpose.msra.mxu0 0.0
      %2661 = vmatprep.mubr.f32.mxu0 0.0
      %2662 = vmatmul.mubr.f32.gmra.mxu0 %v2553
      %v2663 = vpop.f32.mrf.mxu0
      %v2664 = vadd.f32 0.0, %v2663
      %v2665 = vpop.f32.mrf.mxu0
      %2666 = vmatprep.mubr.f32.mxu0 0.0
      %2667 = vmatmul.mubr.f32.gmra.mxu0 %v2555
      %v2668 = vpop.f32.mrf.mxu0
      %v2669 = vadd.f32 0.0, %v2668
      %v2670 = vpop.f32.mrf.mxu0
      %2671 = vmatprep.mubr.f32.mxu0 0.0
      %2672 = vmatmul.mubr.f32.gmra.mxu0 %v2557
      %v2673 = vpop.f32.mrf.mxu0
      %v2674 = vadd.f32 0.0, %v2673
      %v2675 = vpop.f32.mrf.mxu0
      %2676 = vmatprep.mubr.f32.mxu0 0.0
      %2677 = vmatmul.mubr.f32.gmra.mxu0 %v2559
      %v2678 = vpop.f32.mrf.mxu0
      %v2679 = vadd.f32 0.0, %v2678
      %v2680 = vpop.f32.mrf.mxu0
      %2681 = vmatprep.mubr.f32.mxu0 0.0
      %2682 = vmatmul.mubr.f32.gmra.mxu0 %v2561
      %v2683 = vpop.f32.mrf.mxu0
      %v2684 = vadd.f32 0.0, %v2683
      %v2685 = vpop.f32.mrf.mxu0
      %2686 = vmatprep.mubr.f32.mxu0 0.0
      %2687 = vmatmul.mubr.f32.gmra.mxu0 %v2563
      %v2688 = vpop.f32.mrf.mxu0
      %v2689 = vadd.f32 0.0, %v2688
      %v2690 = vpop.f32.mrf.mxu0
      %2691 = vmatprep.mubr.f32.mxu0 0.0
      %2692 = vmatmul.mubr.f32.gmra.mxu0 %v2565
      %v2693 = vpop.f32.mrf.mxu0
      %v2694 = vadd.f32 0.0, %v2693
      %v2695 = vpop.f32.mrf.mxu0
      %2696 = vmatprep.mubr.f32.mxu0 0.0
      %2697 = vmatmul.mubr.f32.gmra.mxu0 %v2567
      %v2698 = vpop.f32.mrf.mxu0
      %v2699 = vadd.f32 0.0, %v2698
      %v2700 = vpop.f32.mrf.mxu0
      %2701 = vmatprep.mubr.f32.mxu0 0.0
      %2702 = vmatmul.mubr.f32.gmra.mxu0 %v2569
      %v2703 = vpop.f32.mrf.mxu0
      %v2704 = vadd.f32 0.0, %v2703
      %v2705 = vpop.f32.mrf.mxu0
      %2706 = vmatprep.mubr.f32.mxu0 0.0
      %2707 = vmatmul.mubr.f32.gmra.mxu0 %v2571
      %v2708 = vpop.f32.mrf.mxu0
      %v2709 = vadd.f32 0.0, %v2708
      %v2710 = vpop.f32.mrf.mxu0
      %2711 = vmatprep.mubr.f32.mxu0 0.0
      %2712 = vmatmul.mubr.f32.gmra.mxu0 %v2573
      %v2713 = vpop.f32.mrf.mxu0
      %v2714 = vadd.f32 0.0, %v2713
      %v2715 = vpop.f32.mrf.mxu0
      %2716 = vdwg.mxu0
      %v2717 = vsel %vm1374, %v2664, -inf
      %2718 = vmax.xlane.f32.xlu0 %v2717
      %v2719 = vpop.xlane.xlu0 %2718
      %v2720 = vsel %vm1374, %v2669, -inf
      %2721 = vmax.xlane.f32.xlu0 %v2720
      %v2722 = vpop.xlane.xlu0 %2721
      %v2723 = vsel %vm1374, %v2674, -inf
      %2724 = vmax.xlane.f32.xlu0 %v2723
      %v2725 = vpop.xlane.xlu0 %2724
      %v2726 = vsel %vm1374, %v2679, -inf
      %2727 = vmax.xlane.f32.xlu0 %v2726
      %v2728 = vpop.xlane.xlu0 %2727
      %v2729 = vsel %vm1374, %v2684, -inf
      %2730 = vmax.xlane.f32.xlu0 %v2729
      %v2731 = vpop.xlane.xlu0 %2730
      %v2732 = vsel %vm1374, %v2689, -inf
      %2733 = vmax.xlane.f32.xlu0 %v2732
      %v2734 = vpop.xlane.xlu0 %2733
      %v2735 = vsel %vm1374, %v2694, -inf
      %2736 = vmax.xlane.f32.xlu0 %v2735
      %v2737 = vpop.xlane.xlu0 %2736
      %v2738 = vsel %vm1374, %v2699, -inf
      %2739 = vmax.xlane.f32.xlu0 %v2738
      %v2740 = vpop.xlane.xlu0 %2739
      %v2741 = vsel %vm1374, %v2704, -inf
      %2742 = vmax.xlane.f32.xlu0 %v2741
      %v2743 = vpop.xlane.xlu0 %2742
      %v2744 = vsel %vm1374, %v2709, -inf
      %2745 = vmax.xlane.f32.xlu0 %v2744
      %v2746 = vpop.xlane.xlu0 %2745
      %v2747 = vsel %vm1405, %v2714, -inf
      %2748 = vmax.xlane.f32.xlu0 %v2747
      %v2749 = vpop.xlane.xlu0 %2748
      %v2750 = vsub.f32 %v2664, %v2719
      %v2751 = vsub.f32 %v2669, %v2722
      %v2752 = vsub.f32 %v2674, %v2725
      %v2753 = vsub.f32 %v2679, %v2728
      %v2754 = vsub.f32 %v2684, %v2731
      %v2755 = vsub.f32 %v2689, %v2734
      %v2756 = vsub.f32 %v2694, %v2737
      %v2757 = vsub.f32 %v2699, %v2740
      %v2758 = vsub.f32 %v2704, %v2743
      %v2759 = vsub.f32 %v2709, %v2746
      %v2760 = vsub.f32 %v2714, %v2749
      %v2761 = vmul.f32 %v2750, 1.442695
      %v2762 = vpow.pop %v2761
      %v2763 = vmul.f32 %v2751, 1.442695
      %v2764 = vpow.pop %v2763
      %v2765 = vmul.f32 %v2752, 1.442695
      %v2766 = vpow.pop %v2765
      %v2767 = vmul.f32 %v2753, 1.442695
      %v2768 = vpow.pop %v2767
      %v2769 = vmul.f32 %v2754, 1.442695
      %v2770 = vpow.pop %v2769
      %v2771 = vmul.f32 %v2755, 1.442695
      %v2772 = vpow.pop %v2771
      %v2773 = vmul.f32 %v2756, 1.442695
      %v2774 = vpow.pop %v2773
      %v2775 = vmul.f32 %v2757, 1.442695
      %v2776 = vpow.pop %v2775
      %v2777 = vmul.f32 %v2758, 1.442695
      %v2778 = vpow.pop %v2777
      %v2779 = vmul.f32 %v2759, 1.442695
      %v2780 = vpow.pop %v2779
      %v2781 = vmul.f32 %v2760, 1.442695
      %v2782 = vpow.pop %v2781
      %v2783 = vsel %vm1374, %v2762, 0.0
      %2784 = vadd.xlane.f32.xlu0 %v2783
      %v2785 = vpop.xlane.xlu0 %2784
      %v2786 = vsel %vm1374, %v2764, 0.0
      %2787 = vadd.xlane.f32.xlu0 %v2786
      %v2788 = vpop.xlane.xlu0 %2787
      %v2789 = vsel %vm1374, %v2766, 0.0
      %2790 = vadd.xlane.f32.xlu0 %v2789
      %v2791 = vpop.xlane.xlu0 %2790
      %v2792 = vsel %vm1374, %v2768, 0.0
      %2793 = vadd.xlane.f32.xlu0 %v2792
      %v2794 = vpop.xlane.xlu0 %2793
      %v2795 = vsel %vm1374, %v2770, 0.0
      %2796 = vadd.xlane.f32.xlu0 %v2795
      %v2797 = vpop.xlane.xlu0 %2796
      %v2798 = vsel %vm1374, %v2772, 0.0
      %2799 = vadd.xlane.f32.xlu0 %v2798
      %v2800 = vpop.xlane.xlu0 %2799
      %v2801 = vsel %vm1374, %v2774, 0.0
      %2802 = vadd.xlane.f32.xlu0 %v2801
      %v2803 = vpop.xlane.xlu0 %2802
      %v2804 = vsel %vm1374, %v2776, 0.0
      %2805 = vadd.xlane.f32.xlu0 %v2804
      %v2806 = vpop.xlane.xlu0 %2805
      %v2807 = vsel %vm1374, %v2778, 0.0
      %2808 = vadd.xlane.f32.xlu0 %v2807
      %v2809 = vpop.xlane.xlu0 %2808
      %v2810 = vsel %vm1374, %v2780, 0.0
      %2811 = vadd.xlane.f32.xlu0 %v2810
      %v2812 = vpop.xlane.xlu0 %2811
      %v2813 = vsel %vm1405, %v2782, 0.0
      %2814 = vadd.xlane.f32.xlu0 %v2813
      %v2815 = vpop.xlane.xlu0 %2814
      %v2816 = vrcp.pop %v2785
      %v2817 = vrcp.pop %v2788
      %v2818 = vrcp.pop %v2791
      %v2819 = vrcp.pop %v2794
      %v2820 = vrcp.pop %v2797
      %v2821 = vrcp.pop %v2800
      %v2822 = vrcp.pop %v2803
      %v2823 = vrcp.pop %v2806
      %v2824 = vrcp.pop %v2809
      %v2825 = vrcp.pop %v2812
      %v2826 = vrcp.pop %v2815
      %v2827 = vmul.f32 %v2762, %v2816
      %v2828 = vmul.f32 %v2764, %v2817
      %v2829 = vmul.f32 %v2766, %v2818
      %v2830 = vmul.f32 %v2768, %v2819
      %v2831 = vmul.f32 %v2770, %v2820
      %v2832 = vmul.f32 %v2772, %v2821
      %v2833 = vmul.f32 %v2774, %v2822
      %v2834 = vmul.f32 %v2776, %v2823
      %v2835 = vmul.f32 %v2778, %v2824
      %v2836 = vmul.f32 %v2780, %v2825
      %v2837 = vmul.f32 %v2782, %v2826
      %2838 = vrot.lane.b32.xlu0 %v1123, 64
      %v2839 = vpop.permute.xlu0 %2838
      %2840 = vrot.lane.b32.xlu0 %v1128, 64
      %v2841 = vpop.permute.xlu0 %2840
      %2842 = vrot.lane.b32.xlu0 %v1133, 64
      %v2843 = vpop.permute.xlu0 %2842
      %2844 = vrot.lane.b32.xlu0 %v1138, 64
      %v2845 = vpop.permute.xlu0 %2844
      %2846 = vrot.lane.b32.xlu0 %v1143, 64
      %v2847 = vpop.permute.xlu0 %2846
      %2848 = vrot.lane.b32.xlu0 %v1148, 64
      %v2849 = vpop.permute.xlu0 %2848
      %2850 = vrot.lane.b32.xlu0 %v1153, 64
      %v2851 = vpop.permute.xlu0 %2850
      %2852 = vrot.lane.b32.xlu0 %v1158, 64
      %v2853 = vpop.permute.xlu0 %2852
      %2854 = vrot.lane.b32.xlu0 %v1163, 64
      %v2855 = vpop.permute.xlu0 %2854
      %2856 = vrot.lane.b32.xlu0 %v1168, 64
      %v2857 = vpop.permute.xlu0 %2856
      %2858 = vrot.lane.b32.xlu0 %v1173, 64
      %v2859 = vpop.permute.xlu0 %2858
      %v2871 = vsel %vm1374, %v2827, 0
      %v2874 = vsel %vm1374, %v2828, 0
      %v2877 = vsel %vm1374, %v2829, 0
      %v2880 = vsel %vm1374, %v2830, 0
      %v2883 = vsel %vm1374, %v2831, 0
      %v2886 = vsel %vm1374, %v2832, 0
      %v2889 = vsel %vm1374, %v2833, 0
      %v2892 = vsel %vm1374, %v2834, 0
      %v2895 = vsel %vm1374, %v2835, 0
      %v2898 = vsel %vm1374, %v2836, 0
      %v2901 = vsel %vm1374, %v2837, 0
      %v2903 = vsel %vm1562, %v2859, 0
      %2905 = vmatprep.subr.mxu0 0.0
      %2906 = vmatpush1.msra.mxu0 0.0
      %2907 = vmatprep.subr.mxu0 0.0
      %2908 = vmatpush1.msra.mxu0 0.0
      %2909 = vmatprep.subr.mxu0 0.0
      %2910 = vmatpush1.msra.mxu0 0.0
      %2911 = vmatprep.subr.mxu0 0.0
      %2912 = vmatpush1.msra.mxu0 0.0
      %2913 = vmatprep.subr.mxu0 0.0
      %2914 = vmatpush1.msra.mxu0 0.0
      %2915 = vmatprep.subr.mxu0 0.0
      %2916 = vmatpush1.msra.mxu0 %v2903
      %2917 = vmatprep.subr.mxu0 0.0
      %2918 = vmatpush1.msra.mxu0 %v2857
      %2919 = vmatprep.subr.mxu0 0.0
      %2920 = vmatpush1.msra.mxu0 %v2855
      %2921 = vmatprep.subr.mxu0 0.0
      %2922 = vmatpush1.msra.mxu0 %v2853
      %2923 = vmatprep.subr.mxu0 0.0
      %2924 = vmatpush1.msra.mxu0 %v2851
      %2925 = vmatprep.subr.mxu0 0.0
      %2926 = vmatpush1.msra.mxu0 %v2849
      %2927 = vmatprep.subr.mxu0 0.0
      %2928 = vmatpush1.msra.mxu0 %v2847
      %2929 = vmatprep.subr.mxu0 0.0
      %2930 = vmatpush1.msra.mxu0 %v2845
      %2931 = vmatprep.subr.mxu0 0.0
      %2932 = vmatpush1.msra.mxu0 %v2843
      %2933 = vmatprep.subr.mxu0 0.0
      %2934 = vmatpush1.msra.mxu0 %v2841
      %2935 = vmatprep.subr.mxu0 0.0
      %2936 = vmatpush1.msra.mxu0 %v2839
      %2937 = vmatprep.subr.mxu0 0.0
      %2938 = vmatpush2.msra.mxu0 0.0
      %2939 = vmatprep.subr.mxu0 0.0
      %2940 = vmatpush2.msra.mxu0 0.0
      %2941 = vmatprep.subr.mxu0 0.0
      %2942 = vmatpush2.msra.mxu0 0.0
      %2943 = vmatprep.subr.mxu0 0.0
      %2944 = vmatpush2.msra.mxu0 0.0
      %2945 = vmatprep.subr.mxu0 0.0
      %2946 = vmatpush2.msra.mxu0 0.0
      %2947 = vmatprep.subr.mxu0 0.0
      %2948 = vmatpush2.msra.mxu0 0.0
      %2949 = vmatprep.subr.mxu0 0.0
      %2950 = vmatpush2.msra.mxu0 0.0
      %2951 = vmatprep.subr.mxu0 0.0
      %2952 = vmatpush2.msra.mxu0 0.0
      %2953 = vmatprep.subr.mxu0 0.0
      %2954 = vmatpush2.msra.mxu0 0.0
      %2955 = vmatprep.subr.mxu0 0.0
      %2956 = vmatpush2.msra.mxu0 0.0
      %2957 = vmatprep.subr.mxu0 0.0
      %2958 = vmatpush2.msra.mxu0 0.0
      %2959 = vmatprep.subr.mxu0 0.0
      %2960 = vmatpush2.msra.mxu0 0.0
      %2961 = vmatprep.subr.mxu0 0.0
      %2962 = vmatpush2.msra.mxu0 0.0
      %2963 = vmatprep.subr.mxu0 0.0
      %2964 = vmatpush2.msra.mxu0 0.0
      %2965 = vmatprep.subr.mxu0 0.0
      %2966 = vmatpush2.msra.mxu0 0.0
      %2967 = vmatprep.subr.mxu0 0.0
      %2968 = vmatpush2.msra.mxu0 0.0
      %2969 = vmatprep.mubr.f32.mxu0 0.0
      %2970 = vmatmul.mubr.f32.gmra.mxu0 %v2871
      %v2971 = vpop.f32.mrf.mxu0
      %v2972 = vadd.f32 0.0, %v2971
      %v2973 = vpop.f32.mrf.mxu0
      %2974 = vmatprep.mubr.f32.mxu0 0.0
      %2975 = vmatmul.mubr.f32.gmra.mxu0 %v2874
      %v2976 = vpop.f32.mrf.mxu0
      %v2977 = vadd.f32 0.0, %v2976
      %v2978 = vpop.f32.mrf.mxu0
      %2979 = vmatprep.mubr.f32.mxu0 0.0
      %2980 = vmatmul.mubr.f32.gmra.mxu0 %v2877
      %v2981 = vpop.f32.mrf.mxu0
      %v2982 = vadd.f32 0.0, %v2981
      %v2983 = vpop.f32.mrf.mxu0
      %2984 = vmatprep.mubr.f32.mxu0 0.0
      %2985 = vmatmul.mubr.f32.gmra.mxu0 %v2880
      %v2986 = vpop.f32.mrf.mxu0
      %v2987 = vadd.f32 0.0, %v2986
      %v2988 = vpop.f32.mrf.mxu0
      %2989 = vmatprep.mubr.f32.mxu0 0.0
      %2990 = vmatmul.mubr.f32.gmra.mxu0 %v2883
      %v2991 = vpop.f32.mrf.mxu0
      %v2992 = vadd.f32 0.0, %v2991
      %v2993 = vpop.f32.mrf.mxu0
      %2994 = vmatprep.mubr.f32.mxu0 0.0
      %2995 = vmatmul.mubr.f32.gmra.mxu0 %v2886
      %v2996 = vpop.f32.mrf.mxu0
      %v2997 = vadd.f32 0.0, %v2996
      %v2998 = vpop.f32.mrf.mxu0
      %2999 = vmatprep.mubr.f32.mxu0 0.0
      %3000 = vmatmul.mubr.f32.gmra.mxu0 %v2889
      %v3001 = vpop.f32.mrf.mxu0
      %v3002 = vadd.f32 0.0, %v3001
      %v3003 = vpop.f32.mrf.mxu0
      %3004 = vmatprep.mubr.f32.mxu0 0.0
      %3005 = vmatmul.mubr.f32.gmra.mxu0 %v2892
      %v3006 = vpop.f32.mrf.mxu0
      %v3007 = vadd.f32 0.0, %v3006
      %v3008 = vpop.f32.mrf.mxu0
      %3009 = vmatprep.mubr.f32.mxu0 0.0
      %3010 = vmatmul.mubr.f32.gmra.mxu0 %v2895
      %v3011 = vpop.f32.mrf.mxu0
      %v3012 = vadd.f32 0.0, %v3011
      %v3013 = vpop.f32.mrf.mxu0
      %3014 = vmatprep.mubr.f32.mxu0 0.0
      %3015 = vmatmul.mubr.f32.gmra.mxu0 %v2898
      %v3016 = vpop.f32.mrf.mxu0
      %v3017 = vadd.f32 0.0, %v3016
      %v3018 = vpop.f32.mrf.mxu0
      %3019 = vmatprep.mubr.f32.mxu0 0.0
      %3020 = vmatmul.mubr.f32.gmra.mxu0 %v2901
      %v3021 = vpop.f32.mrf.mxu0
      %v3022 = vadd.f32 0.0, %v3021
      %v3023 = vpop.f32.mrf.mxu0
      %3024 = vdwg.mxu0
      %v3025 = vld [vmem:[%s10 + $0x10] sm:$0xff]
      %v3027 = vsel %vm1187, %v2972, 0
      %v3030 = vsel %vm1187, %v2977, 0
      %v3033 = vsel %vm1187, %v2982, 0
      %v3036 = vsel %vm1187, %v2987, 0
      %v3039 = vsel %vm1187, %v2992, 0
      %v3042 = vsel %vm1187, %v2997, 0
      %v3045 = vsel %vm1187, %v3002, 0
      %v3048 = vsel %vm1187, %v3007, 0
      %v3051 = vsel %vm1187, %v3012, 0
      %v3054 = vsel %vm1187, %v3017, 0
      %v3057 = vsel %vm1187, %v3022, 0
      %3059 = vmatprep.subr.mxu0 0.0
      %3060 = vmatpush1.msra.mxu0 0.0
      %3061 = vmatprep.subr.mxu0 0.0
      %3062 = vmatpush1.msra.mxu0 0.0
      %3063 = vmatprep.subr.mxu0 0.0
      %3064 = vmatpush1.msra.mxu0 0.0
      %3065 = vmatprep.subr.mxu0 0.0
      %3066 = vmatpush1.msra.mxu0 0.0
      %3067 = vmatprep.subr.mxu0 0.0
      %3068 = vmatpush1.msra.mxu0 0.0
      %3069 = vmatprep.subr.mxu0 0.0
      %3070 = vmatpush1.msra.mxu0 0.0
      %3071 = vmatprep.subr.mxu0 0.0
      %3072 = vmatpush1.msra.mxu0 0.0
      %3073 = vmatprep.subr.mxu0 0.0
      %3074 = vmatpush1.msra.mxu0 0.0
      %3075 = vmatprep.subr.mxu0 0.0
      %3076 = vmatpush1.msra.mxu0 0.0
      %3077 = vmatprep.subr.mxu0 0.0
      %3078 = vmatpush1.msra.mxu0 0.0
      %3079 = vmatprep.subr.mxu0 0.0
      %3080 = vmatpush1.msra.mxu0 0.0
      %3081 = vmatprep.subr.mxu0 0.0
      %3082 = vmatpush1.msra.mxu0 0.0
      %3083 = vmatprep.subr.mxu0 0.0
      %3084 = vmatpush1.msra.mxu0 0.0
      %3085 = vmatprep.subr.mxu0 0.0
      %3086 = vmatpush1.msra.mxu0 0.0
      %3087 = vmatprep.subr.mxu0 0.0
      %3088 = vmatpush1.msra.mxu0 0.0
      %3089 = vmatprep.subr.mxu0 0.0
      %3090 = vmatpush1.msra.mxu0 %v3025
      %3091 = vmatprep.subr.mxu0 0.0
      %3092 = vmatpush2.msra.mxu0 0.0
      %3093 = vmatprep.subr.mxu0 0.0
      %3094 = vmatpush2.msra.mxu0 0.0
      %3095 = vmatprep.subr.mxu0 0.0
      %3096 = vmatpush2.msra.mxu0 0.0
      %3097 = vmatprep.subr.mxu0 0.0
      %3098 = vmatpush2.msra.mxu0 0.0
      %3099 = vmatprep.subr.mxu0 0.0
      %3100 = vmatpush2.msra.mxu0 0.0
      %3101 = vmatprep.subr.mxu0 0.0
      %3102 = vmatpush2.msra.mxu0 0.0
      %3103 = vmatprep.subr.mxu0 0.0
      %3104 = vmatpush2.msra.mxu0 0.0
      %3105 = vmatprep.subr.mxu0 0.0
      %3106 = vmatpush2.msra.mxu0 0.0
      %3107 = vmatprep.subr.mxu0 0.0
      %3108 = vmatpush2.msra.mxu0 0.0
      %3109 = vmatprep.subr.mxu0 0.0
      %3110 = vmatpush2.msra.mxu0 0.0
      %3111 = vmatprep.subr.mxu0 0.0
      %3112 = vmatpush2.msra.mxu0 0.0
      %3113 = vmatprep.subr.mxu0 0.0
      %3114 = vmatpush2.msra.mxu0 0.0
      %3115 = vmatprep.subr.mxu0 0.0
      %3116 = vmatpush2.msra.mxu0 0.0
      %3117 = vmatprep.subr.mxu0 0.0
      %3118 = vmatpush2.msra.mxu0 0.0
      %3119 = vmatprep.subr.mxu0 0.0
      %3120 = vmatpush2.msra.mxu0 0.0
      %3121 = vmatprep.subr.mxu0 0.0
      %3122 = vmatpush2.msra.mxu0 0.0
      %3123 = vmatprep.mubr.f32.mxu0 0.0
      %3124 = vmatmul.mubr.f32.gmra.mxu0 %v3027
      %v3125 = vpop.f32.mrf.mxu0
      %v3126 = vadd.f32 0.0, %v3125
      %v3127 = vpop.f32.mrf.mxu0
      %3128 = vmatprep.mubr.f32.mxu0 0.0
      %3129 = vmatmul.mubr.f32.gmra.mxu0 %v3030
      %v3130 = vpop.f32.mrf.mxu0
      %v3131 = vadd.f32 0.0, %v3130
      %v3132 = vpop.f32.mrf.mxu0
      %3133 = vmatprep.mubr.f32.mxu0 0.0
      %3134 = vmatmul.mubr.f32.gmra.mxu0 %v3033
      %v3135 = vpop.f32.mrf.mxu0
      %v3136 = vadd.f32 0.0, %v3135
      %v3137 = vpop.f32.mrf.mxu0
      %3138 = vmatprep.mubr.f32.mxu0 0.0
      %3139 = vmatmul.mubr.f32.gmra.mxu0 %v3036
      %v3140 = vpop.f32.mrf.mxu0
      %v3141 = vadd.f32 0.0, %v3140
      %v3142 = vpop.f32.mrf.mxu0
      %3143 = vmatprep.mubr.f32.mxu0 0.0
      %3144 = vmatmul.mubr.f32.gmra.mxu0 %v3039
      %v3145 = vpop.f32.mrf.mxu0
      %v3146 = vadd.f32 0.0, %v3145
      %v3147 = vpop.f32.mrf.mxu0
      %3148 = vmatprep.mubr.f32.mxu0 0.0
      %3149 = vmatmul.mubr.f32.gmra.mxu0 %v3042
      %v3150 = vpop.f32.mrf.mxu0
      %v3151 = vadd.f32 0.0, %v3150
      %v3152 = vpop.f32.mrf.mxu0
      %3153 = vmatprep.mubr.f32.mxu0 0.0
      %3154 = vmatmul.mubr.f32.gmra.mxu0 %v3045
      %v3155 = vpop.f32.mrf.mxu0
      %v3156 = vadd.f32 0.0, %v3155
      %v3157 = vpop.f32.mrf.mxu0
      %3158 = vmatprep.mubr.f32.mxu0 0.0
      %3159 = vmatmul.mubr.f32.gmra.mxu0 %v3048
      %v3160 = vpop.f32.mrf.mxu0
      %v3161 = vadd.f32 0.0, %v3160
      %v3162 = vpop.f32.mrf.mxu0
      %3163 = vmatprep.mubr.f32.mxu0 0.0
      %3164 = vmatmul.mubr.f32.gmra.mxu0 %v3051
      %v3165 = vpop.f32.mrf.mxu0
      %v3166 = vadd.f32 0.0, %v3165
      %v3167 = vpop.f32.mrf.mxu0
      %3168 = vmatprep.mubr.f32.mxu0 0.0
      %3169 = vmatmul.mubr.f32.gmra.mxu0 %v3054
      %v3170 = vpop.f32.mrf.mxu0
      %v3171 = vadd.f32 0.0, %v3170
      %v3172 = vpop.f32.mrf.mxu0
      %3173 = vmatprep.mubr.f32.mxu0 0.0
      %3174 = vmatmul.mubr.f32.gmra.mxu0 %v3057
      %v3175 = vpop.f32.mrf.mxu0
      %v3176 = vadd.f32 0.0, %v3175
      %v3177 = vpop.f32.mrf.mxu0
      %3178 = vdwg.mxu0
      %v3179 = vadd.f32 %v2456, %v3126
      %v3180 = vadd.f32 %v2461, %v3131
      %v3181 = vadd.f32 %v2466, %v3136
      %v3182 = vadd.f32 %v2471, %v3141
      %v3183 = vadd.f32 %v2476, %v3146
      %v3184 = vadd.f32 %v2481, %v3151
      %v3185 = vadd.f32 %v2486, %v3156
      %v3186 = vadd.f32 %v2491, %v3161
      %v3187 = vadd.f32 %v2496, %v3166
      %v3188 = vadd.f32 %v2501, %v3171
      %v3189 = vadd.f32 %v2506, %v3176
      %3190 = vrot.lane.b32.xlu0 %v1176, 104
      %v3191 = vpop.permute.xlu0 %3190
      %3192 = vrot.lane.b32.xlu0 %v1177, 104
      %v3193 = vpop.permute.xlu0 %3192
      %3194 = vrot.lane.b32.xlu0 %v1178, 104
      %v3195 = vpop.permute.xlu0 %3194
      %3196 = vrot.lane.b32.xlu0 %v1179, 104
      %v3197 = vpop.permute.xlu0 %3196
      %3198 = vrot.lane.b32.xlu0 %v1180, 104
      %v3199 = vpop.permute.xlu0 %3198
      %3200 = vrot.lane.b32.xlu0 %v1181, 104
      %v3201 = vpop.permute.xlu0 %3200
      %3202 = vrot.lane.b32.xlu0 %v1182, 104
      %v3203 = vpop.permute.xlu0 %3202
      %3204 = vrot.lane.b32.xlu0 %v1183, 104
      %v3205 = vpop.permute.xlu0 %3204
      %3206 = vrot.lane.b32.xlu0 %v1184, 104
      %v3207 = vpop.permute.xlu0 %3206
      %3208 = vrot.lane.b32.xlu0 %v1185, 104
      %v3209 = vpop.permute.xlu0 %3208
      %3210 = vrot.lane.b32.xlu0 %v1186, 104
      %v3211 = vpop.permute.xlu0 %3210
      %3212 = vrot.lane.b32.xlu0 %v1123, 104
      %v3213 = vpop.permute.xlu0 %3212
      %3214 = vrot.lane.b32.xlu0 %v1128, 104
      %v3215 = vpop.permute.xlu0 %3214
      %3216 = vrot.lane.b32.xlu0 %v1133, 104
      %v3217 = vpop.permute.xlu0 %3216
      %3218 = vrot.lane.b32.xlu0 %v1138, 104
      %v3219 = vpop.permute.xlu0 %3218
      %3220 = vrot.lane.b32.xlu0 %v1143, 104
      %v3221 = vpop.permute.xlu0 %3220
      %3222 = vrot.lane.b32.xlu0 %v1148, 104
      %v3223 = vpop.permute.xlu0 %3222
      %3224 = vrot.lane.b32.xlu0 %v1153, 104
      %v3225 = vpop.permute.xlu0 %3224
      %3226 = vrot.lane.b32.xlu0 %v1158, 104
      %v3227 = vpop.permute.xlu0 %3226
      %3228 = vrot.lane.b32.xlu0 %v1163, 104
      %v3229 = vpop.permute.xlu0 %3228
      %3230 = vrot.lane.b32.xlu0 %v1168, 104
      %v3231 = vpop.permute.xlu0 %3230
      %3232 = vrot.lane.b32.xlu0 %v1173, 104
      %v3233 = vpop.permute.xlu0 %3232
      %v3234 = vsel %vm1187, %v3191, 0
      %v3236 = vsel %vm1187, %v3193, 0
      %v3238 = vsel %vm1187, %v3195, 0
      %v3240 = vsel %vm1187, %v3197, 0
      %v3242 = vsel %vm1187, %v3199, 0
      %v3244 = vsel %vm1187, %v3201, 0
      %v3246 = vsel %vm1187, %v3203, 0
      %v3248 = vsel %vm1187, %v3205, 0
      %v3250 = vsel %vm1187, %v3207, 0
      %v3252 = vsel %vm1187, %v3209, 0
      %v3254 = vsel %vm1187, %v3211, 0
      %v3256 = vsel %vm1187, %v3213, 0
      %v3258 = vsel %vm1187, %v3215, 0
      %v3260 = vsel %vm1187, %v3217, 0
      %v3262 = vsel %vm1187, %v3219, 0
      %v3264 = vsel %vm1187, %v3221, 0
      %v3266 = vsel %vm1187, %v3223, 0
      %v3268 = vsel %vm1187, %v3225, 0
      %v3270 = vsel %vm1187, %v3227, 0
      %v3272 = vsel %vm1187, %v3229, 0
      %v3274 = vsel %vm1187, %v3231, 0
      %v3276 = vsel %vm1187, %v3233, 0
      %3278 = vmatprep.subr.mxu0 0.0
      %3279 = vmatpush1.xpose.msra.mxu0 0.0
      %3280 = vmatprep.subr.mxu0 0.0
      %3281 = vmatpush1.xpose.msra.mxu0 0.0
      %3282 = vmatprep.subr.mxu0 0.0
      %3283 = vmatpush1.xpose.msra.mxu0 0.0
      %3284 = vmatprep.subr.mxu0 0.0
      %3285 = vmatpush1.xpose.msra.mxu0 0.0
      %3286 = vmatprep.subr.mxu0 0.0
      %3287 = vmatpush1.xpose.msra.mxu0 0.0
      %3288 = vmatprep.subr.mxu0 0.0
      %3289 = vmatpush1.xpose.msra.mxu0 %v3276
      %3290 = vmatprep.subr.mxu0 0.0
      %3291 = vmatpush1.xpose.msra.mxu0 %v3274
      %3292 = vmatprep.subr.mxu0 0.0
      %3293 = vmatpush1.xpose.msra.mxu0 %v3272
      %3294 = vmatprep.subr.mxu0 0.0
      %3295 = vmatpush1.xpose.msra.mxu0 %v3270
      %3296 = vmatprep.subr.mxu0 0.0
      %3297 = vmatpush1.xpose.msra.mxu0 %v3268
      %3298 = vmatprep.subr.mxu0 0.0
      %3299 = vmatpush1.xpose.msra.mxu0 %v3266
      %3300 = vmatprep.subr.mxu0 0.0
      %3301 = vmatpush1.xpose.msra.mxu0 %v3264
      %3302 = vmatprep.subr.mxu0 0.0
      %3303 = vmatpush1.xpose.msra.mxu0 %v3262
      %3304 = vmatprep.subr.mxu0 0.0
      %3305 = vmatpush1.xpose.msra.mxu0 %v3260
      %3306 = vmatprep.subr.mxu0 0.0
      %3307 = vmatpush1.xpose.msra.mxu0 %v3258
      %3308 = vmatprep.subr.mxu0 0.0
      %3309 = vmatpush1.xpose.msra.mxu0 %v3256
      %3310 = vmatprep.subr.mxu0 0.0
      %3311 = vmatpush2.xpose.msra.mxu0 0.0
      %3312 = vmatprep.subr.mxu0 0.0
      %3313 = vmatpush2.xpose.msra.mxu0 0.0
      %3314 = vmatprep.subr.mxu0 0.0
      %3315 = vmatpush2.xpose.msra.mxu0 0.0
      %3316 = vmatprep.subr.mxu0 0.0
      %3317 = vmatpush2.xpose.msra.mxu0 0.0
      %3318 = vmatprep.subr.mxu0 0.0
      %3319 = vmatpush2.xpose.msra.mxu0 0.0
      %3320 = vmatprep.subr.mxu0 0.0
      %3321 = vmatpush2.xpose.msra.mxu0 0.0
      %3322 = vmatprep.subr.mxu0 0.0
      %3323 = vmatpush2.xpose.msra.mxu0 0.0
      %3324 = vmatprep.subr.mxu0 0.0
      %3325 = vmatpush2.xpose.msra.mxu0 0.0
      %3326 = vmatprep.subr.mxu0 0.0
      %3327 = vmatpush2.xpose.msra.mxu0 0.0
      %3328 = vmatprep.subr.mxu0 0.0
      %3329 = vmatpush2.xpose.msra.mxu0 0.0
      %3330 = vmatprep.subr.mxu0 0.0
      %3331 = vmatpush2.xpose.msra.mxu0 0.0
      %3332 = vmatprep.subr.mxu0 0.0
      %3333 = vmatpush2.xpose.msra.mxu0 0.0
      %3334 = vmatprep.subr.mxu0 0.0
      %3335 = vmatpush2.xpose.msra.mxu0 0.0
      %3336 = vmatprep.subr.mxu0 0.0
      %3337 = vmatpush2.xpose.msra.mxu0 0.0
      %3338 = vmatprep.subr.mxu0 0.0
      %3339 = vmatpush2.xpose.msra.mxu0 0.0
      %3340 = vmatprep.subr.mxu0 0.0
      %3341 = vmatpush2.xpose.msra.mxu0 0.0
      %3342 = vmatprep.mubr.f32.mxu0 0.0
      %3343 = vmatmul.mubr.f32.gmra.mxu0 %v3234
      %v3344 = vpop.f32.mrf.mxu0
      %v3345 = vadd.f32 0.0, %v3344
      %v3346 = vpop.f32.mrf.mxu0
      %3347 = vmatprep.mubr.f32.mxu0 0.0
      %3348 = vmatmul.mubr.f32.gmra.mxu0 %v3236
      %v3349 = vpop.f32.mrf.mxu0
      %v3350 = vadd.f32 0.0, %v3349
      %v3351 = vpop.f32.mrf.mxu0
      %3352 = vmatprep.mubr.f32.mxu0 0.0
      %3353 = vmatmul.mubr.f32.gmra.mxu0 %v3238
      %v3354 = vpop.f32.mrf.mxu0
      %v3355 = vadd.f32 0.0, %v3354
      %v3356 = vpop.f32.mrf.mxu0
      %3357 = vmatprep.mubr.f32.mxu0 0.0
      %3358 = vmatmul.mubr.f32.gmra.mxu0 %v3240
      %v3359 = vpop.f32.mrf.mxu0
      %v3360 = vadd.f32 0.0, %v3359
      %v3361 = vpop.f32.mrf.mxu0
      %3362 = vmatprep.mubr.f32.mxu0 0.0
      %3363 = vmatmul.mubr.f32.gmra.mxu0 %v3242
      %v3364 = vpop.f32.mrf.mxu0
      %v3365 = vadd.f32 0.0, %v3364
      %v3366 = vpop.f32.mrf.mxu0
      %3367 = vmatprep.mubr.f32.mxu0 0.0
      %3368 = vmatmul.mubr.f32.gmra.mxu0 %v3244
      %v3369 = vpop.f32.mrf.mxu0
      %v3370 = vadd.f32 0.0, %v3369
      %v3371 = vpop.f32.mrf.mxu0
      %3372 = vmatprep.mubr.f32.mxu0 0.0
      %3373 = vmatmul.mubr.f32.gmra.mxu0 %v3246
      %v3374 = vpop.f32.mrf.mxu0
      %v3375 = vadd.f32 0.0, %v3374
      %v3376 = vpop.f32.mrf.mxu0
      %3377 = vmatprep.mubr.f32.mxu0 0.0
      %3378 = vmatmul.mubr.f32.gmra.mxu0 %v3248
      %v3379 = vpop.f32.mrf.mxu0
      %v3380 = vadd.f32 0.0, %v3379
      %v3381 = vpop.f32.mrf.mxu0
      %3382 = vmatprep.mubr.f32.mxu0 0.0
      %3383 = vmatmul.mubr.f32.gmra.mxu0 %v3250
      %v3384 = vpop.f32.mrf.mxu0
      %v3385 = vadd.f32 0.0, %v3384
      %v3386 = vpop.f32.mrf.mxu0
      %3387 = vmatprep.mubr.f32.mxu0 0.0
      %3388 = vmatmul.mubr.f32.gmra.mxu0 %v3252
      %v3389 = vpop.f32.mrf.mxu0
      %v3390 = vadd.f32 0.0, %v3389
      %v3391 = vpop.f32.mrf.mxu0
      %3392 = vmatprep.mubr.f32.mxu0 0.0
      %3393 = vmatmul.mubr.f32.gmra.mxu0 %v3254
      %v3394 = vpop.f32.mrf.mxu0
      %v3395 = vadd.f32 0.0, %v3394
      %v3396 = vpop.f32.mrf.mxu0
      %3397 = vdwg.mxu0
      %v3398 = vsel %vm1374, %v3345, -inf
      %3399 = vmax.xlane.f32.xlu0 %v3398
      %v3400 = vpop.xlane.xlu0 %3399
      %v3401 = vsel %vm1374, %v3350, -inf
      %3402 = vmax.xlane.f32.xlu0 %v3401
      %v3403 = vpop.xlane.xlu0 %3402
      %v3404 = vsel %vm1374, %v3355, -inf
      %3405 = vmax.xlane.f32.xlu0 %v3404
      %v3406 = vpop.xlane.xlu0 %3405
      %v3407 = vsel %vm1374, %v3360, -inf
      %3408 = vmax.xlane.f32.xlu0 %v3407
      %v3409 = vpop.xlane.xlu0 %3408
      %v3410 = vsel %vm1374, %v3365, -inf
      %3411 = vmax.xlane.f32.xlu0 %v3410
      %v3412 = vpop.xlane.xlu0 %3411
      %v3413 = vsel %vm1374, %v3370, -inf
      %3414 = vmax.xlane.f32.xlu0 %v3413
      %v3415 = vpop.xlane.xlu0 %3414
      %v3416 = vsel %vm1374, %v3375, -inf
      %3417 = vmax.xlane.f32.xlu0 %v3416
      %v3418 = vpop.xlane.xlu0 %3417
      %v3419 = vsel %vm1374, %v3380, -inf
      %3420 = vmax.xlane.f32.xlu0 %v3419
      %v3421 = vpop.xlane.xlu0 %3420
      %v3422 = vsel %vm1374, %v3385, -inf
      %3423 = vmax.xlane.f32.xlu0 %v3422
      %v3424 = vpop.xlane.xlu0 %3423
      %v3425 = vsel %vm1374, %v3390, -inf
      %3426 = vmax.xlane.f32.xlu0 %v3425
      %v3427 = vpop.xlane.xlu0 %3426
      %v3428 = vsel %vm1405, %v3395, -inf
      %3429 = vmax.xlane.f32.xlu0 %v3428
      %v3430 = vpop.xlane.xlu0 %3429
      %v3431 = vsub.f32 %v3345, %v3400
      %v3432 = vsub.f32 %v3350, %v3403
      %v3433 = vsub.f32 %v3355, %v3406
      %v3434 = vsub.f32 %v3360, %v3409
      %v3435 = vsub.f32 %v3365, %v3412
      %v3436 = vsub.f32 %v3370, %v3415
      %v3437 = vsub.f32 %v3375, %v3418
      %v3438 = vsub.f32 %v3380, %v3421
      %v3439 = vsub.f32 %v3385, %v3424
      %v3440 = vsub.f32 %v3390, %v3427
      %v3441 = vsub.f32 %v3395, %v3430
      %v3442 = vmul.f32 %v3431, 1.442695
      %v3443 = vpow.pop %v3442
      %v3444 = vmul.f32 %v3432, 1.442695
      %v3445 = vpow.pop %v3444
      %v3446 = vmul.f32 %v3433, 1.442695
      %v3447 = vpow.pop %v3446
      %v3448 = vmul.f32 %v3434, 1.442695
      %v3449 = vpow.pop %v3448
      %v3450 = vmul.f32 %v3435, 1.442695
      %v3451 = vpow.pop %v3450
      %v3452 = vmul.f32 %v3436, 1.442695
      %v3453 = vpow.pop %v3452
      %v3454 = vmul.f32 %v3437, 1.442695
      %v3455 = vpow.pop %v3454
      %v3456 = vmul.f32 %v3438, 1.442695
      %v3457 = vpow.pop %v3456
      %v3458 = vmul.f32 %v3439, 1.442695
      %v3459 = vpow.pop %v3458
      %v3460 = vmul.f32 %v3440, 1.442695
      %v3461 = vpow.pop %v3460
      %v3462 = vmul.f32 %v3441, 1.442695
      %v3463 = vpow.pop %v3462
      %v3464 = vsel %vm1374, %v3443, 0.0
      %3465 = vadd.xlane.f32.xlu0 %v3464
      %v3466 = vpop.xlane.xlu0 %3465
      %v3467 = vsel %vm1374, %v3445, 0.0
      %3468 = vadd.xlane.f32.xlu0 %v3467
      %v3469 = vpop.xlane.xlu0 %3468
      %v3470 = vsel %vm1374, %v3447, 0.0
      %3471 = vadd.xlane.f32.xlu0 %v3470
      %v3472 = vpop.xlane.xlu0 %3471
      %v3473 = vsel %vm1374, %v3449, 0.0
      %3474 = vadd.xlane.f32.xlu0 %v3473
      %v3475 = vpop.xlane.xlu0 %3474
      %v3476 = vsel %vm1374, %v3451, 0.0
      %3477 = vadd.xlane.f32.xlu0 %v3476
      %v3478 = vpop.xlane.xlu0 %3477
      %v3479 = vsel %vm1374, %v3453, 0.0
      %3480 = vadd.xlane.f32.xlu0 %v3479
      %v3481 = vpop.xlane.xlu0 %3480
      %v3482 = vsel %vm1374, %v3455, 0.0
      %3483 = vadd.xlane.f32.xlu0 %v3482
      %v3484 = vpop.xlane.xlu0 %3483
      %v3485 = vsel %vm1374, %v3457, 0.0
      %3486 = vadd.xlane.f32.xlu0 %v3485
      %v3487 = vpop.xlane.xlu0 %3486
      %v3488 = vsel %vm1374, %v3459, 0.0
      %3489 = vadd.xlane.f32.xlu0 %v3488
      %v3490 = vpop.xlane.xlu0 %3489
      %v3491 = vsel %vm1374, %v3461, 0.0
      %3492 = vadd.xlane.f32.xlu0 %v3491
      %v3493 = vpop.xlane.xlu0 %3492
      %v3494 = vsel %vm1405, %v3463, 0.0
      %3495 = vadd.xlane.f32.xlu0 %v3494
      %v3496 = vpop.xlane.xlu0 %3495
      %v3497 = vrcp.pop %v3466
      %v3498 = vrcp.pop %v3469
      %v3499 = vrcp.pop %v3472
      %v3500 = vrcp.pop %v3475
      %v3501 = vrcp.pop %v3478
      %v3502 = vrcp.pop %v3481
      %v3503 = vrcp.pop %v3484
      %v3504 = vrcp.pop %v3487
      %v3505 = vrcp.pop %v3490
      %v3506 = vrcp.pop %v3493
      %v3507 = vrcp.pop %v3496
      %v3508 = vmul.f32 %v3443, %v3497
      %v3509 = vmul.f32 %v3445, %v3498
      %v3510 = vmul.f32 %v3447, %v3499
      %v3511 = vmul.f32 %v3449, %v3500
      %v3512 = vmul.f32 %v3451, %v3501
      %v3513 = vmul.f32 %v3453, %v3502
      %v3514 = vmul.f32 %v3455, %v3503
      %v3515 = vmul.f32 %v3457, %v3504
      %v3516 = vmul.f32 %v3459, %v3505
      %v3517 = vmul.f32 %v3461, %v3506
      %v3518 = vmul.f32 %v3463, %v3507
      %3519 = vrot.lane.b32.xlu0 %v1123, 56
      %v3520 = vpop.permute.xlu0 %3519
      %3521 = vrot.lane.b32.xlu0 %v1128, 56
      %v3522 = vpop.permute.xlu0 %3521
      %3523 = vrot.lane.b32.xlu0 %v1133, 56
      %v3524 = vpop.permute.xlu0 %3523
      %3525 = vrot.lane.b32.xlu0 %v1138, 56
      %v3526 = vpop.permute.xlu0 %3525
      %3527 = vrot.lane.b32.xlu0 %v1143, 56
      %v3528 = vpop.permute.xlu0 %3527
      %3529 = vrot.lane.b32.xlu0 %v1148, 56
      %v3530 = vpop.permute.xlu0 %3529
      %3531 = vrot.lane.b32.xlu0 %v1153, 56
      %v3532 = vpop.permute.xlu0 %3531
      %3533 = vrot.lane.b32.xlu0 %v1158, 56
      %v3534 = vpop.permute.xlu0 %3533
      %3535 = vrot.lane.b32.xlu0 %v1163, 56
      %v3536 = vpop.permute.xlu0 %3535
      %3537 = vrot.lane.b32.xlu0 %v1168, 56
      %v3538 = vpop.permute.xlu0 %3537
      %3539 = vrot.lane.b32.xlu0 %v1173, 56
      %v3540 = vpop.permute.xlu0 %3539
      %v3552 = vsel %vm1374, %v3508, 0
      %v3555 = vsel %vm1374, %v3509, 0
      %v3558 = vsel %vm1374, %v3510, 0
      %v3561 = vsel %vm1374, %v3511, 0
      %v3564 = vsel %vm1374, %v3512, 0
      %v3567 = vsel %vm1374, %v3513, 0
      %v3570 = vsel %vm1374, %v3514, 0
      %v3573 = vsel %vm1374, %v3515, 0
      %v3576 = vsel %vm1374, %v3516, 0
      %v3579 = vsel %vm1374, %v3517, 0
      %v3582 = vsel %vm1374, %v3518, 0
      %v3584 = vsel %vm1562, %v3540, 0
      %3586 = vmatprep.subr.mxu0 0.0
      %3587 = vmatpush1.msra.mxu0 0.0
      %3588 = vmatprep.subr.mxu0 0.0
      %3589 = vmatpush1.msra.mxu0 0.0
      %3590 = vmatprep.subr.mxu0 0.0
      %3591 = vmatpush1.msra.mxu0 0.0
      %3592 = vmatprep.subr.mxu0 0.0
      %3593 = vmatpush1.msra.mxu0 0.0
      %3594 = vmatprep.subr.mxu0 0.0
      %3595 = vmatpush1.msra.mxu0 0.0
      %3596 = vmatprep.subr.mxu0 0.0
      %3597 = vmatpush1.msra.mxu0 %v3584
      %3598 = vmatprep.subr.mxu0 0.0
      %3599 = vmatpush1.msra.mxu0 %v3538
      %3600 = vmatprep.subr.mxu0 0.0
      %3601 = vmatpush1.msra.mxu0 %v3536
      %3602 = vmatprep.subr.mxu0 0.0
      %3603 = vmatpush1.msra.mxu0 %v3534
      %3604 = vmatprep.subr.mxu0 0.0
      %3605 = vmatpush1.msra.mxu0 %v3532
      %3606 = vmatprep.subr.mxu0 0.0
      %3607 = vmatpush1.msra.mxu0 %v3530
      %3608 = vmatprep.subr.mxu0 0.0
      %3609 = vmatpush1.msra.mxu0 %v3528
      %3610 = vmatprep.subr.mxu0 0.0
      %3611 = vmatpush1.msra.mxu0 %v3526
      %3612 = vmatprep.subr.mxu0 0.0
      %3613 = vmatpush1.msra.mxu0 %v3524
      %3614 = vmatprep.subr.mxu0 0.0
      %3615 = vmatpush1.msra.mxu0 %v3522
      %3616 = vmatprep.subr.mxu0 0.0
      %3617 = vmatpush1.msra.mxu0 %v3520
      %3618 = vmatprep.subr.mxu0 0.0
      %3619 = vmatpush2.msra.mxu0 0.0
      %3620 = vmatprep.subr.mxu0 0.0
      %3621 = vmatpush2.msra.mxu0 0.0
      %3622 = vmatprep.subr.mxu0 0.0
      %3623 = vmatpush2.msra.mxu0 0.0
      %3624 = vmatprep.subr.mxu0 0.0
      %3625 = vmatpush2.msra.mxu0 0.0
      %3626 = vmatprep.subr.mxu0 0.0
      %3627 = vmatpush2.msra.mxu0 0.0
      %3628 = vmatprep.subr.mxu0 0.0
      %3629 = vmatpush2.msra.mxu0 0.0
      %3630 = vmatprep.subr.mxu0 0.0
      %3631 = vmatpush2.msra.mxu0 0.0
      %3632 = vmatprep.subr.mxu0 0.0
      %3633 = vmatpush2.msra.mxu0 0.0
      %3634 = vmatprep.subr.mxu0 0.0
      %3635 = vmatpush2.msra.mxu0 0.0
      %3636 = vmatprep.subr.mxu0 0.0
      %3637 = vmatpush2.msra.mxu0 0.0
      %3638 = vmatprep.subr.mxu0 0.0
      %3639 = vmatpush2.msra.mxu0 0.0
      %3640 = vmatprep.subr.mxu0 0.0
      %3641 = vmatpush2.msra.mxu0 0.0
      %3642 = vmatprep.subr.mxu0 0.0
      %3643 = vmatpush2.msra.mxu0 0.0
      %3644 = vmatprep.subr.mxu0 0.0
      %3645 = vmatpush2.msra.mxu0 0.0
      %3646 = vmatprep.subr.mxu0 0.0
      %3647 = vmatpush2.msra.mxu0 0.0
      %3648 = vmatprep.subr.mxu0 0.0
      %3649 = vmatpush2.msra.mxu0 0.0
      %3650 = vmatprep.mubr.f32.mxu0 0.0
      %3651 = vmatmul.mubr.f32.gmra.mxu0 %v3552
      %v3652 = vpop.f32.mrf.mxu0
      %v3653 = vadd.f32 0.0, %v3652
      %v3654 = vpop.f32.mrf.mxu0
      %3655 = vmatprep.mubr.f32.mxu0 0.0
      %3656 = vmatmul.mubr.f32.gmra.mxu0 %v3555
      %v3657 = vpop.f32.mrf.mxu0
      %v3658 = vadd.f32 0.0, %v3657
      %v3659 = vpop.f32.mrf.mxu0
      %3660 = vmatprep.mubr.f32.mxu0 0.0
      %3661 = vmatmul.mubr.f32.gmra.mxu0 %v3558
      %v3662 = vpop.f32.mrf.mxu0
      %v3663 = vadd.f32 0.0, %v3662
      %v3664 = vpop.f32.mrf.mxu0
      %3665 = vmatprep.mubr.f32.mxu0 0.0
      %3666 = vmatmul.mubr.f32.gmra.mxu0 %v3561
      %v3667 = vpop.f32.mrf.mxu0
      %v3668 = vadd.f32 0.0, %v3667
      %v3669 = vpop.f32.mrf.mxu0
      %3670 = vmatprep.mubr.f32.mxu0 0.0
      %3671 = vmatmul.mubr.f32.gmra.mxu0 %v3564
      %v3672 = vpop.f32.mrf.mxu0
      %v3673 = vadd.f32 0.0, %v3672
      %v3674 = vpop.f32.mrf.mxu0
      %3675 = vmatprep.mubr.f32.mxu0 0.0
      %3676 = vmatmul.mubr.f32.gmra.mxu0 %v3567
      %v3677 = vpop.f32.mrf.mxu0
      %v3678 = vadd.f32 0.0, %v3677
      %v3679 = vpop.f32.mrf.mxu0
      %3680 = vmatprep.mubr.f32.mxu0 0.0
      %3681 = vmatmul.mubr.f32.gmra.mxu0 %v3570
      %v3682 = vpop.f32.mrf.mxu0
      %v3683 = vadd.f32 0.0, %v3682
      %v3684 = vpop.f32.mrf.mxu0
      %3685 = vmatprep.mubr.f32.mxu0 0.0
      %3686 = vmatmul.mubr.f32.gmra.mxu0 %v3573
      %v3687 = vpop.f32.mrf.mxu0
      %v3688 = vadd.f32 0.0, %v3687
      %v3689 = vpop.f32.mrf.mxu0
      %3690 = vmatprep.mubr.f32.mxu0 0.0
      %3691 = vmatmul.mubr.f32.gmra.mxu0 %v3576
      %v3692 = vpop.f32.mrf.mxu0
      %v3693 = vadd.f32 0.0, %v3692
      %v3694 = vpop.f32.mrf.mxu0
      %3695 = vmatprep.mubr.f32.mxu0 0.0
      %3696 = vmatmul.mubr.f32.gmra.mxu0 %v3579
      %v3697 = vpop.f32.mrf.mxu0
      %v3698 = vadd.f32 0.0, %v3697
      %v3699 = vpop.f32.mrf.mxu0
      %3700 = vmatprep.mubr.f32.mxu0 0.0
      %3701 = vmatmul.mubr.f32.gmra.mxu0 %v3582
      %v3702 = vpop.f32.mrf.mxu0
      %v3703 = vadd.f32 0.0, %v3702
      %v3704 = vpop.f32.mrf.mxu0
      %3705 = vdwg.mxu0
      %v3706 = vld [vmem:[%s10 + $0x18] sm:$0xff]
      %v3708 = vsel %vm1187, %v3653, 0
      %v3711 = vsel %vm1187, %v3658, 0
      %v3714 = vsel %vm1187, %v3663, 0
      %v3717 = vsel %vm1187, %v3668, 0
      %v3720 = vsel %vm1187, %v3673, 0
      %v3723 = vsel %vm1187, %v3678, 0
      %v3726 = vsel %vm1187, %v3683, 0
      %v3729 = vsel %vm1187, %v3688, 0
      %v3732 = vsel %vm1187, %v3693, 0
      %v3735 = vsel %vm1187, %v3698, 0
      %v3738 = vsel %vm1187, %v3703, 0
      %3740 = vmatprep.subr.mxu0 0.0
      %3741 = vmatpush1.msra.mxu0 0.0
      %3742 = vmatprep.subr.mxu0 0.0
      %3743 = vmatpush1.msra.mxu0 0.0
      %3744 = vmatprep.subr.mxu0 0.0
      %3745 = vmatpush1.msra.mxu0 0.0
      %3746 = vmatprep.subr.mxu0 0.0
      %3747 = vmatpush1.msra.mxu0 0.0
      %3748 = vmatprep.subr.mxu0 0.0
      %3749 = vmatpush1.msra.mxu0 0.0
      %3750 = vmatprep.subr.mxu0 0.0
      %3751 = vmatpush1.msra.mxu0 0.0
      %3752 = vmatprep.subr.mxu0 0.0
      %3753 = vmatpush1.msra.mxu0 0.0
      %3754 = vmatprep.subr.mxu0 0.0
      %3755 = vmatpush1.msra.mxu0 0.0
      %3756 = vmatprep.subr.mxu0 0.0
      %3757 = vmatpush1.msra.mxu0 0.0
      %3758 = vmatprep.subr.mxu0 0.0
      %3759 = vmatpush1.msra.mxu0 0.0
      %3760 = vmatprep.subr.mxu0 0.0
      %3761 = vmatpush1.msra.mxu0 0.0
      %3762 = vmatprep.subr.mxu0 0.0
      %3763 = vmatpush1.msra.mxu0 0.0
      %3764 = vmatprep.subr.mxu0 0.0
      %3765 = vmatpush1.msra.mxu0 0.0
      %3766 = vmatprep.subr.mxu0 0.0
      %3767 = vmatpush1.msra.mxu0 0.0
      %3768 = vmatprep.subr.mxu0 0.0
      %3769 = vmatpush1.msra.mxu0 0.0
      %3770 = vmatprep.subr.mxu0 0.0
      %3771 = vmatpush1.msra.mxu0 %v3706
      %3772 = vmatprep.subr.mxu0 0.0
      %3773 = vmatpush2.msra.mxu0 0.0
      %3774 = vmatprep.subr.mxu0 0.0
      %3775 = vmatpush2.msra.mxu0 0.0
      %3776 = vmatprep.subr.mxu0 0.0
      %3777 = vmatpush2.msra.mxu0 0.0
      %3778 = vmatprep.subr.mxu0 0.0
      %3779 = vmatpush2.msra.mxu0 0.0
      %3780 = vmatprep.subr.mxu0 0.0
      %3781 = vmatpush2.msra.mxu0 0.0
      %3782 = vmatprep.subr.mxu0 0.0
      %3783 = vmatpush2.msra.mxu0 0.0
      %3784 = vmatprep.subr.mxu0 0.0
      %3785 = vmatpush2.msra.mxu0 0.0
      %3786 = vmatprep.subr.mxu0 0.0
      %3787 = vmatpush2.msra.mxu0 0.0
      %3788 = vmatprep.subr.mxu0 0.0
      %3789 = vmatpush2.msra.mxu0 0.0
      %3790 = vmatprep.subr.mxu0 0.0
      %3791 = vmatpush2.msra.mxu0 0.0
      %3792 = vmatprep.subr.mxu0 0.0
      %3793 = vmatpush2.msra.mxu0 0.0
      %3794 = vmatprep.subr.mxu0 0.0
      %3795 = vmatpush2.msra.mxu0 0.0
      %3796 = vmatprep.subr.mxu0 0.0
      %3797 = vmatpush2.msra.mxu0 0.0
      %3798 = vmatprep.subr.mxu0 0.0
      %3799 = vmatpush2.msra.mxu0 0.0
      %3800 = vmatprep.subr.mxu0 0.0
      %3801 = vmatpush2.msra.mxu0 0.0
      %3802 = vmatprep.subr.mxu0 0.0
      %3803 = vmatpush2.msra.mxu0 0.0
      %3804 = vmatprep.mubr.f32.mxu0 0.0
      %3805 = vmatmul.mubr.f32.gmra.mxu0 %v3708
      %v3806 = vpop.f32.mrf.mxu0
      %v3807 = vadd.f32 0.0, %v3806
      %v3808 = vpop.f32.mrf.mxu0
      %3809 = vmatprep.mubr.f32.mxu0 0.0
      %3810 = vmatmul.mubr.f32.gmra.mxu0 %v3711
      %v3811 = vpop.f32.mrf.mxu0
      %v3812 = vadd.f32 0.0, %v3811
      %v3813 = vpop.f32.mrf.mxu0
      %3814 = vmatprep.mubr.f32.mxu0 0.0
      %3815 = vmatmul.mubr.f32.gmra.mxu0 %v3714
      %v3816 = vpop.f32.mrf.mxu0
      %v3817 = vadd.f32 0.0, %v3816
      %v3818 = vpop.f32.mrf.mxu0
      %3819 = vmatprep.mubr.f32.mxu0 0.0
      %3820 = vmatmul.mubr.f32.gmra.mxu0 %v3717
      %v3821 = vpop.f32.mrf.mxu0
      %v3822 = vadd.f32 0.0, %v3821
      %v3823 = vpop.f32.mrf.mxu0
      %3824 = vmatprep.mubr.f32.mxu0 0.0
      %3825 = vmatmul.mubr.f32.gmra.mxu0 %v3720
      %v3826 = vpop.f32.mrf.mxu0
      %v3827 = vadd.f32 0.0, %v3826
      %v3828 = vpop.f32.mrf.mxu0
      %3829 = vmatprep.mubr.f32.mxu0 0.0
      %3830 = vmatmul.mubr.f32.gmra.mxu0 %v3723
      %v3831 = vpop.f32.mrf.mxu0
      %v3832 = vadd.f32 0.0, %v3831
      %v3833 = vpop.f32.mrf.mxu0
      %3834 = vmatprep.mubr.f32.mxu0 0.0
      %3835 = vmatmul.mubr.f32.gmra.mxu0 %v3726
      %v3836 = vpop.f32.mrf.mxu0
      %v3837 = vadd.f32 0.0, %v3836
      %v3838 = vpop.f32.mrf.mxu0
      %3839 = vmatprep.mubr.f32.mxu0 0.0
      %3840 = vmatmul.mubr.f32.gmra.mxu0 %v3729
      %v3841 = vpop.f32.mrf.mxu0
      %v3842 = vadd.f32 0.0, %v3841
      %v3843 = vpop.f32.mrf.mxu0
      %3844 = vmatprep.mubr.f32.mxu0 0.0
      %3845 = vmatmul.mubr.f32.gmra.mxu0 %v3732
      %v3846 = vpop.f32.mrf.mxu0
      %v3847 = vadd.f32 0.0, %v3846
      %v3848 = vpop.f32.mrf.mxu0
      %3849 = vmatprep.mubr.f32.mxu0 0.0
      %3850 = vmatmul.mubr.f32.gmra.mxu0 %v3735
      %v3851 = vpop.f32.mrf.mxu0
      %v3852 = vadd.f32 0.0, %v3851
      %v3853 = vpop.f32.mrf.mxu0
      %3854 = vmatprep.mubr.f32.mxu0 0.0
      %3855 = vmatmul.mubr.f32.gmra.mxu0 %v3738
      %v3856 = vpop.f32.mrf.mxu0
      %v3857 = vadd.f32 0.0, %v3856
      %v3858 = vpop.f32.mrf.mxu0
      %3859 = vdwg.mxu0
      %v3860 = vadd.f32 %v3179, %v3807
      %v3861 = vadd.f32 %v3180, %v3812
      %v3862 = vadd.f32 %v3181, %v3817
      %v3863 = vadd.f32 %v3182, %v3822
      %v3864 = vadd.f32 %v3183, %v3827
      %v3865 = vadd.f32 %v3184, %v3832
      %v3866 = vadd.f32 %v3185, %v3837
      %v3867 = vadd.f32 %v3186, %v3842
      %v3868 = vadd.f32 %v3187, %v3847
      %v3869 = vadd.f32 %v3188, %v3852
      %v3870 = vadd.f32 %v3189, %v3857
      %3871 = vrot.lane.b32.xlu0 %v1176, 96
      %v3872 = vpop.permute.xlu0 %3871
      %3873 = vrot.lane.b32.xlu0 %v1177, 96
      %v3874 = vpop.permute.xlu0 %3873
      %3875 = vrot.lane.b32.xlu0 %v1178, 96
      %v3876 = vpop.permute.xlu0 %3875
      %3877 = vrot.lane.b32.xlu0 %v1179, 96
      %v3878 = vpop.permute.xlu0 %3877
      %3879 = vrot.lane.b32.xlu0 %v1180, 96
      %v3880 = vpop.permute.xlu0 %3879
      %3881 = vrot.lane.b32.xlu0 %v1181, 96
      %v3882 = vpop.permute.xlu0 %3881
      %3883 = vrot.lane.b32.xlu0 %v1182, 96
      %v3884 = vpop.permute.xlu0 %3883
      %3885 = vrot.lane.b32.xlu0 %v1183, 96
      %v3886 = vpop.permute.xlu0 %3885
      %3887 = vrot.lane.b32.xlu0 %v1184, 96
      %v3888 = vpop.permute.xlu0 %3887
      %3889 = vrot.lane.b32.xlu0 %v1185, 96
      %v3890 = vpop.permute.xlu0 %3889
      %3891 = vrot.lane.b32.xlu0 %v1186, 96
      %v3892 = vpop.permute.xlu0 %3891
      %3893 = vrot.lane.b32.xlu0 %v1123, 96
      %v3894 = vpop.permute.xlu0 %3893
      %3895 = vrot.lane.b32.xlu0 %v1128, 96
      %v3896 = vpop.permute.xlu0 %3895
      %3897 = vrot.lane.b32.xlu0 %v1133, 96
      %v3898 = vpop.permute.xlu0 %3897
      %3899 = vrot.lane.b32.xlu0 %v1138, 96
      %v3900 = vpop.permute.xlu0 %3899
      %3901 = vrot.lane.b32.xlu0 %v1143, 96
      %v3902 = vpop.permute.xlu0 %3901
      %3903 = vrot.lane.b32.xlu0 %v1148, 96
      %v3904 = vpop.permute.xlu0 %3903
      %3905 = vrot.lane.b32.xlu0 %v1153, 96
      %v3906 = vpop.permute.xlu0 %3905
      %3907 = vrot.lane.b32.xlu0 %v1158, 96
      %v3908 = vpop.permute.xlu0 %3907
      %3909 = vrot.lane.b32.xlu0 %v1163, 96
      %v3910 = vpop.permute.xlu0 %3909
      %3911 = vrot.lane.b32.xlu0 %v1168, 96
      %v3912 = vpop.permute.xlu0 %3911
      %3913 = vrot.lane.b32.xlu0 %v1173, 96
      %v3914 = vpop.permute.xlu0 %3913
      %v3915 = vsel %vm1187, %v3872, 0
      %v3917 = vsel %vm1187, %v3874, 0
      %v3919 = vsel %vm1187, %v3876, 0
      %v3921 = vsel %vm1187, %v3878, 0
      %v3923 = vsel %vm1187, %v3880, 0
      %v3925 = vsel %vm1187, %v3882, 0
      %v3927 = vsel %vm1187, %v3884, 0
      %v3929 = vsel %vm1187, %v3886, 0
      %v3931 = vsel %vm1187, %v3888, 0
      %v3933 = vsel %vm1187, %v3890, 0
      %v3935 = vsel %vm1187, %v3892, 0
      %v3937 = vsel %vm1187, %v3894, 0
      %v3939 = vsel %vm1187, %v3896, 0
      %v3941 = vsel %vm1187, %v3898, 0
      %v3943 = vsel %vm1187, %v3900, 0
      %v3945 = vsel %vm1187, %v3902, 0
      %v3947 = vsel %vm1187, %v3904, 0
      %v3949 = vsel %vm1187, %v3906, 0
      %v3951 = vsel %vm1187, %v3908, 0
      %v3953 = vsel %vm1187, %v3910, 0
      %v3955 = vsel %vm1187, %v3912, 0
      %v3957 = vsel %vm1187, %v3914, 0
      %3959 = vmatprep.subr.mxu0 0.0
      %3960 = vmatpush1.xpose.msra.mxu0 0.0
      %3961 = vmatprep.subr.mxu0 0.0
      %3962 = vmatpush1.xpose.msra.mxu0 0.0
      %3963 = vmatprep.subr.mxu0 0.0
      %3964 = vmatpush1.xpose.msra.mxu0 0.0
      %3965 = vmatprep.subr.mxu0 0.0
      %3966 = vmatpush1.xpose.msra.mxu0 0.0
      %3967 = vmatprep.subr.mxu0 0.0
      %3968 = vmatpush1.xpose.msra.mxu0 0.0
      %3969 = vmatprep.subr.mxu0 0.0
      %3970 = vmatpush1.xpose.msra.mxu0 %v3957
      %3971 = vmatprep.subr.mxu0 0.0
      %3972 = vmatpush1.xpose.msra.mxu0 %v3955
      %3973 = vmatprep.subr.mxu0 0.0
      %3974 = vmatpush1.xpose.msra.mxu0 %v3953
      %3975 = vmatprep.subr.mxu0 0.0
      %3976 = vmatpush1.xpose.msra.mxu0 %v3951
      %3977 = vmatprep.subr.mxu0 0.0
      %3978 = vmatpush1.xpose.msra.mxu0 %v3949
      %3979 = vmatprep.subr.mxu0 0.0
      %3980 = vmatpush1.xpose.msra.mxu0 %v3947
      %3981 = vmatprep.subr.mxu0 0.0
      %3982 = vmatpush1.xpose.msra.mxu0 %v3945
      %3983 = vmatprep.subr.mxu0 0.0
      %3984 = vmatpush1.xpose.msra.mxu0 %v3943
      %3985 = vmatprep.subr.mxu0 0.0
      %3986 = vmatpush1.xpose.msra.mxu0 %v3941
      %3987 = vmatprep.subr.mxu0 0.0
      %3988 = vmatpush1.xpose.msra.mxu0 %v3939
      %3989 = vmatprep.subr.mxu0 0.0
      %3990 = vmatpush1.xpose.msra.mxu0 %v3937
      %3991 = vmatprep.subr.mxu0 0.0
      %3992 = vmatpush2.xpose.msra.mxu0 0.0
      %3993 = vmatprep.subr.mxu0 0.0
      %3994 = vmatpush2.xpose.msra.mxu0 0.0
      %3995 = vmatprep.subr.mxu0 0.0
      %3996 = vmatpush2.xpose.msra.mxu0 0.0
      %3997 = vmatprep.subr.mxu0 0.0
      %3998 = vmatpush2.xpose.msra.mxu0 0.0
      %3999 = vmatprep.subr.mxu0 0.0
      %4000 = vmatpush2.xpose.msra.mxu0 0.0
      %4001 = vmatprep.subr.mxu0 0.0
      %4002 = vmatpush2.xpose.msra.mxu0 0.0
      %4003 = vmatprep.subr.mxu0 0.0
      %4004 = vmatpush2.xpose.msra.mxu0 0.0
      %4005 = vmatprep.subr.mxu0 0.0
      %4006 = vmatpush2.xpose.msra.mxu0 0.0
      %4007 = vmatprep.subr.mxu0 0.0
      %4008 = vmatpush2.xpose.msra.mxu0 0.0
      %4009 = vmatprep.subr.mxu0 0.0
      %4010 = vmatpush2.xpose.msra.mxu0 0.0
      %4011 = vmatprep.subr.mxu0 0.0
      %4012 = vmatpush2.xpose.msra.mxu0 0.0
      %4013 = vmatprep.subr.mxu0 0.0
      %4014 = vmatpush2.xpose.msra.mxu0 0.0
      %4015 = vmatprep.subr.mxu0 0.0
      %4016 = vmatpush2.xpose.msra.mxu0 0.0
      %4017 = vmatprep.subr.mxu0 0.0
      %4018 = vmatpush2.xpose.msra.mxu0 0.0
      %4019 = vmatprep.subr.mxu0 0.0
      %4020 = vmatpush2.xpose.msra.mxu0 0.0
      %4021 = vmatprep.subr.mxu0 0.0
      %4022 = vmatpush2.xpose.msra.mxu0 0.0
      %4023 = vmatprep.mubr.f32.mxu0 0.0
      %4024 = vmatmul.mubr.f32.gmra.mxu0 %v3915
      %v4025 = vpop.f32.mrf.mxu0
      %v4026 = vadd.f32 0.0, %v4025
      %v4027 = vpop.f32.mrf.mxu0
      %4028 = vmatprep.mubr.f32.mxu0 0.0
      %4029 = vmatmul.mubr.f32.gmra.mxu0 %v3917
      %v4030 = vpop.f32.mrf.mxu0
      %v4031 = vadd.f32 0.0, %v4030
      %v4032 = vpop.f32.mrf.mxu0
      %4033 = vmatprep.mubr.f32.mxu0 0.0
      %4034 = vmatmul.mubr.f32.gmra.mxu0 %v3919
      %v4035 = vpop.f32.mrf.mxu0
      %v4036 = vadd.f32 0.0, %v4035
      %v4037 = vpop.f32.mrf.mxu0
      %4038 = vmatprep.mubr.f32.mxu0 0.0
      %4039 = vmatmul.mubr.f32.gmra.mxu0 %v3921
      %v4040 = vpop.f32.mrf.mxu0
      %v4041 = vadd.f32 0.0, %v4040
      %v4042 = vpop.f32.mrf.mxu0
      %4043 = vmatprep.mubr.f32.mxu0 0.0
      %4044 = vmatmul.mubr.f32.gmra.mxu0 %v3923
      %v4045 = vpop.f32.mrf.mxu0
      %v4046 = vadd.f32 0.0, %v4045
      %v4047 = vpop.f32.mrf.mxu0
      %4048 = vmatprep.mubr.f32.mxu0 0.0
      %4049 = vmatmul.mubr.f32.gmra.mxu0 %v3925
      %v4050 = vpop.f32.mrf.mxu0
      %v4051 = vadd.f32 0.0, %v4050
      %v4052 = vpop.f32.mrf.mxu0
      %4053 = vmatprep.mubr.f32.mxu0 0.0
      %4054 = vmatmul.mubr.f32.gmra.mxu0 %v3927
      %v4055 = vpop.f32.mrf.mxu0
      %v4056 = vadd.f32 0.0, %v4055
      %v4057 = vpop.f32.mrf.mxu0
      %4058 = vmatprep.mubr.f32.mxu0 0.0
      %4059 = vmatmul.mubr.f32.gmra.mxu0 %v3929
      %v4060 = vpop.f32.mrf.mxu0
      %v4061 = vadd.f32 0.0, %v4060
      %v4062 = vpop.f32.mrf.mxu0
      %4063 = vmatprep.mubr.f32.mxu0 0.0
      %4064 = vmatmul.mubr.f32.gmra.mxu0 %v3931
      %v4065 = vpop.f32.mrf.mxu0
      %v4066 = vadd.f32 0.0, %v4065
      %v4067 = vpop.f32.mrf.mxu0
      %4068 = vmatprep.mubr.f32.mxu0 0.0
      %4069 = vmatmul.mubr.f32.gmra.mxu0 %v3933
      %v4070 = vpop.f32.mrf.mxu0
      %v4071 = vadd.f32 0.0, %v4070
      %v4072 = vpop.f32.mrf.mxu0
      %4073 = vmatprep.mubr.f32.mxu0 0.0
      %4074 = vmatmul.mubr.f32.gmra.mxu0 %v3935
      %v4075 = vpop.f32.mrf.mxu0
      %v4076 = vadd.f32 0.0, %v4075
      %v4077 = vpop.f32.mrf.mxu0
      %4078 = vdwg.mxu0
      %v4079 = vsel %vm1374, %v4026, -inf
      %4080 = vmax.xlane.f32.xlu0 %v4079
      %v4081 = vpop.xlane.xlu0 %4080
      %v4082 = vsel %vm1374, %v4031, -inf
      %4083 = vmax.xlane.f32.xlu0 %v4082
      %v4084 = vpop.xlane.xlu0 %4083
      %v4085 = vsel %vm1374, %v4036, -inf
      %4086 = vmax.xlane.f32.xlu0 %v4085
      %v4087 = vpop.xlane.xlu0 %4086
      %v4088 = vsel %vm1374, %v4041, -inf
      %4089 = vmax.xlane.f32.xlu0 %v4088
      %v4090 = vpop.xlane.xlu0 %4089
      %v4091 = vsel %vm1374, %v4046, -inf
      %4092 = vmax.xlane.f32.xlu0 %v4091
      %v4093 = vpop.xlane.xlu0 %4092
      %v4094 = vsel %vm1374, %v4051, -inf
      %4095 = vmax.xlane.f32.xlu0 %v4094
      %v4096 = vpop.xlane.xlu0 %4095
      %v4097 = vsel %vm1374, %v4056, -inf
      %4098 = vmax.xlane.f32.xlu0 %v4097
      %v4099 = vpop.xlane.xlu0 %4098
      %v4100 = vsel %vm1374, %v4061, -inf
      %4101 = vmax.xlane.f32.xlu0 %v4100
      %v4102 = vpop.xlane.xlu0 %4101
      %v4103 = vsel %vm1374, %v4066, -inf
      %4104 = vmax.xlane.f32.xlu0 %v4103
      %v4105 = vpop.xlane.xlu0 %4104
      %v4106 = vsel %vm1374, %v4071, -inf
      %4107 = vmax.xlane.f32.xlu0 %v4106
      %v4108 = vpop.xlane.xlu0 %4107
      %v4109 = vsel %vm1405, %v4076, -inf
      %4110 = vmax.xlane.f32.xlu0 %v4109
      %v4111 = vpop.xlane.xlu0 %4110
      %v4112 = vsub.f32 %v4026, %v4081
      %v4113 = vsub.f32 %v4031, %v4084
      %v4114 = vsub.f32 %v4036, %v4087
      %v4115 = vsub.f32 %v4041, %v4090
      %v4116 = vsub.f32 %v4046, %v4093
      %v4117 = vsub.f32 %v4051, %v4096
      %v4118 = vsub.f32 %v4056, %v4099
      %v4119 = vsub.f32 %v4061, %v4102
      %v4120 = vsub.f32 %v4066, %v4105
      %v4121 = vsub.f32 %v4071, %v4108
      %v4122 = vsub.f32 %v4076, %v4111
      %v4123 = vmul.f32 %v4112, 1.442695
      %v4124 = vpow.pop %v4123
      %v4125 = vmul.f32 %v4113, 1.442695
      %v4126 = vpow.pop %v4125
      %v4127 = vmul.f32 %v4114, 1.442695
      %v4128 = vpow.pop %v4127
      %v4129 = vmul.f32 %v4115, 1.442695
      %v4130 = vpow.pop %v4129
      %v4131 = vmul.f32 %v4116, 1.442695
      %v4132 = vpow.pop %v4131
      %v4133 = vmul.f32 %v4117, 1.442695
      %v4134 = vpow.pop %v4133
      %v4135 = vmul.f32 %v4118, 1.442695
      %v4136 = vpow.pop %v4135
      %v4137 = vmul.f32 %v4119, 1.442695
      %v4138 = vpow.pop %v4137
      %v4139 = vmul.f32 %v4120, 1.442695
      %v4140 = vpow.pop %v4139
      %v4141 = vmul.f32 %v4121, 1.442695
      %v4142 = vpow.pop %v4141
      %v4143 = vmul.f32 %v4122, 1.442695
      %v4144 = vpow.pop %v4143
      %v4145 = vsel %vm1374, %v4124, 0.0
      %4146 = vadd.xlane.f32.xlu0 %v4145
      %v4147 = vpop.xlane.xlu0 %4146
      %v4148 = vsel %vm1374, %v4126, 0.0
      %4149 = vadd.xlane.f32.xlu0 %v4148
      %v4150 = vpop.xlane.xlu0 %4149
      %v4151 = vsel %vm1374, %v4128, 0.0
      %4152 = vadd.xlane.f32.xlu0 %v4151
      %v4153 = vpop.xlane.xlu0 %4152
      %v4154 = vsel %vm1374, %v4130, 0.0
      %4155 = vadd.xlane.f32.xlu0 %v4154
      %v4156 = vpop.xlane.xlu0 %4155
      %v4157 = vsel %vm1374, %v4132, 0.0
      %4158 = vadd.xlane.f32.xlu0 %v4157
      %v4159 = vpop.xlane.xlu0 %4158
      %v4160 = vsel %vm1374, %v4134, 0.0
      %4161 = vadd.xlane.f32.xlu0 %v4160
      %v4162 = vpop.xlane.xlu0 %4161
      %v4163 = vsel %vm1374, %v4136, 0.0
      %4164 = vadd.xlane.f32.xlu0 %v4163
      %v4165 = vpop.xlane.xlu0 %4164
      %v4166 = vsel %vm1374, %v4138, 0.0
      %4167 = vadd.xlane.f32.xlu0 %v4166
      %v4168 = vpop.xlane.xlu0 %4167
      %v4169 = vsel %vm1374, %v4140, 0.0
      %4170 = vadd.xlane.f32.xlu0 %v4169
      %v4171 = vpop.xlane.xlu0 %4170
      %v4172 = vsel %vm1374, %v4142, 0.0
      %4173 = vadd.xlane.f32.xlu0 %v4172
      %v4174 = vpop.xlane.xlu0 %4173
      %v4175 = vsel %vm1405, %v4144, 0.0
      %4176 = vadd.xlane.f32.xlu0 %v4175
      %v4177 = vpop.xlane.xlu0 %4176
      %v4178 = vrcp.pop %v4147
      %v4179 = vrcp.pop %v4150
      %v4180 = vrcp.pop %v4153
      %v4181 = vrcp.pop %v4156
      %v4182 = vrcp.pop %v4159
      %v4183 = vrcp.pop %v4162
      %v4184 = vrcp.pop %v4165
      %v4185 = vrcp.pop %v4168
      %v4186 = vrcp.pop %v4171
      %v4187 = vrcp.pop %v4174
      %v4188 = vrcp.pop %v4177
      %v4189 = vmul.f32 %v4124, %v4178
      %v4190 = vmul.f32 %v4126, %v4179
      %v4191 = vmul.f32 %v4128, %v4180
      %v4192 = vmul.f32 %v4130, %v4181
      %v4193 = vmul.f32 %v4132, %v4182
      %v4194 = vmul.f32 %v4134, %v4183
      %v4195 = vmul.f32 %v4136, %v4184
      %v4196 = vmul.f32 %v4138, %v4185
      %v4197 = vmul.f32 %v4140, %v4186
      %v4198 = vmul.f32 %v4142, %v4187
      %v4199 = vmul.f32 %v4144, %v4188
      %4200 = vrot.lane.b32.xlu0 %v1123, 48
      %v4201 = vpop.permute.xlu0 %4200
      %4202 = vrot.lane.b32.xlu0 %v1128, 48
      %v4203 = vpop.permute.xlu0 %4202
      %4204 = vrot.lane.b32.xlu0 %v1133, 48
      %v4205 = vpop.permute.xlu0 %4204
      %4206 = vrot.lane.b32.xlu0 %v1138, 48
      %v4207 = vpop.permute.xlu0 %4206
      %4208 = vrot.lane.b32.xlu0 %v1143, 48
      %v4209 = vpop.permute.xlu0 %4208
      %4210 = vrot.lane.b32.xlu0 %v1148, 48
      %v4211 = vpop.permute.xlu0 %4210
      %4212 = vrot.lane.b32.xlu0 %v1153, 48
      %v4213 = vpop.permute.xlu0 %4212
      %4214 = vrot.lane.b32.xlu0 %v1158, 48
      %v4215 = vpop.permute.xlu0 %4214
      %4216 = vrot.lane.b32.xlu0 %v1163, 48
      %v4217 = vpop.permute.xlu0 %4216
      %4218 = vrot.lane.b32.xlu0 %v1168, 48
      %v4219 = vpop.permute.xlu0 %4218
      %4220 = vrot.lane.b32.xlu0 %v1173, 48
      %v4221 = vpop.permute.xlu0 %4220
      %v4233 = vsel %vm1374, %v4189, 0
      %v4236 = vsel %vm1374, %v4190, 0
      %v4239 = vsel %vm1374, %v4191, 0
      %v4242 = vsel %vm1374, %v4192, 0
      %v4245 = vsel %vm1374, %v4193, 0
      %v4248 = vsel %vm1374, %v4194, 0
      %v4251 = vsel %vm1374, %v4195, 0
      %v4254 = vsel %vm1374, %v4196, 0
      %v4257 = vsel %vm1374, %v4197, 0
      %v4260 = vsel %vm1374, %v4198, 0
      %v4263 = vsel %vm1374, %v4199, 0
      %v4265 = vsel %vm1562, %v4221, 0
      %4267 = vmatprep.subr.mxu0 0.0
      %4268 = vmatpush1.msra.mxu0 0.0
      %4269 = vmatprep.subr.mxu0 0.0
      %4270 = vmatpush1.msra.mxu0 0.0
      %4271 = vmatprep.subr.mxu0 0.0
      %4272 = vmatpush1.msra.mxu0 0.0
      %4273 = vmatprep.subr.mxu0 0.0
      %4274 = vmatpush1.msra.mxu0 0.0
      %4275 = vmatprep.subr.mxu0 0.0
      %4276 = vmatpush1.msra.mxu0 0.0
      %4277 = vmatprep.subr.mxu0 0.0
      %4278 = vmatpush1.msra.mxu0 %v4265
      %4279 = vmatprep.subr.mxu0 0.0
      %4280 = vmatpush1.msra.mxu0 %v4219
      %4281 = vmatprep.subr.mxu0 0.0
      %4282 = vmatpush1.msra.mxu0 %v4217
      %4283 = vmatprep.subr.mxu0 0.0
      %4284 = vmatpush1.msra.mxu0 %v4215
      %4285 = vmatprep.subr.mxu0 0.0
      %4286 = vmatpush1.msra.mxu0 %v4213
      %4287 = vmatprep.subr.mxu0 0.0
      %4288 = vmatpush1.msra.mxu0 %v4211
      %4289 = vmatprep.subr.mxu0 0.0
      %4290 = vmatpush1.msra.mxu0 %v4209
      %4291 = vmatprep.subr.mxu0 0.0
      %4292 = vmatpush1.msra.mxu0 %v4207
      %4293 = vmatprep.subr.mxu0 0.0
      %4294 = vmatpush1.msra.mxu0 %v4205
      %4295 = vmatprep.subr.mxu0 0.0
      %4296 = vmatpush1.msra.mxu0 %v4203
      %4297 = vmatprep.subr.mxu0 0.0
      %4298 = vmatpush1.msra.mxu0 %v4201
      %4299 = vmatprep.subr.mxu0 0.0
      %4300 = vmatpush2.msra.mxu0 0.0
      %4301 = vmatprep.subr.mxu0 0.0
      %4302 = vmatpush2.msra.mxu0 0.0
      %4303 = vmatprep.subr.mxu0 0.0
      %4304 = vmatpush2.msra.mxu0 0.0
      %4305 = vmatprep.subr.mxu0 0.0
      %4306 = vmatpush2.msra.mxu0 0.0
      %4307 = vmatprep.subr.mxu0 0.0
      %4308 = vmatpush2.msra.mxu0 0.0
      %4309 = vmatprep.subr.mxu0 0.0
      %4310 = vmatpush2.msra.mxu0 0.0
      %4311 = vmatprep.subr.mxu0 0.0
      %4312 = vmatpush2.msra.mxu0 0.0
      %4313 = vmatprep.subr.mxu0 0.0
      %4314 = vmatpush2.msra.mxu0 0.0
      %4315 = vmatprep.subr.mxu0 0.0
      %4316 = vmatpush2.msra.mxu0 0.0
      %4317 = vmatprep.subr.mxu0 0.0
      %4318 = vmatpush2.msra.mxu0 0.0
      %4319 = vmatprep.subr.mxu0 0.0
      %4320 = vmatpush2.msra.mxu0 0.0
      %4321 = vmatprep.subr.mxu0 0.0
      %4322 = vmatpush2.msra.mxu0 0.0
      %4323 = vmatprep.subr.mxu0 0.0
      %4324 = vmatpush2.msra.mxu0 0.0
      %4325 = vmatprep.subr.mxu0 0.0
      %4326 = vmatpush2.msra.mxu0 0.0
      %4327 = vmatprep.subr.mxu0 0.0
      %4328 = vmatpush2.msra.mxu0 0.0
      %4329 = vmatprep.subr.mxu0 0.0
      %4330 = vmatpush2.msra.mxu0 0.0
      %4331 = vmatprep.mubr.f32.mxu0 0.0
      %4332 = vmatmul.mubr.f32.gmra.mxu0 %v4233
      %v4333 = vpop.f32.mrf.mxu0
      %v4334 = vadd.f32 0.0, %v4333
      %v4335 = vpop.f32.mrf.mxu0
      %4336 = vmatprep.mubr.f32.mxu0 0.0
      %4337 = vmatmul.mubr.f32.gmra.mxu0 %v4236
      %v4338 = vpop.f32.mrf.mxu0
      %v4339 = vadd.f32 0.0, %v4338
      %v4340 = vpop.f32.mrf.mxu0
      %4341 = vmatprep.mubr.f32.mxu0 0.0
      %4342 = vmatmul.mubr.f32.gmra.mxu0 %v4239
      %v4343 = vpop.f32.mrf.mxu0
      %v4344 = vadd.f32 0.0, %v4343
      %v4345 = vpop.f32.mrf.mxu0
      %4346 = vmatprep.mubr.f32.mxu0 0.0
      %4347 = vmatmul.mubr.f32.gmra.mxu0 %v4242
      %v4348 = vpop.f32.mrf.mxu0
      %v4349 = vadd.f32 0.0, %v4348
      %v4350 = vpop.f32.mrf.mxu0
      %4351 = vmatprep.mubr.f32.mxu0 0.0
      %4352 = vmatmul.mubr.f32.gmra.mxu0 %v4245
      %v4353 = vpop.f32.mrf.mxu0
      %v4354 = vadd.f32 0.0, %v4353
      %v4355 = vpop.f32.mrf.mxu0
      %4356 = vmatprep.mubr.f32.mxu0 0.0
      %4357 = vmatmul.mubr.f32.gmra.mxu0 %v4248
      %v4358 = vpop.f32.mrf.mxu0
      %v4359 = vadd.f32 0.0, %v4358
      %v4360 = vpop.f32.mrf.mxu0
      %4361 = vmatprep.mubr.f32.mxu0 0.0
      %4362 = vmatmul.mubr.f32.gmra.mxu0 %v4251
      %v4363 = vpop.f32.mrf.mxu0
      %v4364 = vadd.f32 0.0, %v4363
      %v4365 = vpop.f32.mrf.mxu0
      %4366 = vmatprep.mubr.f32.mxu0 0.0
      %4367 = vmatmul.mubr.f32.gmra.mxu0 %v4254
      %v4368 = vpop.f32.mrf.mxu0
      %v4369 = vadd.f32 0.0, %v4368
      %v4370 = vpop.f32.mrf.mxu0
      %4371 = vmatprep.mubr.f32.mxu0 0.0
      %4372 = vmatmul.mubr.f32.gmra.mxu0 %v4257
      %v4373 = vpop.f32.mrf.mxu0
      %v4374 = vadd.f32 0.0, %v4373
      %v4375 = vpop.f32.mrf.mxu0
      %4376 = vmatprep.mubr.f32.mxu0 0.0
      %4377 = vmatmul.mubr.f32.gmra.mxu0 %v4260
      %v4378 = vpop.f32.mrf.mxu0
      %v4379 = vadd.f32 0.0, %v4378
      %v4380 = vpop.f32.mrf.mxu0
      %4381 = vmatprep.mubr.f32.mxu0 0.0
      %4382 = vmatmul.mubr.f32.gmra.mxu0 %v4263
      %v4383 = vpop.f32.mrf.mxu0
      %v4384 = vadd.f32 0.0, %v4383
      %v4385 = vpop.f32.mrf.mxu0
      %4386 = vdwg.mxu0
      %v4387 = vld [vmem:[%s10 + $0x20] sm:$0xff]
      %v4389 = vsel %vm1187, %v4334, 0
      %v4392 = vsel %vm1187, %v4339, 0
      %v4395 = vsel %vm1187, %v4344, 0
      %v4398 = vsel %vm1187, %v4349, 0
      %v4401 = vsel %vm1187, %v4354, 0
      %v4404 = vsel %vm1187, %v4359, 0
      %v4407 = vsel %vm1187, %v4364, 0
      %v4410 = vsel %vm1187, %v4369, 0
      %v4413 = vsel %vm1187, %v4374, 0
      %v4416 = vsel %vm1187, %v4379, 0
      %v4419 = vsel %vm1187, %v4384, 0
      %4421 = vmatprep.subr.mxu0 0.0
      %4422 = vmatpush1.msra.mxu0 0.0
      %4423 = vmatprep.subr.mxu0 0.0
      %4424 = vmatpush1.msra.mxu0 0.0
      %4425 = vmatprep.subr.mxu0 0.0
      %4426 = vmatpush1.msra.mxu0 0.0
      %4427 = vmatprep.subr.mxu0 0.0
      %4428 = vmatpush1.msra.mxu0 0.0
      %4429 = vmatprep.subr.mxu0 0.0
      %4430 = vmatpush1.msra.mxu0 0.0
      %4431 = vmatprep.subr.mxu0 0.0
      %4432 = vmatpush1.msra.mxu0 0.0
      %4433 = vmatprep.subr.mxu0 0.0
      %4434 = vmatpush1.msra.mxu0 0.0
      %4435 = vmatprep.subr.mxu0 0.0
      %4436 = vmatpush1.msra.mxu0 0.0
      %4437 = vmatprep.subr.mxu0 0.0
      %4438 = vmatpush1.msra.mxu0 0.0
      %4439 = vmatprep.subr.mxu0 0.0
      %4440 = vmatpush1.msra.mxu0 0.0
      %4441 = vmatprep.subr.mxu0 0.0
      %4442 = vmatpush1.msra.mxu0 0.0
      %4443 = vmatprep.subr.mxu0 0.0
      %4444 = vmatpush1.msra.mxu0 0.0
      %4445 = vmatprep.subr.mxu0 0.0
      %4446 = vmatpush1.msra.mxu0 0.0
      %4447 = vmatprep.subr.mxu0 0.0
      %4448 = vmatpush1.msra.mxu0 0.0
      %4449 = vmatprep.subr.mxu0 0.0
      %4450 = vmatpush1.msra.mxu0 0.0
      %4451 = vmatprep.subr.mxu0 0.0
      %4452 = vmatpush1.msra.mxu0 %v4387
      %4453 = vmatprep.subr.mxu0 0.0
      %4454 = vmatpush2.msra.mxu0 0.0
      %4455 = vmatprep.subr.mxu0 0.0
      %4456 = vmatpush2.msra.mxu0 0.0
      %4457 = vmatprep.subr.mxu0 0.0
      %4458 = vmatpush2.msra.mxu0 0.0
      %4459 = vmatprep.subr.mxu0 0.0
      %4460 = vmatpush2.msra.mxu0 0.0
      %4461 = vmatprep.subr.mxu0 0.0
      %4462 = vmatpush2.msra.mxu0 0.0
      %4463 = vmatprep.subr.mxu0 0.0
      %4464 = vmatpush2.msra.mxu0 0.0
      %4465 = vmatprep.subr.mxu0 0.0
      %4466 = vmatpush2.msra.mxu0 0.0
      %4467 = vmatprep.subr.mxu0 0.0
      %4468 = vmatpush2.msra.mxu0 0.0
      %4469 = vmatprep.subr.mxu0 0.0
      %4470 = vmatpush2.msra.mxu0 0.0
      %4471 = vmatprep.subr.mxu0 0.0
      %4472 = vmatpush2.msra.mxu0 0.0
      %4473 = vmatprep.subr.mxu0 0.0
      %4474 = vmatpush2.msra.mxu0 0.0
      %4475 = vmatprep.subr.mxu0 0.0
      %4476 = vmatpush2.msra.mxu0 0.0
      %4477 = vmatprep.subr.mxu0 0.0
      %4478 = vmatpush2.msra.mxu0 0.0
      %4479 = vmatprep.subr.mxu0 0.0
      %4480 = vmatpush2.msra.mxu0 0.0
      %4481 = vmatprep.subr.mxu0 0.0
      %4482 = vmatpush2.msra.mxu0 0.0
      %4483 = vmatprep.subr.mxu0 0.0
      %4484 = vmatpush2.msra.mxu0 0.0
      %4485 = vmatprep.mubr.f32.mxu0 0.0
      %4486 = vmatmul.mubr.f32.gmra.mxu0 %v4389
      %v4487 = vpop.f32.mrf.mxu0
      %v4488 = vadd.f32 0.0, %v4487
      %v4489 = vpop.f32.mrf.mxu0
      %4490 = vmatprep.mubr.f32.mxu0 0.0
      %4491 = vmatmul.mubr.f32.gmra.mxu0 %v4392
      %v4492 = vpop.f32.mrf.mxu0
      %v4493 = vadd.f32 0.0, %v4492
      %v4494 = vpop.f32.mrf.mxu0
      %4495 = vmatprep.mubr.f32.mxu0 0.0
      %4496 = vmatmul.mubr.f32.gmra.mxu0 %v4395
      %v4497 = vpop.f32.mrf.mxu0
      %v4498 = vadd.f32 0.0, %v4497
      %v4499 = vpop.f32.mrf.mxu0
      %4500 = vmatprep.mubr.f32.mxu0 0.0
      %4501 = vmatmul.mubr.f32.gmra.mxu0 %v4398
      %v4502 = vpop.f32.mrf.mxu0
      %v4503 = vadd.f32 0.0, %v4502
      %v4504 = vpop.f32.mrf.mxu0
      %4505 = vmatprep.mubr.f32.mxu0 0.0
      %4506 = vmatmul.mubr.f32.gmra.mxu0 %v4401
      %v4507 = vpop.f32.mrf.mxu0
      %v4508 = vadd.f32 0.0, %v4507
      %v4509 = vpop.f32.mrf.mxu0
      %4510 = vmatprep.mubr.f32.mxu0 0.0
      %4511 = vmatmul.mubr.f32.gmra.mxu0 %v4404
      %v4512 = vpop.f32.mrf.mxu0
      %v4513 = vadd.f32 0.0, %v4512
      %v4514 = vpop.f32.mrf.mxu0
      %4515 = vmatprep.mubr.f32.mxu0 0.0
      %4516 = vmatmul.mubr.f32.gmra.mxu0 %v4407
      %v4517 = vpop.f32.mrf.mxu0
      %v4518 = vadd.f32 0.0, %v4517
      %v4519 = vpop.f32.mrf.mxu0
      %4520 = vmatprep.mubr.f32.mxu0 0.0
      %4521 = vmatmul.mubr.f32.gmra.mxu0 %v4410
      %v4522 = vpop.f32.mrf.mxu0
      %v4523 = vadd.f32 0.0, %v4522
      %v4524 = vpop.f32.mrf.mxu0
      %4525 = vmatprep.mubr.f32.mxu0 0.0
      %4526 = vmatmul.mubr.f32.gmra.mxu0 %v4413
      %v4527 = vpop.f32.mrf.mxu0
      %v4528 = vadd.f32 0.0, %v4527
      %v4529 = vpop.f32.mrf.mxu0
      %4530 = vmatprep.mubr.f32.mxu0 0.0
      %4531 = vmatmul.mubr.f32.gmra.mxu0 %v4416
      %v4532 = vpop.f32.mrf.mxu0
      %v4533 = vadd.f32 0.0, %v4532
      %v4534 = vpop.f32.mrf.mxu0
      %4535 = vmatprep.mubr.f32.mxu0 0.0
      %4536 = vmatmul.mubr.f32.gmra.mxu0 %v4419
      %v4537 = vpop.f32.mrf.mxu0
      %v4538 = vadd.f32 0.0, %v4537
      %v4539 = vpop.f32.mrf.mxu0
      %4540 = vdwg.mxu0
      %v4541 = vadd.f32 %v3860, %v4488
      %v4542 = vadd.f32 %v3861, %v4493
      %v4543 = vadd.f32 %v3862, %v4498
      %v4544 = vadd.f32 %v3863, %v4503
      %v4545 = vadd.f32 %v3864, %v4508
      %v4546 = vadd.f32 %v3865, %v4513
      %v4547 = vadd.f32 %v3866, %v4518
      %v4548 = vadd.f32 %v3867, %v4523
      %v4549 = vadd.f32 %v3868, %v4528
      %v4550 = vadd.f32 %v3869, %v4533
      %v4551 = vadd.f32 %v3870, %v4538
      %4552 = vrot.lane.b32.xlu0 %v1176, 88
      %v4553 = vpop.permute.xlu0 %4552
      %4554 = vrot.lane.b32.xlu0 %v1177, 88
      %v4555 = vpop.permute.xlu0 %4554
      %4556 = vrot.lane.b32.xlu0 %v1178, 88
      %v4557 = vpop.permute.xlu0 %4556
      %4558 = vrot.lane.b32.xlu0 %v1179, 88
      %v4559 = vpop.permute.xlu0 %4558
      %4560 = vrot.lane.b32.xlu0 %v1180, 88
      %v4561 = vpop.permute.xlu0 %4560
      %4562 = vrot.lane.b32.xlu0 %v1181, 88
      %v4563 = vpop.permute.xlu0 %4562
      %4564 = vrot.lane.b32.xlu0 %v1182, 88
      %v4565 = vpop.permute.xlu0 %4564
      %4566 = vrot.lane.b32.xlu0 %v1183, 88
      %v4567 = vpop.permute.xlu0 %4566
      %4568 = vrot.lane.b32.xlu0 %v1184, 88
      %v4569 = vpop.permute.xlu0 %4568
      %4570 = vrot.lane.b32.xlu0 %v1185, 88
      %v4571 = vpop.permute.xlu0 %4570
      %4572 = vrot.lane.b32.xlu0 %v1186, 88
      %v4573 = vpop.permute.xlu0 %4572
      %4574 = vrot.lane.b32.xlu0 %v1123, 88
      %v4575 = vpop.permute.xlu0 %4574
      %4576 = vrot.lane.b32.xlu0 %v1128, 88
      %v4577 = vpop.permute.xlu0 %4576
      %4578 = vrot.lane.b32.xlu0 %v1133, 88
      %v4579 = vpop.permute.xlu0 %4578
      %4580 = vrot.lane.b32.xlu0 %v1138, 88
      %v4581 = vpop.permute.xlu0 %4580
      %4582 = vrot.lane.b32.xlu0 %v1143, 88
      %v4583 = vpop.permute.xlu0 %4582
      %4584 = vrot.lane.b32.xlu0 %v1148, 88
      %v4585 = vpop.permute.xlu0 %4584
      %4586 = vrot.lane.b32.xlu0 %v1153, 88
      %v4587 = vpop.permute.xlu0 %4586
      %4588 = vrot.lane.b32.xlu0 %v1158, 88
      %v4589 = vpop.permute.xlu0 %4588
      %4590 = vrot.lane.b32.xlu0 %v1163, 88
      %v4591 = vpop.permute.xlu0 %4590
      %4592 = vrot.lane.b32.xlu0 %v1168, 88
      %v4593 = vpop.permute.xlu0 %4592
      %4594 = vrot.lane.b32.xlu0 %v1173, 88
      %v4595 = vpop.permute.xlu0 %4594
      %v4596 = vsel %vm1187, %v4553, 0
      %v4598 = vsel %vm1187, %v4555, 0
      %v4600 = vsel %vm1187, %v4557, 0
      %v4602 = vsel %vm1187, %v4559, 0
      %v4604 = vsel %vm1187, %v4561, 0
      %v4606 = vsel %vm1187, %v4563, 0
      %v4608 = vsel %vm1187, %v4565, 0
      %v4610 = vsel %vm1187, %v4567, 0
      %v4612 = vsel %vm1187, %v4569, 0
      %v4614 = vsel %vm1187, %v4571, 0
      %v4616 = vsel %vm1187, %v4573, 0
      %v4618 = vsel %vm1187, %v4575, 0
      %v4620 = vsel %vm1187, %v4577, 0
      %v4622 = vsel %vm1187, %v4579, 0
      %v4624 = vsel %vm1187, %v4581, 0
      %v4626 = vsel %vm1187, %v4583, 0
      %v4628 = vsel %vm1187, %v4585, 0
      %v4630 = vsel %vm1187, %v4587, 0
      %v4632 = vsel %vm1187, %v4589, 0
      %v4634 = vsel %vm1187, %v4591, 0
      %v4636 = vsel %vm1187, %v4593, 0
      %v4638 = vsel %vm1187, %v4595, 0
      %4640 = vmatprep.subr.mxu0 0.0
      %4641 = vmatpush1.xpose.msra.mxu0 0.0
      %4642 = vmatprep.subr.mxu0 0.0
      %4643 = vmatpush1.xpose.msra.mxu0 0.0
      %4644 = vmatprep.subr.mxu0 0.0
      %4645 = vmatpush1.xpose.msra.mxu0 0.0
      %4646 = vmatprep.subr.mxu0 0.0
      %4647 = vmatpush1.xpose.msra.mxu0 0.0
      %4648 = vmatprep.subr.mxu0 0.0
      %4649 = vmatpush1.xpose.msra.mxu0 0.0
      %4650 = vmatprep.subr.mxu0 0.0
      %4651 = vmatpush1.xpose.msra.mxu0 %v4638
      %4652 = vmatprep.subr.mxu0 0.0
      %4653 = vmatpush1.xpose.msra.mxu0 %v4636
      %4654 = vmatprep.subr.mxu0 0.0
      %4655 = vmatpush1.xpose.msra.mxu0 %v4634
      %4656 = vmatprep.subr.mxu0 0.0
      %4657 = vmatpush1.xpose.msra.mxu0 %v4632
      %4658 = vmatprep.subr.mxu0 0.0
      %4659 = vmatpush1.xpose.msra.mxu0 %v4630
      %4660 = vmatprep.subr.mxu0 0.0
      %4661 = vmatpush1.xpose.msra.mxu0 %v4628
      %4662 = vmatprep.subr.mxu0 0.0
      %4663 = vmatpush1.xpose.msra.mxu0 %v4626
      %4664 = vmatprep.subr.mxu0 0.0
      %4665 = vmatpush1.xpose.msra.mxu0 %v4624
      %4666 = vmatprep.subr.mxu0 0.0
      %4667 = vmatpush1.xpose.msra.mxu0 %v4622
      %4668 = vmatprep.subr.mxu0 0.0
      %4669 = vmatpush1.xpose.msra.mxu0 %v4620
      %4670 = vmatprep.subr.mxu0 0.0
      %4671 = vmatpush1.xpose.msra.mxu0 %v4618
      %4672 = vmatprep.subr.mxu0 0.0
      %4673 = vmatpush2.xpose.msra.mxu0 0.0
      %4674 = vmatprep.subr.mxu0 0.0
      %4675 = vmatpush2.xpose.msra.mxu0 0.0
      %4676 = vmatprep.subr.mxu0 0.0
      %4677 = vmatpush2.xpose.msra.mxu0 0.0
      %4678 = vmatprep.subr.mxu0 0.0
      %4679 = vmatpush2.xpose.msra.mxu0 0.0
      %4680 = vmatprep.subr.mxu0 0.0
      %4681 = vmatpush2.xpose.msra.mxu0 0.0
      %4682 = vmatprep.subr.mxu0 0.0
      %4683 = vmatpush2.xpose.msra.mxu0 0.0
      %4684 = vmatprep.subr.mxu0 0.0
      %4685 = vmatpush2.xpose.msra.mxu0 0.0
      %4686 = vmatprep.subr.mxu0 0.0
      %4687 = vmatpush2.xpose.msra.mxu0 0.0
      %4688 = vmatprep.subr.mxu0 0.0
      %4689 = vmatpush2.xpose.msra.mxu0 0.0
      %4690 = vmatprep.subr.mxu0 0.0
      %4691 = vmatpush2.xpose.msra.mxu0 0.0
      %4692 = vmatprep.subr.mxu0 0.0
      %4693 = vmatpush2.xpose.msra.mxu0 0.0
      %4694 = vmatprep.subr.mxu0 0.0
      %4695 = vmatpush2.xpose.msra.mxu0 0.0
      %4696 = vmatprep.subr.mxu0 0.0
      %4697 = vmatpush2.xpose.msra.mxu0 0.0
      %4698 = vmatprep.subr.mxu0 0.0
      %4699 = vmatpush2.xpose.msra.mxu0 0.0
      %4700 = vmatprep.subr.mxu0 0.0
      %4701 = vmatpush2.xpose.msra.mxu0 0.0
      %4702 = vmatprep.subr.mxu0 0.0
      %4703 = vmatpush2.xpose.msra.mxu0 0.0
      %4704 = vmatprep.mubr.f32.mxu0 0.0
      %4705 = vmatmul.mubr.f32.gmra.mxu0 %v4596
      %v4706 = vpop.f32.mrf.mxu0
      %v4707 = vadd.f32 0.0, %v4706
      %v4708 = vpop.f32.mrf.mxu0
      %4709 = vmatprep.mubr.f32.mxu0 0.0
      %4710 = vmatmul.mubr.f32.gmra.mxu0 %v4598
      %v4711 = vpop.f32.mrf.mxu0
      %v4712 = vadd.f32 0.0, %v4711
      %v4713 = vpop.f32.mrf.mxu0
      %4714 = vmatprep.mubr.f32.mxu0 0.0
      %4715 = vmatmul.mubr.f32.gmra.mxu0 %v4600
      %v4716 = vpop.f32.mrf.mxu0
      %v4717 = vadd.f32 0.0, %v4716
      %v4718 = vpop.f32.mrf.mxu0
      %4719 = vmatprep.mubr.f32.mxu0 0.0
      %4720 = vmatmul.mubr.f32.gmra.mxu0 %v4602
      %v4721 = vpop.f32.mrf.mxu0
      %v4722 = vadd.f32 0.0, %v4721
      %v4723 = vpop.f32.mrf.mxu0
      %4724 = vmatprep.mubr.f32.mxu0 0.0
      %4725 = vmatmul.mubr.f32.gmra.mxu0 %v4604
      %v4726 = vpop.f32.mrf.mxu0
      %v4727 = vadd.f32 0.0, %v4726
      %v4728 = vpop.f32.mrf.mxu0
      %4729 = vmatprep.mubr.f32.mxu0 0.0
      %4730 = vmatmul.mubr.f32.gmra.mxu0 %v4606
      %v4731 = vpop.f32.mrf.mxu0
      %v4732 = vadd.f32 0.0, %v4731
      %v4733 = vpop.f32.mrf.mxu0
      %4734 = vmatprep.mubr.f32.mxu0 0.0
      %4735 = vmatmul.mubr.f32.gmra.mxu0 %v4608
      %v4736 = vpop.f32.mrf.mxu0
      %v4737 = vadd.f32 0.0, %v4736
      %v4738 = vpop.f32.mrf.mxu0
      %4739 = vmatprep.mubr.f32.mxu0 0.0
      %4740 = vmatmul.mubr.f32.gmra.mxu0 %v4610
      %v4741 = vpop.f32.mrf.mxu0
      %v4742 = vadd.f32 0.0, %v4741
      %v4743 = vpop.f32.mrf.mxu0
      %4744 = vmatprep.mubr.f32.mxu0 0.0
      %4745 = vmatmul.mubr.f32.gmra.mxu0 %v4612
      %v4746 = vpop.f32.mrf.mxu0
      %v4747 = vadd.f32 0.0, %v4746
      %v4748 = vpop.f32.mrf.mxu0
      %4749 = vmatprep.mubr.f32.mxu0 0.0
      %4750 = vmatmul.mubr.f32.gmra.mxu0 %v4614
      %v4751 = vpop.f32.mrf.mxu0
      %v4752 = vadd.f32 0.0, %v4751
      %v4753 = vpop.f32.mrf.mxu0
      %4754 = vmatprep.mubr.f32.mxu0 0.0
      %4755 = vmatmul.mubr.f32.gmra.mxu0 %v4616
      %v4756 = vpop.f32.mrf.mxu0
      %v4757 = vadd.f32 0.0, %v4756
      %v4758 = vpop.f32.mrf.mxu0
      %4759 = vdwg.mxu0
      %v4760 = vsel %vm1374, %v4707, -inf
      %4761 = vmax.xlane.f32.xlu0 %v4760
      %v4762 = vpop.xlane.xlu0 %4761
      %v4763 = vsel %vm1374, %v4712, -inf
      %4764 = vmax.xlane.f32.xlu0 %v4763
      %v4765 = vpop.xlane.xlu0 %4764
      %v4766 = vsel %vm1374, %v4717, -inf
      %4767 = vmax.xlane.f32.xlu0 %v4766
      %v4768 = vpop.xlane.xlu0 %4767
      %v4769 = vsel %vm1374, %v4722, -inf
      %4770 = vmax.xlane.f32.xlu0 %v4769
      %v4771 = vpop.xlane.xlu0 %4770
      %v4772 = vsel %vm1374, %v4727, -inf
      %4773 = vmax.xlane.f32.xlu0 %v4772
      %v4774 = vpop.xlane.xlu0 %4773
      %v4775 = vsel %vm1374, %v4732, -inf
      %4776 = vmax.xlane.f32.xlu0 %v4775
      %v4777 = vpop.xlane.xlu0 %4776
      %v4778 = vsel %vm1374, %v4737, -inf
      %4779 = vmax.xlane.f32.xlu0 %v4778
      %v4780 = vpop.xlane.xlu0 %4779
      %v4781 = vsel %vm1374, %v4742, -inf
      %4782 = vmax.xlane.f32.xlu0 %v4781
      %v4783 = vpop.xlane.xlu0 %4782
      %v4784 = vsel %vm1374, %v4747, -inf
      %4785 = vmax.xlane.f32.xlu0 %v4784
      %v4786 = vpop.xlane.xlu0 %4785
      %v4787 = vsel %vm1374, %v4752, -inf
      %4788 = vmax.xlane.f32.xlu0 %v4787
      %v4789 = vpop.xlane.xlu0 %4788
      %v4790 = vsel %vm1405, %v4757, -inf
      %4791 = vmax.xlane.f32.xlu0 %v4790
      %v4792 = vpop.xlane.xlu0 %4791
      %v4793 = vsub.f32 %v4707, %v4762
      %v4794 = vsub.f32 %v4712, %v4765
      %v4795 = vsub.f32 %v4717, %v4768
      %v4796 = vsub.f32 %v4722, %v4771
      %v4797 = vsub.f32 %v4727, %v4774
      %v4798 = vsub.f32 %v4732, %v4777
      %v4799 = vsub.f32 %v4737, %v4780
      %v4800 = vsub.f32 %v4742, %v4783
      %v4801 = vsub.f32 %v4747, %v4786
      %v4802 = vsub.f32 %v4752, %v4789
      %v4803 = vsub.f32 %v4757, %v4792
      %v4804 = vmul.f32 %v4793, 1.442695
      %v4805 = vpow.pop %v4804
      %v4806 = vmul.f32 %v4794, 1.442695
      %v4807 = vpow.pop %v4806
      %v4808 = vmul.f32 %v4795, 1.442695
      %v4809 = vpow.pop %v4808
      %v4810 = vmul.f32 %v4796, 1.442695
      %v4811 = vpow.pop %v4810
      %v4812 = vmul.f32 %v4797, 1.442695
      %v4813 = vpow.pop %v4812
      %v4814 = vmul.f32 %v4798, 1.442695
      %v4815 = vpow.pop %v4814
      %v4816 = vmul.f32 %v4799, 1.442695
      %v4817 = vpow.pop %v4816
      %v4818 = vmul.f32 %v4800, 1.442695
      %v4819 = vpow.pop %v4818
      %v4820 = vmul.f32 %v4801, 1.442695
      %v4821 = vpow.pop %v4820
      %v4822 = vmul.f32 %v4802, 1.442695
      %v4823 = vpow.pop %v4822
      %v4824 = vmul.f32 %v4803, 1.442695
      %v4825 = vpow.pop %v4824
      %v4826 = vsel %vm1374, %v4805, 0.0
      %4827 = vadd.xlane.f32.xlu0 %v4826
      %v4828 = vpop.xlane.xlu0 %4827
      %v4829 = vsel %vm1374, %v4807, 0.0
      %4830 = vadd.xlane.f32.xlu0 %v4829
      %v4831 = vpop.xlane.xlu0 %4830
      %v4832 = vsel %vm1374, %v4809, 0.0
      %4833 = vadd.xlane.f32.xlu0 %v4832
      %v4834 = vpop.xlane.xlu0 %4833
      %v4835 = vsel %vm1374, %v4811, 0.0
      %4836 = vadd.xlane.f32.xlu0 %v4835
      %v4837 = vpop.xlane.xlu0 %4836
      %v4838 = vsel %vm1374, %v4813, 0.0
      %4839 = vadd.xlane.f32.xlu0 %v4838
      %v4840 = vpop.xlane.xlu0 %4839
      %v4841 = vsel %vm1374, %v4815, 0.0
      %4842 = vadd.xlane.f32.xlu0 %v4841
      %v4843 = vpop.xlane.xlu0 %4842
      %v4844 = vsel %vm1374, %v4817, 0.0
      %4845 = vadd.xlane.f32.xlu0 %v4844
      %v4846 = vpop.xlane.xlu0 %4845
      %v4847 = vsel %vm1374, %v4819, 0.0
      %4848 = vadd.xlane.f32.xlu0 %v4847
      %v4849 = vpop.xlane.xlu0 %4848
      %v4850 = vsel %vm1374, %v4821, 0.0
      %4851 = vadd.xlane.f32.xlu0 %v4850
      %v4852 = vpop.xlane.xlu0 %4851
      %v4853 = vsel %vm1374, %v4823, 0.0
      %4854 = vadd.xlane.f32.xlu0 %v4853
      %v4855 = vpop.xlane.xlu0 %4854
      %v4856 = vsel %vm1405, %v4825, 0.0
      %4857 = vadd.xlane.f32.xlu0 %v4856
      %v4858 = vpop.xlane.xlu0 %4857
      %v4859 = vrcp.pop %v4828
      %v4860 = vrcp.pop %v4831
      %v4861 = vrcp.pop %v4834
      %v4862 = vrcp.pop %v4837
      %v4863 = vrcp.pop %v4840
      %v4864 = vrcp.pop %v4843
      %v4865 = vrcp.pop %v4846
      %v4866 = vrcp.pop %v4849
      %v4867 = vrcp.pop %v4852
      %v4868 = vrcp.pop %v4855
      %v4869 = vrcp.pop %v4858
      %v4870 = vmul.f32 %v4805, %v4859
      %v4871 = vmul.f32 %v4807, %v4860
      %v4872 = vmul.f32 %v4809, %v4861
      %v4873 = vmul.f32 %v4811, %v4862
      %v4874 = vmul.f32 %v4813, %v4863
      %v4875 = vmul.f32 %v4815, %v4864
      %v4876 = vmul.f32 %v4817, %v4865
      %v4877 = vmul.f32 %v4819, %v4866
      %v4878 = vmul.f32 %v4821, %v4867
      %v4879 = vmul.f32 %v4823, %v4868
      %v4880 = vmul.f32 %v4825, %v4869
      %4881 = vrot.lane.b32.xlu0 %v1123, 40
      %v4882 = vpop.permute.xlu0 %4881
      %4883 = vrot.lane.b32.xlu0 %v1128, 40
      %v4884 = vpop.permute.xlu0 %4883
      %4885 = vrot.lane.b32.xlu0 %v1133, 40
      %v4886 = vpop.permute.xlu0 %4885
      %4887 = vrot.lane.b32.xlu0 %v1138, 40
      %v4888 = vpop.permute.xlu0 %4887
      %4889 = vrot.lane.b32.xlu0 %v1143, 40
      %v4890 = vpop.permute.xlu0 %4889
      %4891 = vrot.lane.b32.xlu0 %v1148, 40
      %v4892 = vpop.permute.xlu0 %4891
      %4893 = vrot.lane.b32.xlu0 %v1153, 40
      %v4894 = vpop.permute.xlu0 %4893
      %4895 = vrot.lane.b32.xlu0 %v1158, 40
      %v4896 = vpop.permute.xlu0 %4895
      %4897 = vrot.lane.b32.xlu0 %v1163, 40
      %v4898 = vpop.permute.xlu0 %4897
      %4899 = vrot.lane.b32.xlu0 %v1168, 40
      %v4900 = vpop.permute.xlu0 %4899
      %4901 = vrot.lane.b32.xlu0 %v1173, 40
      %v4902 = vpop.permute.xlu0 %4901
      %v4914 = vsel %vm1374, %v4870, 0
      %v4917 = vsel %vm1374, %v4871, 0
      %v4920 = vsel %vm1374, %v4872, 0
      %v4923 = vsel %vm1374, %v4873, 0
      %v4926 = vsel %vm1374, %v4874, 0
      %v4929 = vsel %vm1374, %v4875, 0
      %v4932 = vsel %vm1374, %v4876, 0
      %v4935 = vsel %vm1374, %v4877, 0
      %v4938 = vsel %vm1374, %v4878, 0
      %v4941 = vsel %vm1374, %v4879, 0
      %v4944 = vsel %vm1374, %v4880, 0
      %v4946 = vsel %vm1562, %v4902, 0
      %4948 = vmatprep.subr.mxu0 0.0
      %4949 = vmatpush1.msra.mxu0 0.0
      %4950 = vmatprep.subr.mxu0 0.0
      %4951 = vmatpush1.msra.mxu0 0.0
      %4952 = vmatprep.subr.mxu0 0.0
      %4953 = vmatpush1.msra.mxu0 0.0
      %4954 = vmatprep.subr.mxu0 0.0
      %4955 = vmatpush1.msra.mxu0 0.0
      %4956 = vmatprep.subr.mxu0 0.0
      %4957 = vmatpush1.msra.mxu0 0.0
      %4958 = vmatprep.subr.mxu0 0.0
      %4959 = vmatpush1.msra.mxu0 %v4946
      %4960 = vmatprep.subr.mxu0 0.0
      %4961 = vmatpush1.msra.mxu0 %v4900
      %4962 = vmatprep.subr.mxu0 0.0
      %4963 = vmatpush1.msra.mxu0 %v4898
      %4964 = vmatprep.subr.mxu0 0.0
      %4965 = vmatpush1.msra.mxu0 %v4896
      %4966 = vmatprep.subr.mxu0 0.0
      %4967 = vmatpush1.msra.mxu0 %v4894
      %4968 = vmatprep.subr.mxu0 0.0
      %4969 = vmatpush1.msra.mxu0 %v4892
      %4970 = vmatprep.subr.mxu0 0.0
      %4971 = vmatpush1.msra.mxu0 %v4890
      %4972 = vmatprep.subr.mxu0 0.0
      %4973 = vmatpush1.msra.mxu0 %v4888
      %4974 = vmatprep.subr.mxu0 0.0
      %4975 = vmatpush1.msra.mxu0 %v4886
      %4976 = vmatprep.subr.mxu0 0.0
      %4977 = vmatpush1.msra.mxu0 %v4884
      %4978 = vmatprep.subr.mxu0 0.0
      %4979 = vmatpush1.msra.mxu0 %v4882
      %4980 = vmatprep.subr.mxu0 0.0
      %4981 = vmatpush2.msra.mxu0 0.0
      %4982 = vmatprep.subr.mxu0 0.0
      %4983 = vmatpush2.msra.mxu0 0.0
      %4984 = vmatprep.subr.mxu0 0.0
      %4985 = vmatpush2.msra.mxu0 0.0
      %4986 = vmatprep.subr.mxu0 0.0
      %4987 = vmatpush2.msra.mxu0 0.0
      %4988 = vmatprep.subr.mxu0 0.0
      %4989 = vmatpush2.msra.mxu0 0.0
      %4990 = vmatprep.subr.mxu0 0.0
      %4991 = vmatpush2.msra.mxu0 0.0
      %4992 = vmatprep.subr.mxu0 0.0
      %4993 = vmatpush2.msra.mxu0 0.0
      %4994 = vmatprep.subr.mxu0 0.0
      %4995 = vmatpush2.msra.mxu0 0.0
      %4996 = vmatprep.subr.mxu0 0.0
      %4997 = vmatpush2.msra.mxu0 0.0
      %4998 = vmatprep.subr.mxu0 0.0
      %4999 = vmatpush2.msra.mxu0 0.0
      %5000 = vmatprep.subr.mxu0 0.0
      %5001 = vmatpush2.msra.mxu0 0.0
      %5002 = vmatprep.subr.mxu0 0.0
      %5003 = vmatpush2.msra.mxu0 0.0
      %5004 = vmatprep.subr.mxu0 0.0
      %5005 = vmatpush2.msra.mxu0 0.0
      %5006 = vmatprep.subr.mxu0 0.0
      %5007 = vmatpush2.msra.mxu0 0.0
      %5008 = vmatprep.subr.mxu0 0.0
      %5009 = vmatpush2.msra.mxu0 0.0
      %5010 = vmatprep.subr.mxu0 0.0
      %5011 = vmatpush2.msra.mxu0 0.0
      %5012 = vmatprep.mubr.f32.mxu0 0.0
      %5013 = vmatmul.mubr.f32.gmra.mxu0 %v4914
      %v5014 = vpop.f32.mrf.mxu0
      %v5015 = vadd.f32 0.0, %v5014
      %v5016 = vpop.f32.mrf.mxu0
      %5017 = vmatprep.mubr.f32.mxu0 0.0
      %5018 = vmatmul.mubr.f32.gmra.mxu0 %v4917
      %v5019 = vpop.f32.mrf.mxu0
      %v5020 = vadd.f32 0.0, %v5019
      %v5021 = vpop.f32.mrf.mxu0
      %5022 = vmatprep.mubr.f32.mxu0 0.0
      %5023 = vmatmul.mubr.f32.gmra.mxu0 %v4920
      %v5024 = vpop.f32.mrf.mxu0
      %v5025 = vadd.f32 0.0, %v5024
      %v5026 = vpop.f32.mrf.mxu0
      %5027 = vmatprep.mubr.f32.mxu0 0.0
      %5028 = vmatmul.mubr.f32.gmra.mxu0 %v4923
      %v5029 = vpop.f32.mrf.mxu0
      %v5030 = vadd.f32 0.0, %v5029
      %v5031 = vpop.f32.mrf.mxu0
      %5032 = vmatprep.mubr.f32.mxu0 0.0
      %5033 = vmatmul.mubr.f32.gmra.mxu0 %v4926
      %v5034 = vpop.f32.mrf.mxu0
      %v5035 = vadd.f32 0.0, %v5034
      %v5036 = vpop.f32.mrf.mxu0
      %5037 = vmatprep.mubr.f32.mxu0 0.0
      %5038 = vmatmul.mubr.f32.gmra.mxu0 %v4929
      %v5039 = vpop.f32.mrf.mxu0
      %v5040 = vadd.f32 0.0, %v5039
      %v5041 = vpop.f32.mrf.mxu0
      %5042 = vmatprep.mubr.f32.mxu0 0.0
      %5043 = vmatmul.mubr.f32.gmra.mxu0 %v4932
      %v5044 = vpop.f32.mrf.mxu0
      %v5045 = vadd.f32 0.0, %v5044
      %v5046 = vpop.f32.mrf.mxu0
      %5047 = vmatprep.mubr.f32.mxu0 0.0
      %5048 = vmatmul.mubr.f32.gmra.mxu0 %v4935
      %v5049 = vpop.f32.mrf.mxu0
      %v5050 = vadd.f32 0.0, %v5049
      %v5051 = vpop.f32.mrf.mxu0
      %5052 = vmatprep.mubr.f32.mxu0 0.0
      %5053 = vmatmul.mubr.f32.gmra.mxu0 %v4938
      %v5054 = vpop.f32.mrf.mxu0
      %v5055 = vadd.f32 0.0, %v5054
      %v5056 = vpop.f32.mrf.mxu0
      %5057 = vmatprep.mubr.f32.mxu0 0.0
      %5058 = vmatmul.mubr.f32.gmra.mxu0 %v4941
      %v5059 = vpop.f32.mrf.mxu0
      %v5060 = vadd.f32 0.0, %v5059
      %v5061 = vpop.f32.mrf.mxu0
      %5062 = vmatprep.mubr.f32.mxu0 0.0
      %5063 = vmatmul.mubr.f32.gmra.mxu0 %v4944
      %v5064 = vpop.f32.mrf.mxu0
      %v5065 = vadd.f32 0.0, %v5064
      %v5066 = vpop.f32.mrf.mxu0
      %5067 = vdwg.mxu0
      %v5068 = vld [vmem:[%s10 + $0x28] sm:$0xff]
      %v5070 = vsel %vm1187, %v5015, 0
      %v5073 = vsel %vm1187, %v5020, 0
      %v5076 = vsel %vm1187, %v5025, 0
      %v5079 = vsel %vm1187, %v5030, 0
      %v5082 = vsel %vm1187, %v5035, 0
      %v5085 = vsel %vm1187, %v5040, 0
      %v5088 = vsel %vm1187, %v5045, 0
      %v5091 = vsel %vm1187, %v5050, 0
      %v5094 = vsel %vm1187, %v5055, 0
      %v5097 = vsel %vm1187, %v5060, 0
      %v5100 = vsel %vm1187, %v5065, 0
      %5102 = vmatprep.subr.mxu0 0.0
      %5103 = vmatpush1.msra.mxu0 0.0
      %5104 = vmatprep.subr.mxu0 0.0
      %5105 = vmatpush1.msra.mxu0 0.0
      %5106 = vmatprep.subr.mxu0 0.0
      %5107 = vmatpush1.msra.mxu0 0.0
      %5108 = vmatprep.subr.mxu0 0.0
      %5109 = vmatpush1.msra.mxu0 0.0
      %5110 = vmatprep.subr.mxu0 0.0
      %5111 = vmatpush1.msra.mxu0 0.0
      %5112 = vmatprep.subr.mxu0 0.0
      %5113 = vmatpush1.msra.mxu0 0.0
      %5114 = vmatprep.subr.mxu0 0.0
      %5115 = vmatpush1.msra.mxu0 0.0
      %5116 = vmatprep.subr.mxu0 0.0
      %5117 = vmatpush1.msra.mxu0 0.0
      %5118 = vmatprep.subr.mxu0 0.0
      %5119 = vmatpush1.msra.mxu0 0.0
      %5120 = vmatprep.subr.mxu0 0.0
      %5121 = vmatpush1.msra.mxu0 0.0
      %5122 = vmatprep.subr.mxu0 0.0
      %5123 = vmatpush1.msra.mxu0 0.0
      %5124 = vmatprep.subr.mxu0 0.0
      %5125 = vmatpush1.msra.mxu0 0.0
      %5126 = vmatprep.subr.mxu0 0.0
      %5127 = vmatpush1.msra.mxu0 0.0
      %5128 = vmatprep.subr.mxu0 0.0
      %5129 = vmatpush1.msra.mxu0 0.0
      %5130 = vmatprep.subr.mxu0 0.0
      %5131 = vmatpush1.msra.mxu0 0.0
      %5132 = vmatprep.subr.mxu0 0.0
      %5133 = vmatpush1.msra.mxu0 %v5068
      %5134 = vmatprep.subr.mxu0 0.0
      %5135 = vmatpush2.msra.mxu0 0.0
      %5136 = vmatprep.subr.mxu0 0.0
      %5137 = vmatpush2.msra.mxu0 0.0
      %5138 = vmatprep.subr.mxu0 0.0
      %5139 = vmatpush2.msra.mxu0 0.0
      %5140 = vmatprep.subr.mxu0 0.0
      %5141 = vmatpush2.msra.mxu0 0.0
      %5142 = vmatprep.subr.mxu0 0.0
      %5143 = vmatpush2.msra.mxu0 0.0
      %5144 = vmatprep.subr.mxu0 0.0
      %5145 = vmatpush2.msra.mxu0 0.0
      %5146 = vmatprep.subr.mxu0 0.0
      %5147 = vmatpush2.msra.mxu0 0.0
      %5148 = vmatprep.subr.mxu0 0.0
      %5149 = vmatpush2.msra.mxu0 0.0
      %5150 = vmatprep.subr.mxu0 0.0
      %5151 = vmatpush2.msra.mxu0 0.0
      %5152 = vmatprep.subr.mxu0 0.0
      %5153 = vmatpush2.msra.mxu0 0.0
      %5154 = vmatprep.subr.mxu0 0.0
      %5155 = vmatpush2.msra.mxu0 0.0
      %5156 = vmatprep.subr.mxu0 0.0
      %5157 = vmatpush2.msra.mxu0 0.0
      %5158 = vmatprep.subr.mxu0 0.0
      %5159 = vmatpush2.msra.mxu0 0.0
      %5160 = vmatprep.subr.mxu0 0.0
      %5161 = vmatpush2.msra.mxu0 0.0
      %5162 = vmatprep.subr.mxu0 0.0
      %5163 = vmatpush2.msra.mxu0 0.0
      %5164 = vmatprep.subr.mxu0 0.0
      %5165 = vmatpush2.msra.mxu0 0.0
      %5166 = vmatprep.mubr.f32.mxu0 0.0
      %5167 = vmatmul.mubr.f32.gmra.mxu0 %v5070
      %v5168 = vpop.f32.mrf.mxu0
      %v5169 = vadd.f32 0.0, %v5168
      %v5170 = vpop.f32.mrf.mxu0
      %5171 = vmatprep.mubr.f32.mxu0 0.0
      %5172 = vmatmul.mubr.f32.gmra.mxu0 %v5073
      %v5173 = vpop.f32.mrf.mxu0
      %v5174 = vadd.f32 0.0, %v5173
      %v5175 = vpop.f32.mrf.mxu0
      %5176 = vmatprep.mubr.f32.mxu0 0.0
      %5177 = vmatmul.mubr.f32.gmra.mxu0 %v5076
      %v5178 = vpop.f32.mrf.mxu0
      %v5179 = vadd.f32 0.0, %v5178
      %v5180 = vpop.f32.mrf.mxu0
      %5181 = vmatprep.mubr.f32.mxu0 0.0
      %5182 = vmatmul.mubr.f32.gmra.mxu0 %v5079
      %v5183 = vpop.f32.mrf.mxu0
      %v5184 = vadd.f32 0.0, %v5183
      %v5185 = vpop.f32.mrf.mxu0
      %5186 = vmatprep.mubr.f32.mxu0 0.0
      %5187 = vmatmul.mubr.f32.gmra.mxu0 %v5082
      %v5188 = vpop.f32.mrf.mxu0
      %v5189 = vadd.f32 0.0, %v5188
      %v5190 = vpop.f32.mrf.mxu0
      %5191 = vmatprep.mubr.f32.mxu0 0.0
      %5192 = vmatmul.mubr.f32.gmra.mxu0 %v5085
      %v5193 = vpop.f32.mrf.mxu0
      %v5194 = vadd.f32 0.0, %v5193
      %v5195 = vpop.f32.mrf.mxu0
      %5196 = vmatprep.mubr.f32.mxu0 0.0
      %5197 = vmatmul.mubr.f32.gmra.mxu0 %v5088
      %v5198 = vpop.f32.mrf.mxu0
      %v5199 = vadd.f32 0.0, %v5198
      %v5200 = vpop.f32.mrf.mxu0
      %5201 = vmatprep.mubr.f32.mxu0 0.0
      %5202 = vmatmul.mubr.f32.gmra.mxu0 %v5091
      %v5203 = vpop.f32.mrf.mxu0
      %v5204 = vadd.f32 0.0, %v5203
      %v5205 = vpop.f32.mrf.mxu0
      %5206 = vmatprep.mubr.f32.mxu0 0.0
      %5207 = vmatmul.mubr.f32.gmra.mxu0 %v5094
      %v5208 = vpop.f32.mrf.mxu0
      %v5209 = vadd.f32 0.0, %v5208
      %v5210 = vpop.f32.mrf.mxu0
      %5211 = vmatprep.mubr.f32.mxu0 0.0
      %5212 = vmatmul.mubr.f32.gmra.mxu0 %v5097
      %v5213 = vpop.f32.mrf.mxu0
      %v5214 = vadd.f32 0.0, %v5213
      %v5215 = vpop.f32.mrf.mxu0
      %5216 = vmatprep.mubr.f32.mxu0 0.0
      %5217 = vmatmul.mubr.f32.gmra.mxu0 %v5100
      %v5218 = vpop.f32.mrf.mxu0
      %v5219 = vadd.f32 0.0, %v5218
      %v5220 = vpop.f32.mrf.mxu0
      %5221 = vdwg.mxu0
      %v5222 = vadd.f32 %v4541, %v5169
      %v5223 = vadd.f32 %v4542, %v5174
      %v5224 = vadd.f32 %v4543, %v5179
      %v5225 = vadd.f32 %v4544, %v5184
      %v5226 = vadd.f32 %v4545, %v5189
      %v5227 = vadd.f32 %v4546, %v5194
      %v5228 = vadd.f32 %v4547, %v5199
      %v5229 = vadd.f32 %v4548, %v5204
      %v5230 = vadd.f32 %v4549, %v5209
      %v5231 = vadd.f32 %v4550, %v5214
      %v5232 = vadd.f32 %v4551, %v5219
      %v5233 = vld [vmem:[%s11] sm:$0x1]
      %v5235 = vlaneseq
      %v5236 = vshrl.u32 %v5235, 7
      %v5237 = vsub.s32 0, %v5236
      %v5238 = vrot.slane %v5233, %v5237
      %v5240 = vadd.f32 %v5222, %v5238
      %v5241 = vadd.f32 %v5223, %v5238
      %v5242 = vadd.f32 %v5224, %v5238
      %v5243 = vadd.f32 %v5225, %v5238
      %v5244 = vadd.f32 %v5226, %v5238
      %v5245 = vadd.f32 %v5227, %v5238
      %v5246 = vadd.f32 %v5228, %v5238
      %v5247 = vadd.f32 %v5229, %v5238
      %v5248 = vadd.f32 %v5230, %v5238
      %v5249 = vadd.f32 %v5231, %v5238
      %v5250 = vadd.f32 %v5232, %v5238
      %v5251 = vld [vmem:[%s12] sm:$0x1]
      %v5253 = vlaneseq
      %v5254 = vshrl.u32 %v5253, 7
      %v5255 = vsub.s32 0, %v5254
      %v5256 = vrot.slane %v5251, %v5255
      %v5258 = vmul.f32 %v5256, %v5240
      %v5259 = vmul.f32 %v5256, %v5241
      %v5260 = vmul.f32 %v5256, %v5242
      %v5261 = vmul.f32 %v5256, %v5243
      %v5262 = vmul.f32 %v5256, %v5244
      %v5263 = vmul.f32 %v5256, %v5245
      %v5264 = vmul.f32 %v5256, %v5246
      %v5265 = vmul.f32 %v5256, %v5247
      %v5266 = vmul.f32 %v5256, %v5248
      %v5267 = vmul.f32 %v5256, %v5249
      %v5268 = vmul.f32 %v5256, %v5250
      %v5269 = vadd.f32 %v461, %v5258
      %v5270 = vadd.f32 %v462, %v5259
      %v5271 = vadd.f32 %v463, %v5260
      %v5272 = vadd.f32 %v464, %v5261
      %v5273 = vadd.f32 %v465, %v5262
      %v5274 = vadd.f32 %v466, %v5263
      %v5275 = vadd.f32 %v467, %v5264
      %v5276 = vadd.f32 %v468, %v5265
      %v5277 = vadd.f32 %v469, %v5266
      %v5278 = vadd.f32 %v470, %v5267
      %v5279 = vadd.f32 %v471, %v5268
      %5280 = vst.msk [vmem:[%s460] sm:$0xff] %vm472, %v5269
      %5281 = vst.msk [vmem:[%s460 + $0x8] sm:$0xff] %vm472, %v5270
      %5282 = vst.msk [vmem:[%s460 + $0x10] sm:$0xff] %vm472, %v5271
      %5283 = vst.msk [vmem:[%s460 + $0x18] sm:$0xff] %vm472, %v5272
      %5284 = vst.msk [vmem:[%s460 + $0x20] sm:$0xff] %vm472, %v5273
      %5285 = vst.msk [vmem:[%s460 + $0x28] sm:$0xff] %vm472, %v5274
      %5286 = vst.msk [vmem:[%s460 + $0x30] sm:$0xff] %vm472, %v5275
      %5287 = vst.msk [vmem:[%s460 + $0x38] sm:$0xff] %vm472, %v5276
      %5288 = vst.msk [vmem:[%s460 + $0x40] sm:$0xff] %vm472, %v5277
      %5289 = vst.msk [vmem:[%s460 + $0x48] sm:$0xff] %vm472, %v5278
      %5290 = vst.msk [vmem:[%s460 + $0x50] sm:$0xf] %vm503, %v5279
      %p5291 = scmp.lt.s32.totalorder %s24, 1
      %s5292 = scalar_select %p5291, %s24, 1
      %s5293 = smul.addr %s5292, 11
      %s5294 = smul.addr %s5293, 8
      %s5295 = scalar_lea.vmem %s13, %s5294
      // Predicated region
      $region73: #{tpu_custom_call.1} parent=71 // pred_check
        %p5296 = pneg %p325
      $region74: #{tpu_custom_call.1} parent=71 // pred_check_branch
        %5298 = sbr.rel (%p5296) target = $region76
      $region75: #{tpu_custom_call.1} parent=71 // pred_region
        _
      $region76: #{tpu_custom_call.1} parent=71 // pred_fallthru
        _
    $region72: #{tpu_custom_call.1} parent=5 // pred_fallthru
      _
    %p5299 = scmp.le.s32.totalorder 2, %s19
    // Predicated region
    $region77: #{tpu_custom_call.1} parent=5 // pred_check
      %p5300 = pneg %p5299
    $region78: #{tpu_custom_call.1} parent=5 // pred_check_branch
      %5302 = sbr.rel (%p5300) target = $region80
    $region79: #{tpu_custom_call.1} parent=5 // pred_region
      %s5303 = ssub.s32 %s19, 2
      // Predicated region
      $region81: #{tpu_custom_call.1} parent=79 // pred_check
        %p5304 = pneg %p331
      $region82: #{tpu_custom_call.1} parent=79 // pred_check_branch
        %5306 = sbr.rel (%p5304) target = $region84
      $region83: #{tpu_custom_call.1} parent=79 // pred_region
        %p5307 = scmp.lt.s32.totalorder %s25, 1
        %s5308 = scalar_select %p5307, %s25, 1
        %s5309 = smul.addr %s5308, 11
        %s5310 = smul.addr %s5309, 8
        %s5311 = scalar_lea.vmem %s13, %s5310
      $region84: #{tpu_custom_call.1} parent=79 // pred_fallthru
        _
    $region80: #{tpu_custom_call.1} parent=5 // pred_fallthru
      _
  $region6: #{tpu_custom_call.1} parent=0 // loop_footer
    %s23 = sadd.s32 1, %s19
  $region7: #{tpu_custom_call.1} parent=0 // loop_footer_branch
    %18 = sbr.rel target = $region3
  $region8: #{tpu_custom_call.1} parent=0 // loop_exit
    _

</llo_original>
